<compile_context>
chip_gen: v7x
topology: tpu7x:2x2x1
jax: 0.10.0
libtpu: 0.0.40
codegen_flags: <defaults>
</compile_context>

<pallas_src>
import jax
import jax.numpy as jnp
from jax.experimental import pallas as pl
from jax.experimental.pallas import tpu as pltpu

N_NEURO = 100
N_HIDDEN = 6          # number of 100x100 hidden Linear layers (between first and last)
LANE = 128

H_BOUN1_0 = 202.0
H_BOUN2_0 = 200.0
H_BOUN1 = (H_BOUN1_0 - H_BOUN2_0) / (H_BOUN1_0 - H_BOUN2_0)  # = 1.0
H_BOUN2 = (H_BOUN2_0 - H_BOUN2_0) / (H_BOUN1_0 - H_BOUN2_0)  # = 0.0


def _round_up(n, m):
    return ((n + m - 1) // m) * m


def _tensorcores_per_chip():
    """How many TensorCores a 'parallel' grid axis can shard across on one chip."""
    try:
        kind = jax.devices()[0].device_kind.lower()
    except Exception:
        return 1
    # Single-TC chips: v5e ("v5 lite"/"v5e"), v6e ("v6 lite"/"v6e").
    if "lite" in kind or "v5e" in kind or "v6e" in kind:
        return 1
    # Dual-TC chips: v7x, and megacore v4 / v5p.
    if "v7" in kind or "7x" in kind or "v4" in kind or "v5p" in kind:
        return 2
    return 1  # conservative default: single grid step is correct everywhere


def _sigmoid_1eup(a):
    # sigmoid(a) == 0.5 * (1 + tanh(a/2)): a single EUP transcendental instead
    # of exp + reciprocal.
    return 0.5 * (1.0 + jnp.tanh(0.5 * a))


def _swish(a):
    # Swish(x) = x * sigmoid(x) (the PyTorch in-place flag is irrelevant math-wise)
    return a * _sigmoid_1eup(a)


def net_hardway_kernel(x_ref, x1_ref, w0_ref, b0_ref, wh_ref, bh_ref, wlt_ref, bl_ref,
                       out_ref):
    cdt = w0_ref.dtype   # MXU input dtype (f32 default, bf16 if use_bf16)

    # First layer: (tile_b, D) @ (D, Hp) + (1, Hp).  x read at point of use only.
    a = jnp.dot(x_ref[...].astype(cdt), w0_ref[...],
                preferred_element_type=jnp.float32) + b0_ref[...]
    a = _swish(a)

    # Six stacked 128x128 hidden layers (unrolled Python loop, weights VMEM-resident).
    for li in range(N_HIDDEN):
        a = jnp.dot(a.astype(cdt), wh_ref[li],
                    preferred_element_type=jnp.float32) + bh_ref[li]
        a = _swish(a)

    # Last (hidden -> 1) layer produced directly as a lane-dense (1, tile_b) row:
    # contraction over both operands' last dims (A @ B^T form on the MXU).
    out_row = jnp.einsum('oh,bh->ob', wlt_ref[...], a,
                         preferred_element_type=jnp.float32) + bl_ref[...]

    # Hard-constraint blend; h_boun1 == 1.0, h_boun2 == 0.0 folded at trace time.
    x1 = x1_ref[...]                                             # (1, tile_b)
    h = (10.2 - x1) * (H_BOUN1 / 10.0) + (x1 - 0.2) * (x1 - 10.2) * out_row
    if H_BOUN2 != 0.0:  # dead for the module's constants; kept for generality
        h = h + (x1 - 0.2) * (H_BOUN2 / 10.0)
    out_ref[...] = h.astype(out_ref.dtype)


def prepare_params(params, *, use_bf16=False):
    """Pad/stack the 8 (W, b) pairs ONCE (cache the result; not in the hot path).

    params: list of 8 (W, b) with W:(in,out), b:(1,out).
    Padded rows/cols and biases are exactly zero, so padded lanes stay exactly 0
    through every layer (bit-identical result in the f32 path).
    """
    assert len(params) == 2 + N_HIDDEN
    f32 = jnp.float32
    wdt = jnp.bfloat16 if use_bf16 else f32
    Hp = _round_up(N_NEURO, LANE)

    w0, b0 = params[0]
    D = int(w0.shape[0])
    w0p = jnp.zeros((D, Hp), f32).at[:, :w0.shape[1]].set(w0).astype(wdt)
    b0p = jnp.zeros((1, Hp), f32).at[:, :b0.shape[1]].set(b0)

    wh = jnp.zeros((N_HIDDEN, Hp, Hp), f32)
    bh = jnp.zeros((N_HIDDEN, 1, Hp), f32)
    for li in range(N_HIDDEN):
        w, b = params[1 + li]
        wh = wh.at[li, :w.shape[0], :w.shape[1]].set(w)
        bh = bh.at[li, :, :b.shape[1]].set(b)
    wh = wh.astype(wdt)

    wl, bl = params[-1]                     # (N_NEURO, 1), (1, 1)
    wlt = jnp.zeros((1, Hp), f32).at[:, :wl.shape[0]].set(wl[:, 0][None, :])
    blp = jnp.asarray(bl, f32).reshape(1, 1)

    return {"w0": w0p, "b0": b0p, "wh": wh, "bh": bh, "wlt": wlt, "bl": blp,
            "in_dim": D}


def net_hardway(x, prepared, *, num_tiles=None):
    """x: (B, n_eigen+4) f32; prepared: output of prepare_params(params)."""
    B, D = x.shape
    assert D == prepared["in_dim"]
    Hp = prepared["w0"].shape[1]
    f32 = jnp.float32

    if num_tiles is None:
        num_tiles = _tensorcores_per_chip()
    num_tiles = max(1, min(int(num_tiles), max(1, B // LANE)))

    # One grid step per TensorCore.  For >1 tiles the output/x1 row blocks must be
    # 128-lane aligned; for a single tile the full-dim exemption applies.
    align = LANE if num_tiles > 1 else 8
    tile_b = _round_up(max(pl.cdiv(B, num_tiles), 8), align)
    Bp = tile_b * num_tiles

    # Batch padding only (features stay at their real width D).
    xp = jnp.zeros((Bp, D), f32).at[:B].set(x.astype(f32))
    # Blend column x[:,1] pre-transposed to a lane-dense (1, Bp) row (layout plumbing).
    x1_row = xp[:, 1].reshape(1, Bp)

    grid = (num_tiles,)
    in_specs = [
        pl.BlockSpec((tile_b, D), lambda i: (i, 0)),             # x tile (unpadded D)
        pl.BlockSpec((1, tile_b), lambda i: (0, i)),             # x[:,1] row
        pl.BlockSpec((D, Hp), lambda i: (0, 0)),                 # W0 (resident)
        pl.BlockSpec((1, Hp), lambda i: (0, 0)),                 # b0
        pl.BlockSpec((N_HIDDEN, Hp, Hp), lambda i: (0, 0, 0)),   # stacked hidden W
        pl.BlockSpec((N_HIDDEN, 1, Hp), lambda i: (0, 0, 0)),    # stacked hidden b
        pl.BlockSpec((1, Hp), lambda i: (0, 0)),                 # W_last^T
        pl.BlockSpec((1, 1), lambda i: (0, 0)),                  # b_last
    ]
    out_spec = pl.BlockSpec((1, tile_b), lambda i: (0, i))       # lane-dense row slab

    w_bytes = sum(int(prepared[k].size) * prepared[k].dtype.itemsize
                  for k in ("w0", "b0", "wh", "bh", "wlt", "bl"))
    cost = pl.CostEstimate(
        flops=int(2 * Bp * (D * Hp + N_HIDDEN * Hp * Hp + Hp)),
        transcendentals=int((N_HIDDEN + 1) * Bp * Hp),
        bytes_accessed=int(xp.size * 4 + x1_row.size * 4 + w_bytes + Bp * 4),
    )

    hp = pl.pallas_call(
        net_hardway_kernel,
        out_shape=jax.ShapeDtypeStruct((1, Bp), f32),
        grid_spec=pltpu.PrefetchScalarGridSpec(
            num_scalar_prefetch=0,
            grid=grid,
            in_specs=in_specs,
            out_specs=out_spec,
        ),
        compiler_params=pltpu.CompilerParams(
            dimension_semantics=("parallel",)),
        cost_estimate=cost,
    )(xp, x1_row, prepared["w0"], prepared["b0"], prepared["wh"], prepared["bh"],
      prepared["wlt"], prepared["bl"])

    return hp[0, :B][:, None]


def init_params(key, n_eigen):
    """Deterministic init matching PyTorch Linear shapes (stored transposed: (in,out))."""
    dims = [n_eigen + 4] + [N_NEURO] * 7 + [1]
    params = []
    for li in range(len(dims) - 1):
        fan_in, fan_out = dims[li], dims[li + 1]
        key, kw, kb = jax.random.split(key, 3)
        bound = 1.0 / (fan_in ** 0.5)
        w = jax.random.uniform(kw, (fan_in, fan_out), jnp.float32,
                               minval=-bound, maxval=bound)
        b = jax.random.uniform(kb, (1, fan_out), jnp.float32,
                               minval=-bound, maxval=bound)
        params.append((w, b))
    return params


def net_hardway_ref(x, params):
    """Pure-JAX reference (standard sigmoid) for validation."""
    a = x
    for li, (w, b) in enumerate(params):
        a = a @ w + b
        if li < len(params) - 1:
            a = a * (1.0 / (1.0 + jnp.exp(-a)))
    x1 = x[:, 1:2]
    return (x1 - 0.2) * H_BOUN2 / 10.0 + (10.2 - x1) * H_BOUN1 / 10.0 \
        + (x1 - 0.2) * (x1 - 10.2) * a


if __name__ == "__main__":
    n_eigen = 20              # -> input feature dim = n_eigen + 4 = 24
    batch = 512

    key = jax.random.PRNGKey(0)
    key, kx = jax.random.split(key)
    x = jax.random.uniform(kx, (batch, n_eigen + 4), jnp.float32,
                           minval=0.0, maxval=10.0)
    params = init_params(key, n_eigen)

    # Pad/stack weights once (outside the hot path), then call the fused kernel.
    prepared = prepare_params(params, use_bf16=False)
    fwd = jax.jit(lambda xx: net_hardway(xx, prepared))

    h = fwd(x)
    h = jax.block_until_ready(h)

    h_ref = net_hardway_ref(x, params)
    assert h.shape == (batch, 1)
    assert jnp.allclose(h, h_ref, rtol=2e-4, atol=2e-4), "mismatch vs reference"

    print("KERNEL_OK")
</pallas_src>

<mosaic_0001>
module attributes {stable_mosaic.version = 11 : i64} {
  func.func @net_hardway_kernel(%arg0: i32, %arg1: memref<512x24xf32, #tpu.memory_space<vmem>>, %arg2: memref<1x512xf32, #tpu.memory_space<vmem>>, %arg3: memref<24x128xf32, #tpu.memory_space<vmem>>, %arg4: memref<1x128xf32, #tpu.memory_space<vmem>>, %arg5: memref<6x128x128xf32, #tpu.memory_space<vmem>>, %arg6: memref<6x1x128xf32, #tpu.memory_space<vmem>>, %arg7: memref<1x128xf32, #tpu.memory_space<vmem>>, %arg8: memref<1x1xf32, #tpu.memory_space<vmem>>, %arg9: memref<1x512xf32, #tpu.memory_space<vmem>>) attributes {dimension_semantics = [#tpu.dimension_semantics<parallel>], iteration_bounds = array<i64: 1>, scalar_prefetch = 0 : i64, scratch_operands = 0 : i64, tpu.core_type = #tpu.core_type<tc>, window_params = [{transform_indices = @transform_0, window_bounds = array<i64: 512, 24>}, {transform_indices = @transform_1, window_bounds = array<i64: 1, 512>}, {pipeline_mode = #tpu.pipeline_mode<synchronous>, transform_indices = @transform_2, window_bounds = array<i64: 24, 128>}, {pipeline_mode = #tpu.pipeline_mode<synchronous>, transform_indices = @transform_3, window_bounds = array<i64: 1, 128>}, {pipeline_mode = #tpu.pipeline_mode<synchronous>, transform_indices = @transform_4, window_bounds = array<i64: 6, 128, 128>}, {pipeline_mode = #tpu.pipeline_mode<synchronous>, transform_indices = @transform_5, window_bounds = array<i64: 6, 1, 128>}, {pipeline_mode = #tpu.pipeline_mode<synchronous>, transform_indices = @transform_6, window_bounds = array<i64: 1, 128>}, {pipeline_mode = #tpu.pipeline_mode<synchronous>, transform_indices = @transform_7, window_bounds = array<i64: 1, 1>}, {transform_indices = @transform_8, window_bounds = array<i64: 1, 512>}]} {
    %c0 = arith.constant 0 : index
    %c0_0 = arith.constant 0 : index
    %0 = vector.load %arg1[%c0, %c0_0] : memref<512x24xf32, #tpu.memory_space<vmem>>, vector<512x24xf32>
    %c0_1 = arith.constant 0 : index
    %c0_2 = arith.constant 0 : index
    %1 = vector.load %arg3[%c0_1, %c0_2] : memref<24x128xf32, #tpu.memory_space<vmem>>, vector<24x128xf32>
    %cst = arith.constant dense<0.000000e+00> : vector<512x128xf32>
    %2 = tpu.matmul %0, %1, %cst {dimension_numbers = #tpu.dot_dimension_numbers<[1], [0], [0], [1], [0, 0, 1, 1], [], []>} : vector<512x24xf32>, vector<24x128xf32>, vector<512x128xf32> -> vector<512x128xf32>
    %c0_3 = arith.constant 0 : index
    %c0_4 = arith.constant 0 : index
    %3 = vector.load %arg4[%c0_3, %c0_4] : memref<1x128xf32, #tpu.memory_space<vmem>>, vector<1x128xf32>
    %4 = vector.broadcast %3 : vector<1x128xf32> to vector<512x128xf32>
    %5 = arith.addf %2, %4 : vector<512x128xf32>
    %cst_5 = arith.constant 5.000000e-01 : f32
    %6 = vector.broadcast %cst_5 : f32 to vector<512x128xf32>
    %7 = arith.mulf %6, %5 : vector<512x128xf32>
    %8 = math.tanh %7 : vector<512x128xf32>
    %cst_6 = arith.constant 1.000000e+00 : f32
    %9 = vector.broadcast %cst_6 : f32 to vector<512x128xf32>
    %10 = arith.addf %9, %8 : vector<512x128xf32>
    %cst_7 = arith.constant 5.000000e-01 : f32
    %11 = vector.broadcast %cst_7 : f32 to vector<512x128xf32>
    %12 = arith.mulf %11, %10 : vector<512x128xf32>
    %13 = arith.mulf %5, %12 : vector<512x128xf32>
    %c0_8 = arith.constant 0 : index
    %c0_9 = arith.constant 0 : index
    %c0_10 = arith.constant 0 : index
    %14 = vector.load %arg5[%c0_8, %c0_9, %c0_10] : memref<6x128x128xf32, #tpu.memory_space<vmem>>, vector<1x128x128xf32>
    %15 = vector.shape_cast %14 : vector<1x128x128xf32> to vector<128x128xf32>
    %cst_11 = arith.constant dense<0.000000e+00> : vector<512x128xf32>
    %16 = tpu.matmul %13, %15, %cst_11 {dimension_numbers = #tpu.dot_dimension_numbers<[1], [0], [0], [1], [0, 0, 1, 1], [], []>} : vector<512x128xf32>, vector<128x128xf32>, vector<512x128xf32> -> vector<512x128xf32>
    %c0_12 = arith.constant 0 : index
    %c0_13 = arith.constant 0 : index
    %c0_14 = arith.constant 0 : index
    %17 = vector.load %arg6[%c0_12, %c0_13, %c0_14] : memref<6x1x128xf32, #tpu.memory_space<vmem>>, vector<1x1x128xf32>
    %18 = vector.shape_cast %17 : vector<1x1x128xf32> to vector<1x128xf32>
    %19 = vector.broadcast %18 : vector<1x128xf32> to vector<512x128xf32>
    %20 = arith.addf %16, %19 : vector<512x128xf32>
    %cst_15 = arith.constant 5.000000e-01 : f32
    %21 = vector.broadcast %cst_15 : f32 to vector<512x128xf32>
    %22 = arith.mulf %21, %20 : vector<512x128xf32>
    %23 = math.tanh %22 : vector<512x128xf32>
    %cst_16 = arith.constant 1.000000e+00 : f32
    %24 = vector.broadcast %cst_16 : f32 to vector<512x128xf32>
    %25 = arith.addf %24, %23 : vector<512x128xf32>
    %cst_17 = arith.constant 5.000000e-01 : f32
    %26 = vector.broadcast %cst_17 : f32 to vector<512x128xf32>
    %27 = arith.mulf %26, %25 : vector<512x128xf32>
    %28 = arith.mulf %20, %27 : vector<512x128xf32>
    %c1 = arith.constant 1 : index
    %c0_18 = arith.constant 0 : index
    %c0_19 = arith.constant 0 : index
    %29 = vector.load %arg5[%c1, %c0_18, %c0_19] : memref<6x128x128xf32, #tpu.memory_space<vmem>>, vector<1x128x128xf32>
    %30 = vector.shape_cast %29 : vector<1x128x128xf32> to vector<128x128xf32>
    %cst_20 = arith.constant dense<0.000000e+00> : vector<512x128xf32>
    %31 = tpu.matmul %28, %30, %cst_20 {dimension_numbers = #tpu.dot_dimension_numbers<[1], [0], [0], [1], [0, 0, 1, 1], [], []>} : vector<512x128xf32>, vector<128x128xf32>, vector<512x128xf32> -> vector<512x128xf32>
    %c1_21 = arith.constant 1 : index
    %c0_22 = arith.constant 0 : index
    %c0_23 = arith.constant 0 : index
    %32 = vector.load %arg6[%c1_21, %c0_22, %c0_23] : memref<6x1x128xf32, #tpu.memory_space<vmem>>, vector<1x1x128xf32>
    %33 = vector.shape_cast %32 : vector<1x1x128xf32> to vector<1x128xf32>
    %34 = vector.broadcast %33 : vector<1x128xf32> to vector<512x128xf32>
    %35 = arith.addf %31, %34 : vector<512x128xf32>
    %cst_24 = arith.constant 5.000000e-01 : f32
    %36 = vector.broadcast %cst_24 : f32 to vector<512x128xf32>
    %37 = arith.mulf %36, %35 : vector<512x128xf32>
    %38 = math.tanh %37 : vector<512x128xf32>
    %cst_25 = arith.constant 1.000000e+00 : f32
    %39 = vector.broadcast %cst_25 : f32 to vector<512x128xf32>
    %40 = arith.addf %39, %38 : vector<512x128xf32>
    %cst_26 = arith.constant 5.000000e-01 : f32
    %41 = vector.broadcast %cst_26 : f32 to vector<512x128xf32>
    %42 = arith.mulf %41, %40 : vector<512x128xf32>
    %43 = arith.mulf %35, %42 : vector<512x128xf32>
    %c2 = arith.constant 2 : index
    %c0_27 = arith.constant 0 : index
    %c0_28 = arith.constant 0 : index
    %44 = vector.load %arg5[%c2, %c0_27, %c0_28] : memref<6x128x128xf32, #tpu.memory_space<vmem>>, vector<1x128x128xf32>
    %45 = vector.shape_cast %44 : vector<1x128x128xf32> to vector<128x128xf32>
    %cst_29 = arith.constant dense<0.000000e+00> : vector<512x128xf32>
    %46 = tpu.matmul %43, %45, %cst_29 {dimension_numbers = #tpu.dot_dimension_numbers<[1], [0], [0], [1], [0, 0, 1, 1], [], []>} : vector<512x128xf32>, vector<128x128xf32>, vector<512x128xf32> -> vector<512x128xf32>
    %c2_30 = arith.constant 2 : index
    %c0_31 = arith.constant 0 : index
    %c0_32 = arith.constant 0 : index
    %47 = vector.load %arg6[%c2_30, %c0_31, %c0_32] : memref<6x1x128xf32, #tpu.memory_space<vmem>>, vector<1x1x128xf32>
    %48 = vector.shape_cast %47 : vector<1x1x128xf32> to vector<1x128xf32>
    %49 = vector.broadcast %48 : vector<1x128xf32> to vector<512x128xf32>
    %50 = arith.addf %46, %49 : vector<512x128xf32>
    %cst_33 = arith.constant 5.000000e-01 : f32
    %51 = vector.broadcast %cst_33 : f32 to vector<512x128xf32>
    %52 = arith.mulf %51, %50 : vector<512x128xf32>
    %53 = math.tanh %52 : vector<512x128xf32>
    %cst_34 = arith.constant 1.000000e+00 : f32
    %54 = vector.broadcast %cst_34 : f32 to vector<512x128xf32>
    %55 = arith.addf %54, %53 : vector<512x128xf32>
    %cst_35 = arith.constant 5.000000e-01 : f32
    %56 = vector.broadcast %cst_35 : f32 to vector<512x128xf32>
    %57 = arith.mulf %56, %55 : vector<512x128xf32>
    %58 = arith.mulf %50, %57 : vector<512x128xf32>
    %c3 = arith.constant 3 : index
    %c0_36 = arith.constant 0 : index
    %c0_37 = arith.constant 0 : index
    %59 = vector.load %arg5[%c3, %c0_36, %c0_37] : memref<6x128x128xf32, #tpu.memory_space<vmem>>, vector<1x128x128xf32>
    %60 = vector.shape_cast %59 : vector<1x128x128xf32> to vector<128x128xf32>
    %cst_38 = arith.constant dense<0.000000e+00> : vector<512x128xf32>
    %61 = tpu.matmul %58, %60, %cst_38 {dimension_numbers = #tpu.dot_dimension_numbers<[1], [0], [0], [1], [0, 0, 1, 1], [], []>} : vector<512x128xf32>, vector<128x128xf32>, vector<512x128xf32> -> vector<512x128xf32>
    %c3_39 = arith.constant 3 : index
    %c0_40 = arith.constant 0 : index
    %c0_41 = arith.constant 0 : index
    %62 = vector.load %arg6[%c3_39, %c0_40, %c0_41] : memref<6x1x128xf32, #tpu.memory_space<vmem>>, vector<1x1x128xf32>
    %63 = vector.shape_cast %62 : vector<1x1x128xf32> to vector<1x128xf32>
    %64 = vector.broadcast %63 : vector<1x128xf32> to vector<512x128xf32>
    %65 = arith.addf %61, %64 : vector<512x128xf32>
    %cst_42 = arith.constant 5.000000e-01 : f32
    %66 = vector.broadcast %cst_42 : f32 to vector<512x128xf32>
    %67 = arith.mulf %66, %65 : vector<512x128xf32>
    %68 = math.tanh %67 : vector<512x128xf32>
    %cst_43 = arith.constant 1.000000e+00 : f32
    %69 = vector.broadcast %cst_43 : f32 to vector<512x128xf32>
    %70 = arith.addf %69, %68 : vector<512x128xf32>
    %cst_44 = arith.constant 5.000000e-01 : f32
    %71 = vector.broadcast %cst_44 : f32 to vector<512x128xf32>
    %72 = arith.mulf %71, %70 : vector<512x128xf32>
    %73 = arith.mulf %65, %72 : vector<512x128xf32>
    %c4 = arith.constant 4 : index
    %c0_45 = arith.constant 0 : index
    %c0_46 = arith.constant 0 : index
    %74 = vector.load %arg5[%c4, %c0_45, %c0_46] : memref<6x128x128xf32, #tpu.memory_space<vmem>>, vector<1x128x128xf32>
    %75 = vector.shape_cast %74 : vector<1x128x128xf32> to vector<128x128xf32>
    %cst_47 = arith.constant dense<0.000000e+00> : vector<512x128xf32>
    %76 = tpu.matmul %73, %75, %cst_47 {dimension_numbers = #tpu.dot_dimension_numbers<[1], [0], [0], [1], [0, 0, 1, 1], [], []>} : vector<512x128xf32>, vector<128x128xf32>, vector<512x128xf32> -> vector<512x128xf32>
    %c4_48 = arith.constant 4 : index
    %c0_49 = arith.constant 0 : index
    %c0_50 = arith.constant 0 : index
    %77 = vector.load %arg6[%c4_48, %c0_49, %c0_50] : memref<6x1x128xf32, #tpu.memory_space<vmem>>, vector<1x1x128xf32>
    %78 = vector.shape_cast %77 : vector<1x1x128xf32> to vector<1x128xf32>
    %79 = vector.broadcast %78 : vector<1x128xf32> to vector<512x128xf32>
    %80 = arith.addf %76, %79 : vector<512x128xf32>
    %cst_51 = arith.constant 5.000000e-01 : f32
    %81 = vector.broadcast %cst_51 : f32 to vector<512x128xf32>
    %82 = arith.mulf %81, %80 : vector<512x128xf32>
    %83 = math.tanh %82 : vector<512x128xf32>
    %cst_52 = arith.constant 1.000000e+00 : f32
    %84 = vector.broadcast %cst_52 : f32 to vector<512x128xf32>
    %85 = arith.addf %84, %83 : vector<512x128xf32>
    %cst_53 = arith.constant 5.000000e-01 : f32
    %86 = vector.broadcast %cst_53 : f32 to vector<512x128xf32>
    %87 = arith.mulf %86, %85 : vector<512x128xf32>
    %88 = arith.mulf %80, %87 : vector<512x128xf32>
    %c5 = arith.constant 5 : index
    %c0_54 = arith.constant 0 : index
    %c0_55 = arith.constant 0 : index
    %89 = vector.load %arg5[%c5, %c0_54, %c0_55] : memref<6x128x128xf32, #tpu.memory_space<vmem>>, vector<1x128x128xf32>
    %90 = vector.shape_cast %89 : vector<1x128x128xf32> to vector<128x128xf32>
    %cst_56 = arith.constant dense<0.000000e+00> : vector<512x128xf32>
    %91 = tpu.matmul %88, %90, %cst_56 {dimension_numbers = #tpu.dot_dimension_numbers<[1], [0], [0], [1], [0, 0, 1, 1], [], []>} : vector<512x128xf32>, vector<128x128xf32>, vector<512x128xf32> -> vector<512x128xf32>
    %c5_57 = arith.constant 5 : index
    %c0_58 = arith.constant 0 : index
    %c0_59 = arith.constant 0 : index
    %92 = vector.load %arg6[%c5_57, %c0_58, %c0_59] : memref<6x1x128xf32, #tpu.memory_space<vmem>>, vector<1x1x128xf32>
    %93 = vector.shape_cast %92 : vector<1x1x128xf32> to vector<1x128xf32>
    %94 = vector.broadcast %93 : vector<1x128xf32> to vector<512x128xf32>
    %95 = arith.addf %91, %94 : vector<512x128xf32>
    %cst_60 = arith.constant 5.000000e-01 : f32
    %96 = vector.broadcast %cst_60 : f32 to vector<512x128xf32>
    %97 = arith.mulf %96, %95 : vector<512x128xf32>
    %98 = math.tanh %97 : vector<512x128xf32>
    %cst_61 = arith.constant 1.000000e+00 : f32
    %99 = vector.broadcast %cst_61 : f32 to vector<512x128xf32>
    %100 = arith.addf %99, %98 : vector<512x128xf32>
    %cst_62 = arith.constant 5.000000e-01 : f32
    %101 = vector.broadcast %cst_62 : f32 to vector<512x128xf32>
    %102 = arith.mulf %101, %100 : vector<512x128xf32>
    %103 = arith.mulf %95, %102 : vector<512x128xf32>
    %c0_63 = arith.constant 0 : index
    %c0_64 = arith.constant 0 : index
    %104 = vector.load %arg7[%c0_63, %c0_64] : memref<1x128xf32, #tpu.memory_space<vmem>>, vector<1x128xf32>
    "tpu.trace_start"() <{level = 10 : i32, message = "oh,bh->ob"}> : () -> ()
    %cst_65 = arith.constant dense<0.000000e+00> : vector<1x512xf32>
    %105 = tpu.matmul %104, %103, %cst_65 {dimension_numbers = #tpu.dot_dimension_numbers<[1], [1], [0], [0], [0, 0, 1, 0], [], []>} : vector<1x128xf32>, vector<512x128xf32>, vector<1x512xf32> -> vector<1x512xf32>
    "tpu.trace_stop"() : () -> ()
    %c0_66 = arith.constant 0 : index
    %c0_67 = arith.constant 0 : index
    %106 = vector.load %arg8[%c0_66, %c0_67] : memref<1x1xf32, #tpu.memory_space<vmem>>, vector<1x1xf32>
    %107 = vector.broadcast %106 : vector<1x1xf32> to vector<1x512xf32>
    %108 = arith.addf %105, %107 : vector<1x512xf32>
    %c0_68 = arith.constant 0 : index
    %c0_69 = arith.constant 0 : index
    %109 = vector.load %arg2[%c0_68, %c0_69] : memref<1x512xf32, #tpu.memory_space<vmem>>, vector<1x512xf32>
    %cst_70 = arith.constant 1.020000e+01 : f32
    %110 = vector.broadcast %cst_70 : f32 to vector<1x512xf32>
    %111 = arith.subf %110, %109 : vector<1x512xf32>
    %cst_71 = arith.constant 1.000000e-01 : f32
    %112 = vector.broadcast %cst_71 : f32 to vector<1x512xf32>
    %113 = arith.mulf %111, %112 : vector<1x512xf32>
    %cst_72 = arith.constant 2.000000e-01 : f32
    %114 = vector.broadcast %cst_72 : f32 to vector<1x512xf32>
    %115 = arith.subf %109, %114 : vector<1x512xf32>
    %cst_73 = arith.constant 1.020000e+01 : f32
    %116 = vector.broadcast %cst_73 : f32 to vector<1x512xf32>
    %117 = arith.subf %109, %116 : vector<1x512xf32>
    %118 = arith.mulf %115, %117 : vector<1x512xf32>
    %119 = arith.mulf %118, %108 : vector<1x512xf32>
    %120 = arith.addf %113, %119 : vector<1x512xf32>
    %c0_74 = arith.constant 0 : index
    %c0_75 = arith.constant 0 : index
    %121 = vector.load %arg9[%c0_74, %c0_75] : memref<1x512xf32, #tpu.memory_space<vmem>>, vector<1x512xf32>
    tpu.vector_store %arg9[%c0_74, %c0_75], %120 {strides = array<i32>} : memref<1x512xf32, #tpu.memory_space<vmem>>, vector<1x512xf32>,
    return
  }
  func.func @transform_0(%arg0: i32) -> (i32, i32) {
    %c0_i32 = arith.constant 0 : i32
    %c0_i32_0 = arith.constant 0 : i32
    return %arg0, %c0_i32 : i32, i32
  }
  func.func @transform_1(%arg0: i32) -> (i32, i32) {
    %c0_i32 = arith.constant 0 : i32
    %c0_i32_0 = arith.constant 0 : i32
    return %c0_i32, %arg0 : i32, i32
  }
  func.func @transform_2(%arg0: i32) -> (i32, i32) {
    %c0_i32 = arith.constant 0 : i32
    %c0_i32_0 = arith.constant 0 : i32
    %c0_i32_1 = arith.constant 0 : i32
    return %c0_i32, %c0_i32_0 : i32, i32
  }
  func.func @transform_3(%arg0: i32) -> (i32, i32) {
    %c0_i32 = arith.constant 0 : i32
    %c0_i32_0 = arith.constant 0 : i32
    %c0_i32_1 = arith.constant 0 : i32
    return %c0_i32, %c0_i32_0 : i32, i32
  }
  func.func @transform_4(%arg0: i32) -> (i32, i32, i32) {
    %c0_i32 = arith.constant 0 : i32
    %c0_i32_0 = arith.constant 0 : i32
    %c0_i32_1 = arith.constant 0 : i32
    %c0_i32_2 = arith.constant 0 : i32
    return %c0_i32, %c0_i32_0, %c0_i32_1 : i32, i32, i32
  }
  func.func @transform_5(%arg0: i32) -> (i32, i32, i32) {
    %c0_i32 = arith.constant 0 : i32
    %c0_i32_0 = arith.constant 0 : i32
    %c0_i32_1 = arith.constant 0 : i32
    %c0_i32_2 = arith.constant 0 : i32
    return %c0_i32, %c0_i32_0, %c0_i32_1 : i32, i32, i32
  }
  func.func @transform_6(%arg0: i32) -> (i32, i32) {
    %c0_i32 = arith.constant 0 : i32
    %c0_i32_0 = arith.constant 0 : i32
    %c0_i32_1 = arith.constant 0 : i32
    return %c0_i32, %c0_i32_0 : i32, i32
  }
  func.func @transform_7(%arg0: i32) -> (i32, i32) {
    %c0_i32 = arith.constant 0 : i32
    %c0_i32_0 = arith.constant 0 : i32
    %c0_i32_1 = arith.constant 0 : i32
    return %c0_i32, %c0_i32_0 : i32, i32
  }
  func.func @transform_8(%arg0: i32) -> (i32, i32) {
    %c0_i32 = arith.constant 0 : i32
    %c0_i32_0 = arith.constant 0 : i32
    return %c0_i32, %arg0 : i32, i32
  }
}

</mosaic_0001>

<llo_original>
// kernel: _lambda_.1
$region0: #{_lambda_.1}
  #allocation0 [shape = 'u32[]', space=smem, size = 0x4, offset = 0x4, fixed_abs, tag = 'smem constant byte address 0x4 - core index']
  #allocation1 [shape = 'u32[144,128]{1,0:T(1,128)}', space=vmem, size = 0x12000, scoped, tag = 'internal scratch']
  #allocation2 [shape = 'f32[1,1]{1,0:T(1,128)S(1)}', space=vmem, size = 0x200, scoped, tag = 'scoped memory for _lambda_.1']
  %s0 = inlined_call_operand.vmem [shape: f32[512,24], index: 0, kind: input, shape index: {}]
  %s1 = inlined_call_operand.vmem [shape: f32[1,512], index: 1, kind: input, shape index: {}]
  %s2 = inlined_call_operand.vmem [shape: f32[24,128], index: 2, kind: input, shape index: {}]
  %s3 = inlined_call_operand.vmem [shape: f32[1,128], index: 3, kind: input, shape index: {}]
  %s4 = inlined_call_operand.hbm [shape: f32[6,128,128], index: 4, kind: input, shape index: {}]
  %s5 = inlined_call_operand.vmem [shape: f32[6,1,128], index: 5, kind: input, shape index: {}]
  %s6 = inlined_call_operand.vmem [shape: f32[1,128], index: 6, kind: input, shape index: {}]
  %s7 = inlined_call_operand.<no memory space> [shape: f32[1,1], index: 7, kind: input, shape index: {}]
  %s8 = inlined_call_operand.hbm [shape: f32[1,512], index: 8, kind: output, shape index: {}]
  %s9 = sld [smem:[#allocation0]]
  $region46: #{_lambda_.1} parent=0
    _
  %s11 = ssub.s32 1, %s9
  %s12 = scalar_select 0, %s11, %s9
  %v13 = vstv %s7
  %14 = vst [vmem:[#allocation2] sm:$0x1] %v13
  $region1: #{_lambda_.1} parent=0
    #allocation3 [shape = 'u8[393216]{0}', space=vmem, size = 0x60000, scoped, tag = 'input window, operand 4, single buffered']
    #allocation4 [shape = 's32[1]{0}', space=sflag, size = 0x4, scoped, tag = 'scoped memory for _lambda_.1']
    #allocation5 [shape = 's32[1]{0}', space=sflag, size = 0x4, scoped, tag = 'scoped memory for _lambda_.1']
    #allocation6 [shape = 'u8[2048]{0}', space=vmem, size = 0x800, scoped, tag = 'output window, operand 0, single buffered']
    %15 = vsyncpa [#allocation4], 0
    %16 = vsyncpa [#allocation5], 0
    // Predicated region
    $region2: #{_lambda_.1} parent=1 // pred_check
      _
    $region3: #{_lambda_.1} parent=1 // pred_check_branch
      %18 = sbr.rel (0) target = $region5
    $region4: #{_lambda_.1} parent=1 // pred_region
      _
    $region5: #{_lambda_.1} parent=1 // pred_fallthru
      _
    // Predicated region
    $region6: #{_lambda_.1} parent=1 // pred_check
      _
    $region7: #{_lambda_.1} parent=1 // pred_check_branch
      %20 = sbr.rel (0) target = $region9
    $region8: #{_lambda_.1} parent=1 // pred_region
      _
    $region9: #{_lambda_.1} parent=1 // pred_fallthru
      _
    // Predicated region
    $region10: #{_lambda_.1} parent=1 // pred_check
      _
    $region11: #{_lambda_.1} parent=1 // pred_check_branch
      %22 = sbr.rel (0) target = $region13
    $region12: #{_lambda_.1} parent=1 // pred_region
      _
    $region13: #{_lambda_.1} parent=1 // pred_fallthru
      _
    // Predicated region
    $region14: #{_lambda_.1} parent=1 // pred_check
      _
    $region15: #{_lambda_.1} parent=1 // pred_check_branch
      %24 = sbr.rel (0) target = $region17
    $region16: #{_lambda_.1} parent=1 // pred_region
      _
    $region17: #{_lambda_.1} parent=1 // pred_fallthru
      _
    // Predicated region
    $region18: #{_lambda_.1} parent=1 // pred_check
      _
    $region19: #{_lambda_.1} parent=1 // pred_check_branch
      %26 = sbr.rel (0) target = $region21
    $region20: #{_lambda_.1} parent=1 // pred_region
      %s28 = ssub.s32 12288, 12288
      %29 = vsyncadd [#allocation4], %s28
      %s30 = sshll.u32 [#allocation3], 4
      %s31 = int_to_ptr.vmem [resolvable:$true] %s30
      %36 = dma.hbm_to_vmem [thread:$0]  %s4, 12288, %s31, [#allocation4], 128, 128, 8
    $region21: #{_lambda_.1} parent=1 // pred_fallthru
      _
    // Predicated region
    $region22: #{_lambda_.1} parent=1 // pred_check
      _
    $region23: #{_lambda_.1} parent=1 // pred_check_branch
      %38 = sbr.rel (0) target = $region25
    $region24: #{_lambda_.1} parent=1 // pred_region
      _
    $region25: #{_lambda_.1} parent=1 // pred_fallthru
      _
    // Predicated region
    $region26: #{_lambda_.1} parent=1 // pred_check
      _
    $region27: #{_lambda_.1} parent=1 // pred_check_branch
      %40 = sbr.rel (0) target = $region29
    $region28: #{_lambda_.1} parent=1 // pred_region
      _
    $region29: #{_lambda_.1} parent=1 // pred_fallthru
      _
    // Predicated region
    $region30: #{_lambda_.1} parent=1 // pred_check
      _
    $region31: #{_lambda_.1} parent=1 // pred_check_branch
      %42 = sbr.rel (0) target = $region33
    $region32: #{_lambda_.1} parent=1 // pred_region
      _
    $region33: #{_lambda_.1} parent=1 // pred_fallthru
      _
    // Predicated region
    $region34: #{_lambda_.1} parent=1 // pred_check
      _
    $region35: #{_lambda_.1} parent=1 // pred_check_branch
      %44 = sbr.rel (0) target = $region37
    $region36: #{_lambda_.1} parent=1 // pred_region
      %45 = dma.done [#allocation4], 12288
    $region37: #{_lambda_.1} parent=1 // pred_fallthru
      _
    %v46 = vld [vmem:[%s0] sm:$0xff]
    %v47 = vld [vmem:[%s0 + $0x8] sm:$0xff]
    %v48 = vld [vmem:[%s0 + $0x10] sm:$0xff]
    %v49 = vld [vmem:[%s0 + $0x18] sm:$0xff]
    %v50 = vld [vmem:[%s0 + $0x20] sm:$0xff]
    %v51 = vld [vmem:[%s0 + $0x28] sm:$0xff]
    %v52 = vld [vmem:[%s0 + $0x30] sm:$0xff]
    %v53 = vld [vmem:[%s0 + $0x38] sm:$0xff]
    %v54 = vld [vmem:[%s0 + $0x40] sm:$0xff]
    %v55 = vld [vmem:[%s0 + $0x48] sm:$0xff]
    %v56 = vld [vmem:[%s0 + $0x50] sm:$0xff]
    %v57 = vld [vmem:[%s0 + $0x58] sm:$0xff]
    %v58 = vld [vmem:[%s0 + $0x60] sm:$0xff]
    %v59 = vld [vmem:[%s0 + $0x68] sm:$0xff]
    %v60 = vld [vmem:[%s0 + $0x70] sm:$0xff]
    %v61 = vld [vmem:[%s0 + $0x78] sm:$0xff]
    %v62 = vld [vmem:[%s0 + $0x80] sm:$0xff]
    %v63 = vld [vmem:[%s0 + $0x88] sm:$0xff]
    %v64 = vld [vmem:[%s0 + $0x90] sm:$0xff]
    %v65 = vld [vmem:[%s0 + $0x98] sm:$0xff]
    %v66 = vld [vmem:[%s0 + $0xa0] sm:$0xff]
    %v67 = vld [vmem:[%s0 + $0xa8] sm:$0xff]
    %v68 = vld [vmem:[%s0 + $0xb0] sm:$0xff]
    %v69 = vld [vmem:[%s0 + $0xb8] sm:$0xff]
    %v70 = vld [vmem:[%s0 + $0xc0] sm:$0xff]
    %v71 = vld [vmem:[%s0 + $0xc8] sm:$0xff]
    %v72 = vld [vmem:[%s0 + $0xd0] sm:$0xff]
    %v73 = vld [vmem:[%s0 + $0xd8] sm:$0xff]
    %v74 = vld [vmem:[%s0 + $0xe0] sm:$0xff]
    %v75 = vld [vmem:[%s0 + $0xe8] sm:$0xff]
    %v76 = vld [vmem:[%s0 + $0xf0] sm:$0xff]
    %v77 = vld [vmem:[%s0 + $0xf8] sm:$0xff]
    %v78 = vld [vmem:[%s0 + $0x100] sm:$0xff]
    %v79 = vld [vmem:[%s0 + $0x108] sm:$0xff]
    %v80 = vld [vmem:[%s0 + $0x110] sm:$0xff]
    %v81 = vld [vmem:[%s0 + $0x118] sm:$0xff]
    %v82 = vld [vmem:[%s0 + $0x120] sm:$0xff]
    %v83 = vld [vmem:[%s0 + $0x128] sm:$0xff]
    %v84 = vld [vmem:[%s0 + $0x130] sm:$0xff]
    %v85 = vld [vmem:[%s0 + $0x138] sm:$0xff]
    %v86 = vld [vmem:[%s0 + $0x140] sm:$0xff]
    %v87 = vld [vmem:[%s0 + $0x148] sm:$0xff]
    %v88 = vld [vmem:[%s0 + $0x150] sm:$0xff]
    %v89 = vld [vmem:[%s0 + $0x158] sm:$0xff]
    %v90 = vld [vmem:[%s0 + $0x160] sm:$0xff]
    %v91 = vld [vmem:[%s0 + $0x168] sm:$0xff]
    %v92 = vld [vmem:[%s0 + $0x170] sm:$0xff]
    %v93 = vld [vmem:[%s0 + $0x178] sm:$0xff]
    %v94 = vld [vmem:[%s0 + $0x180] sm:$0xff]
    %v95 = vld [vmem:[%s0 + $0x188] sm:$0xff]
    %v96 = vld [vmem:[%s0 + $0x190] sm:$0xff]
    %v97 = vld [vmem:[%s0 + $0x198] sm:$0xff]
    %v98 = vld [vmem:[%s0 + $0x1a0] sm:$0xff]
    %v99 = vld [vmem:[%s0 + $0x1a8] sm:$0xff]
    %v100 = vld [vmem:[%s0 + $0x1b0] sm:$0xff]
    %v101 = vld [vmem:[%s0 + $0x1b8] sm:$0xff]
    %v102 = vld [vmem:[%s0 + $0x1c0] sm:$0xff]
    %v103 = vld [vmem:[%s0 + $0x1c8] sm:$0xff]
    %v104 = vld [vmem:[%s0 + $0x1d0] sm:$0xff]
    %v105 = vld [vmem:[%s0 + $0x1d8] sm:$0xff]
    %v106 = vld [vmem:[%s0 + $0x1e0] sm:$0xff]
    %v107 = vld [vmem:[%s0 + $0x1e8] sm:$0xff]
    %v108 = vld [vmem:[%s0 + $0x1f0] sm:$0xff]
    %v109 = vld [vmem:[%s0 + $0x1f8] sm:$0xff]
    %v110 = vld [vmem:[%s2] sm:$0xff]
    %v111 = vld [vmem:[%s2 + $0x8] sm:$0xff]
    %v112 = vld [vmem:[%s2 + $0x10] sm:$0xff]
    %v113 = vld [vmem:[%s3] sm:$0x1]
    %v115 = vlaneseq
    %v116 = vshrl.u32 %v115, 7
    %v117 = vsub.s32 0, %v116
    %v118 = vrot.slane %v113, %v117
    %vm120 = vcmask 195584
    %v122 = vsel %vm120, %v46, 0
    %v125 = vsel %vm120, %v47, 0
    %v128 = vsel %vm120, %v48, 0
    %v131 = vsel %vm120, %v49, 0
    %v134 = vsel %vm120, %v50, 0
    %v137 = vsel %vm120, %v51, 0
    %v140 = vsel %vm120, %v52, 0
    %v143 = vsel %vm120, %v53, 0
    %v146 = vsel %vm120, %v54, 0
    %v149 = vsel %vm120, %v55, 0
    %v152 = vsel %vm120, %v56, 0
    %v155 = vsel %vm120, %v57, 0
    %v158 = vsel %vm120, %v58, 0
    %v161 = vsel %vm120, %v59, 0
    %v164 = vsel %vm120, %v60, 0
    %v167 = vsel %vm120, %v61, 0
    %v170 = vsel %vm120, %v62, 0
    %v173 = vsel %vm120, %v63, 0
    %v176 = vsel %vm120, %v64, 0
    %v179 = vsel %vm120, %v65, 0
    %v182 = vsel %vm120, %v66, 0
    %v185 = vsel %vm120, %v67, 0
    %v188 = vsel %vm120, %v68, 0
    %v191 = vsel %vm120, %v69, 0
    %v194 = vsel %vm120, %v70, 0
    %v197 = vsel %vm120, %v71, 0
    %v200 = vsel %vm120, %v72, 0
    %v203 = vsel %vm120, %v73, 0
    %v206 = vsel %vm120, %v74, 0
    %v209 = vsel %vm120, %v75, 0
    %v212 = vsel %vm120, %v76, 0
    %v215 = vsel %vm120, %v77, 0
    %v218 = vsel %vm120, %v78, 0
    %v221 = vsel %vm120, %v79, 0
    %v224 = vsel %vm120, %v80, 0
    %v227 = vsel %vm120, %v81, 0
    %v230 = vsel %vm120, %v82, 0
    %v233 = vsel %vm120, %v83, 0
    %v236 = vsel %vm120, %v84, 0
    %v239 = vsel %vm120, %v85, 0
    %v242 = vsel %vm120, %v86, 0
    %v245 = vsel %vm120, %v87, 0
    %v248 = vsel %vm120, %v88, 0
    %v251 = vsel %vm120, %v89, 0
    %v254 = vsel %vm120, %v90, 0
    %v257 = vsel %vm120, %v91, 0
    %v260 = vsel %vm120, %v92, 0
    %v263 = vsel %vm120, %v93, 0
    %v266 = vsel %vm120, %v94, 0
    %v269 = vsel %vm120, %v95, 0
    %v272 = vsel %vm120, %v96, 0
    %v275 = vsel %vm120, %v97, 0
    %v278 = vsel %vm120, %v98, 0
    %v281 = vsel %vm120, %v99, 0
    %v284 = vsel %vm120, %v100, 0
    %v287 = vsel %vm120, %v101, 0
    %v290 = vsel %vm120, %v102, 0
    %v293 = vsel %vm120, %v103, 0
    %v296 = vsel %vm120, %v104, 0
    %v299 = vsel %vm120, %v105, 0
    %v302 = vsel %vm120, %v106, 0
    %v305 = vsel %vm120, %v107, 0
    %v308 = vsel %vm120, %v108, 0
    %v311 = vsel %vm120, %v109, 0
    %313 = vmatprep.subr.mxu0 0.0
    %314 = vmatpush1.msra.mxu0 %v110
    %315 = vmatprep.subr.mxu0 0.0
    %316 = vmatpush1.msra.mxu0 %v111
    %317 = vmatprep.subr.mxu0 0.0
    %318 = vmatpush1.msra.mxu0 %v112
    %319 = vmatprep.subr.mxu0 0.0
    %320 = vmatpush1.msra.mxu0 0.0
    %321 = vmatprep.subr.mxu0 0.0
    %322 = vmatpush1.msra.mxu0 0.0
    %323 = vmatprep.subr.mxu0 0.0
    %324 = vmatpush1.msra.mxu0 0.0
    %325 = vmatprep.subr.mxu0 0.0
    %326 = vmatpush1.msra.mxu0 0.0
    %327 = vmatprep.subr.mxu0 0.0
    %328 = vmatpush1.msra.mxu0 0.0
    %329 = vmatprep.subr.mxu0 0.0
    %330 = vmatpush1.msra.mxu0 0.0
    %331 = vmatprep.subr.mxu0 0.0
    %332 = vmatpush1.msra.mxu0 0.0
    %333 = vmatprep.subr.mxu0 0.0
    %334 = vmatpush1.msra.mxu0 0.0
    %335 = vmatprep.subr.mxu0 0.0
    %336 = vmatpush1.msra.mxu0 0.0
    %337 = vmatprep.subr.mxu0 0.0
    %338 = vmatpush1.msra.mxu0 0.0
    %339 = vmatprep.subr.mxu0 0.0
    %340 = vmatpush1.msra.mxu0 0.0
    %341 = vmatprep.subr.mxu0 0.0
    %342 = vmatpush1.msra.mxu0 0.0
    %343 = vmatprep.subr.mxu0 0.0
    %344 = vmatpush1.msra.mxu0 0.0
    %345 = vmatprep.subr.mxu0 0.0
    %346 = vmatpush1.msra.mxu0 0.0
    %347 = vmatprep.subr.mxu0 0.0
    %348 = vmatpush1.msra.mxu0 0.0
    %349 = vmatprep.subr.mxu0 0.0
    %350 = vmatpush1.msra.mxu0 0.0
    %351 = vmatprep.subr.mxu0 0.0
    %352 = vmatpush1.msra.mxu0 0.0
    %353 = vmatprep.subr.mxu0 0.0
    %354 = vmatpush1.msra.mxu0 0.0
    %355 = vmatprep.subr.mxu0 0.0
    %356 = vmatpush1.msra.mxu0 0.0
    %357 = vmatprep.subr.mxu0 0.0
    %358 = vmatpush1.msra.mxu0 0.0
    %359 = vmatprep.subr.mxu0 0.0
    %360 = vmatpush1.msra.mxu0 0.0
    %361 = vmatprep.subr.mxu0 0.0
    %362 = vmatpush1.msra.mxu0 0.0
    %363 = vmatprep.subr.mxu0 0.0
    %364 = vmatpush1.msra.mxu0 0.0
    %365 = vmatprep.subr.mxu0 0.0
    %366 = vmatpush1.msra.mxu0 0.0
    %367 = vmatprep.subr.mxu0 0.0
    %368 = vmatpush1.msra.mxu0 0.0
    %369 = vmatprep.subr.mxu0 0.0
    %370 = vmatpush1.msra.mxu0 0.0
    %371 = vmatprep.subr.mxu0 0.0
    %372 = vmatpush1.msra.mxu0 0.0
    %373 = vmatprep.subr.mxu0 0.0
    %374 = vmatpush1.msra.mxu0 0.0
    %375 = vmatprep.subr.mxu0 0.0
    %376 = vmatpush1.msra.mxu0 0.0
    %377 = vmatprep.mubr.f32.mxu0 0.0
    %378 = vmatmul.mubr.f32.gmra.mrb[0].mxu0 %v122
    %v379 = vpop.f32.mrb[0].mxu0
    %v380 = vadd.f32 %v118, %v379
    %v381 = vpop.f32.mrb[0].mxu0
    %382 = vmatprep.mubr.f32.mxu0 0.0
    %383 = vmatmul.mubr.f32.gmra.mrb[0].mxu0 %v125
    %v384 = vpop.f32.mrb[0].mxu0
    %v385 = vadd.f32 %v118, %v384
    %v386 = vpop.f32.mrb[0].mxu0
    %387 = vmatprep.mubr.f32.mxu0 0.0
    %388 = vmatmul.mubr.f32.gmra.mrb[0].mxu0 %v128
    %v389 = vpop.f32.mrb[0].mxu0
    %v390 = vadd.f32 %v118, %v389
    %v391 = vpop.f32.mrb[0].mxu0
    %392 = vmatprep.mubr.f32.mxu0 0.0
    %393 = vmatmul.mubr.f32.gmra.mrb[0].mxu0 %v131
    %v394 = vpop.f32.mrb[0].mxu0
    %v395 = vadd.f32 %v118, %v394
    %v396 = vpop.f32.mrb[0].mxu0
    %397 = vmatprep.mubr.f32.mxu0 0.0
    %398 = vmatmul.mubr.f32.gmra.mrb[0].mxu0 %v134
    %v399 = vpop.f32.mrb[0].mxu0
    %v400 = vadd.f32 %v118, %v399
    %v401 = vpop.f32.mrb[0].mxu0
    %402 = vmatprep.mubr.f32.mxu0 0.0
    %403 = vmatmul.mubr.f32.gmra.mrb[0].mxu0 %v137
    %v404 = vpop.f32.mrb[0].mxu0
    %v405 = vadd.f32 %v118, %v404
    %v406 = vpop.f32.mrb[0].mxu0
    %407 = vmatprep.mubr.f32.mxu0 0.0
    %408 = vmatmul.mubr.f32.gmra.mrb[0].mxu0 %v140
    %v409 = vpop.f32.mrb[0].mxu0
    %v410 = vadd.f32 %v118, %v409
    %v411 = vpop.f32.mrb[0].mxu0
    %412 = vmatprep.mubr.f32.mxu0 0.0
    %413 = vmatmul.mubr.f32.gmra.mrb[0].mxu0 %v143
    %v414 = vpop.f32.mrb[0].mxu0
    %v415 = vadd.f32 %v118, %v414
    %v416 = vpop.f32.mrb[0].mxu0
    %417 = vmatprep.mubr.f32.mxu0 0.0
    %418 = vmatmul.mubr.f32.gmra.mrb[0].mxu0 %v146
    %v419 = vpop.f32.mrb[0].mxu0
    %v420 = vadd.f32 %v118, %v419
    %v421 = vpop.f32.mrb[0].mxu0
    %422 = vmatprep.mubr.f32.mxu0 0.0
    %423 = vmatmul.mubr.f32.gmra.mrb[0].mxu0 %v149
    %v424 = vpop.f32.mrb[0].mxu0
    %v425 = vadd.f32 %v118, %v424
    %v426 = vpop.f32.mrb[0].mxu0
    %427 = vmatprep.mubr.f32.mxu0 0.0
    %428 = vmatmul.mubr.f32.gmra.mrb[0].mxu0 %v152
    %v429 = vpop.f32.mrb[0].mxu0
    %v430 = vadd.f32 %v118, %v429
    %v431 = vpop.f32.mrb[0].mxu0
    %432 = vmatprep.mubr.f32.mxu0 0.0
    %433 = vmatmul.mubr.f32.gmra.mrb[0].mxu0 %v155
    %v434 = vpop.f32.mrb[0].mxu0
    %v435 = vadd.f32 %v118, %v434
    %v436 = vpop.f32.mrb[0].mxu0
    %437 = vmatprep.mubr.f32.mxu0 0.0
    %438 = vmatmul.mubr.f32.gmra.mrb[0].mxu0 %v158
    %v439 = vpop.f32.mrb[0].mxu0
    %v440 = vadd.f32 %v118, %v439
    %v441 = vpop.f32.mrb[0].mxu0
    %442 = vmatprep.mubr.f32.mxu0 0.0
    %443 = vmatmul.mubr.f32.gmra.mrb[0].mxu0 %v161
    %v444 = vpop.f32.mrb[0].mxu0
    %v445 = vadd.f32 %v118, %v444
    %v446 = vpop.f32.mrb[0].mxu0
    %447 = vmatprep.mubr.f32.mxu0 0.0
    %448 = vmatmul.mubr.f32.gmra.mrb[0].mxu0 %v164
    %v449 = vpop.f32.mrb[0].mxu0
    %v450 = vadd.f32 %v118, %v449
    %v451 = vpop.f32.mrb[0].mxu0
    %452 = vmatprep.mubr.f32.mxu0 0.0
    %453 = vmatmul.mubr.f32.gmra.mrb[0].mxu0 %v167
    %v454 = vpop.f32.mrb[0].mxu0
    %v455 = vadd.f32 %v118, %v454
    %v456 = vpop.f32.mrb[0].mxu0
    %457 = vmatprep.mubr.f32.mxu0 0.0
    %458 = vmatmul.mubr.f32.gmra.mrb[0].mxu0 %v170
    %v459 = vpop.f32.mrb[0].mxu0
    %v460 = vadd.f32 %v118, %v459
    %v461 = vpop.f32.mrb[0].mxu0
    %462 = vmatprep.mubr.f32.mxu0 0.0
    %463 = vmatmul.mubr.f32.gmra.mrb[0].mxu0 %v173
    %v464 = vpop.f32.mrb[0].mxu0
    %v465 = vadd.f32 %v118, %v464
    %v466 = vpop.f32.mrb[0].mxu0
    %467 = vmatprep.mubr.f32.mxu0 0.0
    %468 = vmatmul.mubr.f32.gmra.mrb[0].mxu0 %v176
    %v469 = vpop.f32.mrb[0].mxu0
    %v470 = vadd.f32 %v118, %v469
    %v471 = vpop.f32.mrb[0].mxu0
    %472 = vmatprep.mubr.f32.mxu0 0.0
    %473 = vmatmul.mubr.f32.gmra.mrb[0].mxu0 %v179
    %v474 = vpop.f32.mrb[0].mxu0
    %v475 = vadd.f32 %v118, %v474
    %v476 = vpop.f32.mrb[0].mxu0
    %477 = vmatprep.mubr.f32.mxu0 0.0
    %478 = vmatmul.mubr.f32.gmra.mrb[0].mxu0 %v182
    %v479 = vpop.f32.mrb[0].mxu0
    %v480 = vadd.f32 %v118, %v479
    %v481 = vpop.f32.mrb[0].mxu0
    %482 = vmatprep.mubr.f32.mxu0 0.0
    %483 = vmatmul.mubr.f32.gmra.mrb[0].mxu0 %v185
    %v484 = vpop.f32.mrb[0].mxu0
    %v485 = vadd.f32 %v118, %v484
    %v486 = vpop.f32.mrb[0].mxu0
    %487 = vmatprep.mubr.f32.mxu0 0.0
    %488 = vmatmul.mubr.f32.gmra.mrb[0].mxu0 %v188
    %v489 = vpop.f32.mrb[0].mxu0
    %v490 = vadd.f32 %v118, %v489
    %v491 = vpop.f32.mrb[0].mxu0
    %492 = vmatprep.mubr.f32.mxu0 0.0
    %493 = vmatmul.mubr.f32.gmra.mrb[0].mxu0 %v191
    %v494 = vpop.f32.mrb[0].mxu0
    %v495 = vadd.f32 %v118, %v494
    %v496 = vpop.f32.mrb[0].mxu0
    %497 = vmatprep.mubr.f32.mxu0 0.0
    %498 = vmatmul.mubr.f32.gmra.mrb[0].mxu0 %v194
    %v499 = vpop.f32.mrb[0].mxu0
    %v500 = vadd.f32 %v118, %v499
    %v501 = vpop.f32.mrb[0].mxu0
    %502 = vmatprep.mubr.f32.mxu0 0.0
    %503 = vmatmul.mubr.f32.gmra.mrb[0].mxu0 %v197
    %v504 = vpop.f32.mrb[0].mxu0
    %v505 = vadd.f32 %v118, %v504
    %v506 = vpop.f32.mrb[0].mxu0
    %507 = vmatprep.mubr.f32.mxu0 0.0
    %508 = vmatmul.mubr.f32.gmra.mrb[0].mxu0 %v200
    %v509 = vpop.f32.mrb[0].mxu0
    %v510 = vadd.f32 %v118, %v509
    %v511 = vpop.f32.mrb[0].mxu0
    %512 = vmatprep.mubr.f32.mxu0 0.0
    %513 = vmatmul.mubr.f32.gmra.mrb[0].mxu0 %v203
    %v514 = vpop.f32.mrb[0].mxu0
    %v515 = vadd.f32 %v118, %v514
    %v516 = vpop.f32.mrb[0].mxu0
    %517 = vmatprep.mubr.f32.mxu0 0.0
    %518 = vmatmul.mubr.f32.gmra.mrb[0].mxu0 %v206
    %v519 = vpop.f32.mrb[0].mxu0
    %v520 = vadd.f32 %v118, %v519
    %v521 = vpop.f32.mrb[0].mxu0
    %522 = vmatprep.mubr.f32.mxu0 0.0
    %523 = vmatmul.mubr.f32.gmra.mrb[0].mxu0 %v209
    %v524 = vpop.f32.mrb[0].mxu0
    %v525 = vadd.f32 %v118, %v524
    %v526 = vpop.f32.mrb[0].mxu0
    %527 = vmatprep.mubr.f32.mxu0 0.0
    %528 = vmatmul.mubr.f32.gmra.mrb[0].mxu0 %v212
    %v529 = vpop.f32.mrb[0].mxu0
    %v530 = vadd.f32 %v118, %v529
    %v531 = vpop.f32.mrb[0].mxu0
    %532 = vmatprep.mubr.f32.mxu0 0.0
    %533 = vmatmul.mubr.f32.gmra.mrb[0].mxu0 %v215
    %v534 = vpop.f32.mrb[0].mxu0
    %v535 = vadd.f32 %v118, %v534
    %v536 = vpop.f32.mrb[0].mxu0
    %537 = vmatprep.mubr.f32.mxu0 0.0
    %538 = vmatmul.mubr.f32.gmra.mrb[0].mxu0 %v218
    %v539 = vpop.f32.mrb[0].mxu0
    %v540 = vadd.f32 %v118, %v539
    %v541 = vpop.f32.mrb[0].mxu0
    %542 = vmatprep.mubr.f32.mxu0 0.0
    %543 = vmatmul.mubr.f32.gmra.mrb[0].mxu0 %v221
    %v544 = vpop.f32.mrb[0].mxu0
    %v545 = vadd.f32 %v118, %v544
    %v546 = vpop.f32.mrb[0].mxu0
    %547 = vmatprep.mubr.f32.mxu0 0.0
    %548 = vmatmul.mubr.f32.gmra.mrb[0].mxu0 %v224
    %v549 = vpop.f32.mrb[0].mxu0
    %v550 = vadd.f32 %v118, %v549
    %v551 = vpop.f32.mrb[0].mxu0
    %552 = vmatprep.mubr.f32.mxu0 0.0
    %553 = vmatmul.mubr.f32.gmra.mrb[0].mxu0 %v227
    %v554 = vpop.f32.mrb[0].mxu0
    %v555 = vadd.f32 %v118, %v554
    %v556 = vpop.f32.mrb[0].mxu0
    %557 = vmatprep.mubr.f32.mxu0 0.0
    %558 = vmatmul.mubr.f32.gmra.mrb[0].mxu0 %v230
    %v559 = vpop.f32.mrb[0].mxu0
    %v560 = vadd.f32 %v118, %v559
    %v561 = vpop.f32.mrb[0].mxu0
    %562 = vmatprep.mubr.f32.mxu0 0.0
    %563 = vmatmul.mubr.f32.gmra.mrb[0].mxu0 %v233
    %v564 = vpop.f32.mrb[0].mxu0
    %v565 = vadd.f32 %v118, %v564
    %v566 = vpop.f32.mrb[0].mxu0
    %567 = vmatprep.mubr.f32.mxu0 0.0
    %568 = vmatmul.mubr.f32.gmra.mrb[0].mxu0 %v236
    %v569 = vpop.f32.mrb[0].mxu0
    %v570 = vadd.f32 %v118, %v569
    %v571 = vpop.f32.mrb[0].mxu0
    %572 = vmatprep.mubr.f32.mxu0 0.0
    %573 = vmatmul.mubr.f32.gmra.mrb[0].mxu0 %v239
    %v574 = vpop.f32.mrb[0].mxu0
    %v575 = vadd.f32 %v118, %v574
    %v576 = vpop.f32.mrb[0].mxu0
    %577 = vmatprep.mubr.f32.mxu0 0.0
    %578 = vmatmul.mubr.f32.gmra.mrb[0].mxu0 %v242
    %v579 = vpop.f32.mrb[0].mxu0
    %v580 = vadd.f32 %v118, %v579
    %v581 = vpop.f32.mrb[0].mxu0
    %582 = vmatprep.mubr.f32.mxu0 0.0
    %583 = vmatmul.mubr.f32.gmra.mrb[0].mxu0 %v245
    %v584 = vpop.f32.mrb[0].mxu0
    %v585 = vadd.f32 %v118, %v584
    %v586 = vpop.f32.mrb[0].mxu0
    %587 = vmatprep.mubr.f32.mxu0 0.0
    %588 = vmatmul.mubr.f32.gmra.mrb[0].mxu0 %v248
    %v589 = vpop.f32.mrb[0].mxu0
    %v590 = vadd.f32 %v118, %v589
    %v591 = vpop.f32.mrb[0].mxu0
    %592 = vmatprep.mubr.f32.mxu0 0.0
    %593 = vmatmul.mubr.f32.gmra.mrb[0].mxu0 %v251
    %v594 = vpop.f32.mrb[0].mxu0
    %v595 = vadd.f32 %v118, %v594
    %v596 = vpop.f32.mrb[0].mxu0
    %597 = vmatprep.mubr.f32.mxu0 0.0
    %598 = vmatmul.mubr.f32.gmra.mrb[0].mxu0 %v254
    %v599 = vpop.f32.mrb[0].mxu0
    %v600 = vadd.f32 %v118, %v599
    %v601 = vpop.f32.mrb[0].mxu0
    %602 = vmatprep.mubr.f32.mxu0 0.0
    %603 = vmatmul.mubr.f32.gmra.mrb[0].mxu0 %v257
    %v604 = vpop.f32.mrb[0].mxu0
    %v605 = vadd.f32 %v118, %v604
    %v606 = vpop.f32.mrb[0].mxu0
    %607 = vmatprep.mubr.f32.mxu0 0.0
    %608 = vmatmul.mubr.f32.gmra.mrb[0].mxu0 %v260
    %v609 = vpop.f32.mrb[0].mxu0
    %v610 = vadd.f32 %v118, %v609
    %v611 = vpop.f32.mrb[0].mxu0
    %612 = vmatprep.mubr.f32.mxu0 0.0
    %613 = vmatmul.mubr.f32.gmra.mrb[0].mxu0 %v263
    %v614 = vpop.f32.mrb[0].mxu0
    %v615 = vadd.f32 %v118, %v614
    %v616 = vpop.f32.mrb[0].mxu0
    %617 = vmatprep.mubr.f32.mxu0 0.0
    %618 = vmatmul.mubr.f32.gmra.mrb[0].mxu0 %v266
    %v619 = vpop.f32.mrb[0].mxu0
    %v620 = vadd.f32 %v118, %v619
    %v621 = vpop.f32.mrb[0].mxu0
    %622 = vmatprep.mubr.f32.mxu0 0.0
    %623 = vmatmul.mubr.f32.gmra.mrb[0].mxu0 %v269
    %v624 = vpop.f32.mrb[0].mxu0
    %v625 = vadd.f32 %v118, %v624
    %v626 = vpop.f32.mrb[0].mxu0
    %627 = vmatprep.mubr.f32.mxu0 0.0
    %628 = vmatmul.mubr.f32.gmra.mrb[0].mxu0 %v272
    %v629 = vpop.f32.mrb[0].mxu0
    %v630 = vadd.f32 %v118, %v629
    %v631 = vpop.f32.mrb[0].mxu0
    %632 = vmatprep.mubr.f32.mxu0 0.0
    %633 = vmatmul.mubr.f32.gmra.mrb[0].mxu0 %v275
    %v634 = vpop.f32.mrb[0].mxu0
    %v635 = vadd.f32 %v118, %v634
    %v636 = vpop.f32.mrb[0].mxu0
    %637 = vmatprep.mubr.f32.mxu0 0.0
    %638 = vmatmul.mubr.f32.gmra.mrb[0].mxu0 %v278
    %v639 = vpop.f32.mrb[0].mxu0
    %v640 = vadd.f32 %v118, %v639
    %v641 = vpop.f32.mrb[0].mxu0
    %642 = vmatprep.mubr.f32.mxu0 0.0
    %643 = vmatmul.mubr.f32.gmra.mrb[0].mxu0 %v281
    %v644 = vpop.f32.mrb[0].mxu0
    %v645 = vadd.f32 %v118, %v644
    %v646 = vpop.f32.mrb[0].mxu0
    %647 = vmatprep.mubr.f32.mxu0 0.0
    %648 = vmatmul.mubr.f32.gmra.mrb[0].mxu0 %v284
    %v649 = vpop.f32.mrb[0].mxu0
    %v650 = vadd.f32 %v118, %v649
    %v651 = vpop.f32.mrb[0].mxu0
    %652 = vmatprep.mubr.f32.mxu0 0.0
    %653 = vmatmul.mubr.f32.gmra.mrb[0].mxu0 %v287
    %v654 = vpop.f32.mrb[0].mxu0
    %v655 = vadd.f32 %v118, %v654
    %v656 = vpop.f32.mrb[0].mxu0
    %657 = vmatprep.mubr.f32.mxu0 0.0
    %658 = vmatmul.mubr.f32.gmra.mrb[0].mxu0 %v290
    %v659 = vpop.f32.mrb[0].mxu0
    %v660 = vadd.f32 %v118, %v659
    %v661 = vpop.f32.mrb[0].mxu0
    %662 = vmatprep.mubr.f32.mxu0 0.0
    %663 = vmatmul.mubr.f32.gmra.mrb[0].mxu0 %v293
    %v664 = vpop.f32.mrb[0].mxu0
    %v665 = vadd.f32 %v118, %v664
    %v666 = vpop.f32.mrb[0].mxu0
    %667 = vmatprep.mubr.f32.mxu0 0.0
    %668 = vmatmul.mubr.f32.gmra.mrb[0].mxu0 %v296
    %v669 = vpop.f32.mrb[0].mxu0
    %v670 = vadd.f32 %v118, %v669
    %v671 = vpop.f32.mrb[0].mxu0
    %672 = vmatprep.mubr.f32.mxu0 0.0
    %673 = vmatmul.mubr.f32.gmra.mrb[0].mxu0 %v299
    %v674 = vpop.f32.mrb[0].mxu0
    %v675 = vadd.f32 %v118, %v674
    %v676 = vpop.f32.mrb[0].mxu0
    %677 = vmatprep.mubr.f32.mxu0 0.0
    %678 = vmatmul.mubr.f32.gmra.mrb[0].mxu0 %v302
    %v679 = vpop.f32.mrb[0].mxu0
    %v680 = vadd.f32 %v118, %v679
    %v681 = vpop.f32.mrb[0].mxu0
    %682 = vmatprep.mubr.f32.mxu0 0.0
    %683 = vmatmul.mubr.f32.gmra.mrb[0].mxu0 %v305
    %v684 = vpop.f32.mrb[0].mxu0
    %v685 = vadd.f32 %v118, %v684
    %v686 = vpop.f32.mrb[0].mxu0
    %687 = vmatprep.mubr.f32.mxu0 0.0
    %688 = vmatmul.mubr.f32.gmra.mrb[0].mxu0 %v308
    %v689 = vpop.f32.mrb[0].mxu0
    %v690 = vadd.f32 %v118, %v689
    %v691 = vpop.f32.mrb[0].mxu0
    %692 = vmatprep.mubr.f32.mxu0 0.0
    %693 = vmatmul.mubr.f32.gmra.mrb[0].mxu0 %v311
    %v694 = vpop.f32.mrb[0].mxu0
    %v695 = vadd.f32 %v118, %v694
    %v696 = vpop.f32.mrb[0].mxu0
    %697 = vdwg.mxu0
    %v698 = vmul.f32 %v380, 0.5
    %v699 = vmul.f32 %v385, 0.5
    %v700 = vmul.f32 %v390, 0.5
    %v701 = vmul.f32 %v395, 0.5
    %v702 = vmul.f32 %v400, 0.5
    %v703 = vmul.f32 %v405, 0.5
    %v704 = vmul.f32 %v410, 0.5
    %v705 = vmul.f32 %v415, 0.5
    %v706 = vmul.f32 %v420, 0.5
    %v707 = vmul.f32 %v425, 0.5
    %v708 = vmul.f32 %v430, 0.5
    %v709 = vmul.f32 %v435, 0.5
    %v710 = vmul.f32 %v440, 0.5
    %v711 = vmul.f32 %v445, 0.5
    %v712 = vmul.f32 %v450, 0.5
    %v713 = vmul.f32 %v455, 0.5
    %v714 = vmul.f32 %v460, 0.5
    %v715 = vmul.f32 %v465, 0.5
    %v716 = vmul.f32 %v470, 0.5
    %v717 = vmul.f32 %v475, 0.5
    %v718 = vmul.f32 %v480, 0.5
    %v719 = vmul.f32 %v485, 0.5
    %v720 = vmul.f32 %v490, 0.5
    %v721 = vmul.f32 %v495, 0.5
    %v722 = vmul.f32 %v500, 0.5
    %v723 = vmul.f32 %v505, 0.5
    %v724 = vmul.f32 %v510, 0.5
    %v725 = vmul.f32 %v515, 0.5
    %v726 = vmul.f32 %v520, 0.5
    %v727 = vmul.f32 %v525, 0.5
    %v728 = vmul.f32 %v530, 0.5
    %v729 = vmul.f32 %v535, 0.5
    %v730 = vmul.f32 %v540, 0.5
    %v731 = vmul.f32 %v545, 0.5
    %v732 = vmul.f32 %v550, 0.5
    %v733 = vmul.f32 %v555, 0.5
    %v734 = vmul.f32 %v560, 0.5
    %v735 = vmul.f32 %v565, 0.5
    %v736 = vmul.f32 %v570, 0.5
    %v737 = vmul.f32 %v575, 0.5
    %v738 = vmul.f32 %v580, 0.5
    %v739 = vmul.f32 %v585, 0.5
    %v740 = vmul.f32 %v590, 0.5
    %v741 = vmul.f32 %v595, 0.5
    %v742 = vmul.f32 %v600, 0.5
    %v743 = vmul.f32 %v605, 0.5
    %v744 = vmul.f32 %v610, 0.5
    %v745 = vmul.f32 %v615, 0.5
    %v746 = vmul.f32 %v620, 0.5
    %v747 = vmul.f32 %v625, 0.5
    %v748 = vmul.f32 %v630, 0.5
    %v749 = vmul.f32 %v635, 0.5
    %v750 = vmul.f32 %v640, 0.5
    %v751 = vmul.f32 %v645, 0.5
    %v752 = vmul.f32 %v650, 0.5
    %v753 = vmul.f32 %v655, 0.5
    %v754 = vmul.f32 %v660, 0.5
    %v755 = vmul.f32 %v665, 0.5
    %v756 = vmul.f32 %v670, 0.5
    %v757 = vmul.f32 %v675, 0.5
    %v758 = vmul.f32 %v680, 0.5
    %v759 = vmul.f32 %v685, 0.5
    %v760 = vmul.f32 %v690, 0.5
    %v761 = vmul.f32 %v695, 0.5
    %v762 = vtanh.pop %v698
    %v763 = vtanh.pop %v699
    %v764 = vtanh.pop %v700
    %v765 = vtanh.pop %v701
    %v766 = vtanh.pop %v702
    %v767 = vtanh.pop %v703
    %v768 = vtanh.pop %v704
    %v769 = vtanh.pop %v705
    %v770 = vtanh.pop %v706
    %v771 = vtanh.pop %v707
    %v772 = vtanh.pop %v708
    %v773 = vtanh.pop %v709
    %v774 = vtanh.pop %v710
    %v775 = vtanh.pop %v711
    %v776 = vtanh.pop %v712
    %v777 = vtanh.pop %v713
    %v778 = vtanh.pop %v714
    %v779 = vtanh.pop %v715
    %v780 = vtanh.pop %v716
    %v781 = vtanh.pop %v717
    %v782 = vtanh.pop %v718
    %v783 = vtanh.pop %v719
    %v784 = vtanh.pop %v720
    %v785 = vtanh.pop %v721
    %v786 = vtanh.pop %v722
    %v787 = vtanh.pop %v723
    %v788 = vtanh.pop %v724
    %v789 = vtanh.pop %v725
    %v790 = vtanh.pop %v726
    %v791 = vtanh.pop %v727
    %v792 = vtanh.pop %v728
    %v793 = vtanh.pop %v729
    %v794 = vtanh.pop %v730
    %v795 = vtanh.pop %v731
    %v796 = vtanh.pop %v732
    %v797 = vtanh.pop %v733
    %v798 = vtanh.pop %v734
    %v799 = vtanh.pop %v735
    %v800 = vtanh.pop %v736
    %v801 = vtanh.pop %v737
    %v802 = vtanh.pop %v738
    %v803 = vtanh.pop %v739
    %v804 = vtanh.pop %v740
    %v805 = vtanh.pop %v741
    %v806 = vtanh.pop %v742
    %v807 = vtanh.pop %v743
    %v808 = vtanh.pop %v744
    %v809 = vtanh.pop %v745
    %v810 = vtanh.pop %v746
    %v811 = vtanh.pop %v747
    %v812 = vtanh.pop %v748
    %v813 = vtanh.pop %v749
    %v814 = vtanh.pop %v750
    %v815 = vtanh.pop %v751
    %v816 = vtanh.pop %v752
    %v817 = vtanh.pop %v753
    %v818 = vtanh.pop %v754
    %v819 = vtanh.pop %v755
    %v820 = vtanh.pop %v756
    %v821 = vtanh.pop %v757
    %v822 = vtanh.pop %v758
    %v823 = vtanh.pop %v759
    %v824 = vtanh.pop %v760
    %v825 = vtanh.pop %v761
    %v826 = vadd.f32 %v762, 1.0
    %v827 = vadd.f32 %v763, 1.0
    %v828 = vadd.f32 %v764, 1.0
    %v829 = vadd.f32 %v765, 1.0
    %v830 = vadd.f32 %v766, 1.0
    %v831 = vadd.f32 %v767, 1.0
    %v832 = vadd.f32 %v768, 1.0
    %v833 = vadd.f32 %v769, 1.0
    %v834 = vadd.f32 %v770, 1.0
    %v835 = vadd.f32 %v771, 1.0
    %v836 = vadd.f32 %v772, 1.0
    %v837 = vadd.f32 %v773, 1.0
    %v838 = vadd.f32 %v774, 1.0
    %v839 = vadd.f32 %v775, 1.0
    %v840 = vadd.f32 %v776, 1.0
    %v841 = vadd.f32 %v777, 1.0
    %v842 = vadd.f32 %v778, 1.0
    %v843 = vadd.f32 %v779, 1.0
    %v844 = vadd.f32 %v780, 1.0
    %v845 = vadd.f32 %v781, 1.0
    %v846 = vadd.f32 %v782, 1.0
    %v847 = vadd.f32 %v783, 1.0
    %v848 = vadd.f32 %v784, 1.0
    %v849 = vadd.f32 %v785, 1.0
    %v850 = vadd.f32 %v786, 1.0
    %v851 = vadd.f32 %v787, 1.0
    %v852 = vadd.f32 %v788, 1.0
    %v853 = vadd.f32 %v789, 1.0
    %v854 = vadd.f32 %v790, 1.0
    %v855 = vadd.f32 %v791, 1.0
    %v856 = vadd.f32 %v792, 1.0
    %v857 = vadd.f32 %v793, 1.0
    %v858 = vadd.f32 %v794, 1.0
    %v859 = vadd.f32 %v795, 1.0
    %v860 = vadd.f32 %v796, 1.0
    %v861 = vadd.f32 %v797, 1.0
    %v862 = vadd.f32 %v798, 1.0
    %v863 = vadd.f32 %v799, 1.0
    %v864 = vadd.f32 %v800, 1.0
    %v865 = vadd.f32 %v801, 1.0
    %v866 = vadd.f32 %v802, 1.0
    %v867 = vadd.f32 %v803, 1.0
    %v868 = vadd.f32 %v804, 1.0
    %v869 = vadd.f32 %v805, 1.0
    %v870 = vadd.f32 %v806, 1.0
    %v871 = vadd.f32 %v807, 1.0
    %v872 = vadd.f32 %v808, 1.0
    %v873 = vadd.f32 %v809, 1.0
    %v874 = vadd.f32 %v810, 1.0
    %v875 = vadd.f32 %v811, 1.0
    %v876 = vadd.f32 %v812, 1.0
    %v877 = vadd.f32 %v813, 1.0
    %v878 = vadd.f32 %v814, 1.0
    %v879 = vadd.f32 %v815, 1.0
    %v880 = vadd.f32 %v816, 1.0
    %v881 = vadd.f32 %v817, 1.0
    %v882 = vadd.f32 %v818, 1.0
    %v883 = vadd.f32 %v819, 1.0
    %v884 = vadd.f32 %v820, 1.0
    %v885 = vadd.f32 %v821, 1.0
    %v886 = vadd.f32 %v822, 1.0
    %v887 = vadd.f32 %v823, 1.0
    %v888 = vadd.f32 %v824, 1.0
    %v889 = vadd.f32 %v825, 1.0
    %v890 = vmul.f32 %v826, 0.5
    %v891 = vmul.f32 %v827, 0.5
    %v892 = vmul.f32 %v828, 0.5
    %v893 = vmul.f32 %v829, 0.5
    %v894 = vmul.f32 %v830, 0.5
    %v895 = vmul.f32 %v831, 0.5
    %v896 = vmul.f32 %v832, 0.5
    %v897 = vmul.f32 %v833, 0.5
    %v898 = vmul.f32 %v834, 0.5
    %v899 = vmul.f32 %v835, 0.5
    %v900 = vmul.f32 %v836, 0.5
    %v901 = vmul.f32 %v837, 0.5
    %v902 = vmul.f32 %v838, 0.5
    %v903 = vmul.f32 %v839, 0.5
    %v904 = vmul.f32 %v840, 0.5
    %v905 = vmul.f32 %v841, 0.5
    %v906 = vmul.f32 %v842, 0.5
    %v907 = vmul.f32 %v843, 0.5
    %v908 = vmul.f32 %v844, 0.5
    %v909 = vmul.f32 %v845, 0.5
    %v910 = vmul.f32 %v846, 0.5
    %v911 = vmul.f32 %v847, 0.5
    %v912 = vmul.f32 %v848, 0.5
    %v913 = vmul.f32 %v849, 0.5
    %v914 = vmul.f32 %v850, 0.5
    %v915 = vmul.f32 %v851, 0.5
    %v916 = vmul.f32 %v852, 0.5
    %v917 = vmul.f32 %v853, 0.5
    %v918 = vmul.f32 %v854, 0.5
    %v919 = vmul.f32 %v855, 0.5
    %v920 = vmul.f32 %v856, 0.5
    %v921 = vmul.f32 %v857, 0.5
    %v922 = vmul.f32 %v858, 0.5
    %v923 = vmul.f32 %v859, 0.5
    %v924 = vmul.f32 %v860, 0.5
    %v925 = vmul.f32 %v861, 0.5
    %v926 = vmul.f32 %v862, 0.5
    %v927 = vmul.f32 %v863, 0.5
    %v928 = vmul.f32 %v864, 0.5
    %v929 = vmul.f32 %v865, 0.5
    %v930 = vmul.f32 %v866, 0.5
    %v931 = vmul.f32 %v867, 0.5
    %v932 = vmul.f32 %v868, 0.5
    %v933 = vmul.f32 %v869, 0.5
    %v934 = vmul.f32 %v870, 0.5
    %v935 = vmul.f32 %v871, 0.5
    %v936 = vmul.f32 %v872, 0.5
    %v937 = vmul.f32 %v873, 0.5
    %v938 = vmul.f32 %v874, 0.5
    %v939 = vmul.f32 %v875, 0.5
    %v940 = vmul.f32 %v876, 0.5
    %v941 = vmul.f32 %v877, 0.5
    %v942 = vmul.f32 %v878, 0.5
    %v943 = vmul.f32 %v879, 0.5
    %v944 = vmul.f32 %v880, 0.5
    %v945 = vmul.f32 %v881, 0.5
    %v946 = vmul.f32 %v882, 0.5
    %v947 = vmul.f32 %v883, 0.5
    %v948 = vmul.f32 %v884, 0.5
    %v949 = vmul.f32 %v885, 0.5
    %v950 = vmul.f32 %v886, 0.5
    %v951 = vmul.f32 %v887, 0.5
    %v952 = vmul.f32 %v888, 0.5
    %v953 = vmul.f32 %v889, 0.5
    %v954 = vmul.f32 %v380, %v890
    %v955 = vmul.f32 %v385, %v891
    %v956 = vmul.f32 %v390, %v892
    %v957 = vmul.f32 %v395, %v893
    %v958 = vmul.f32 %v400, %v894
    %v959 = vmul.f32 %v405, %v895
    %v960 = vmul.f32 %v410, %v896
    %v961 = vmul.f32 %v415, %v897
    %v962 = vmul.f32 %v420, %v898
    %v963 = vmul.f32 %v425, %v899
    %v964 = vmul.f32 %v430, %v900
    %v965 = vmul.f32 %v435, %v901
    %v966 = vmul.f32 %v440, %v902
    %v967 = vmul.f32 %v445, %v903
    %v968 = vmul.f32 %v450, %v904
    %v969 = vmul.f32 %v455, %v905
    %v970 = vmul.f32 %v460, %v906
    %v971 = vmul.f32 %v465, %v907
    %v972 = vmul.f32 %v470, %v908
    %v973 = vmul.f32 %v475, %v909
    %v974 = vmul.f32 %v480, %v910
    %v975 = vmul.f32 %v485, %v911
    %v976 = vmul.f32 %v490, %v912
    %v977 = vmul.f32 %v495, %v913
    %v978 = vmul.f32 %v500, %v914
    %v979 = vmul.f32 %v505, %v915
    %v980 = vmul.f32 %v510, %v916
    %v981 = vmul.f32 %v515, %v917
    %v982 = vmul.f32 %v520, %v918
    %v983 = vmul.f32 %v525, %v919
    %v984 = vmul.f32 %v530, %v920
    %v985 = vmul.f32 %v535, %v921
    %v986 = vmul.f32 %v540, %v922
    %v987 = vmul.f32 %v545, %v923
    %v988 = vmul.f32 %v550, %v924
    %v989 = vmul.f32 %v555, %v925
    %v990 = vmul.f32 %v560, %v926
    %v991 = vmul.f32 %v565, %v927
    %v992 = vmul.f32 %v570, %v928
    %v993 = vmul.f32 %v575, %v929
    %v994 = vmul.f32 %v580, %v930
    %v995 = vmul.f32 %v585, %v931
    %v996 = vmul.f32 %v590, %v932
    %v997 = vmul.f32 %v595, %v933
    %v998 = vmul.f32 %v600, %v934
    %v999 = vmul.f32 %v605, %v935
    %v1000 = vmul.f32 %v610, %v936
    %v1001 = vmul.f32 %v615, %v937
    %v1002 = vmul.f32 %v620, %v938
    %v1003 = vmul.f32 %v625, %v939
    %v1004 = vmul.f32 %v630, %v940
    %v1005 = vmul.f32 %v635, %v941
    %v1006 = vmul.f32 %v640, %v942
    %v1007 = vmul.f32 %v645, %v943
    %v1008 = vmul.f32 %v650, %v944
    %v1009 = vmul.f32 %v655, %v945
    %v1010 = vmul.f32 %v660, %v946
    %v1011 = vmul.f32 %v665, %v947
    %v1012 = vmul.f32 %v670, %v948
    %v1013 = vmul.f32 %v675, %v949
    %v1014 = vmul.f32 %v680, %v950
    %v1015 = vmul.f32 %v685, %v951
    %v1016 = vmul.f32 %v690, %v952
    %v1017 = vmul.f32 %v695, %v953
    %v1018 = vld [vmem:[#allocation3] sm:$0xff]
    %v1019 = vld [vmem:[#allocation3 + $0x8] sm:$0xff]
    %v1020 = vld [vmem:[#allocation3 + $0x10] sm:$0xff]
    %v1021 = vld [vmem:[#allocation3 + $0x18] sm:$0xff]
    %v1022 = vld [vmem:[#allocation3 + $0x20] sm:$0xff]
    %v1023 = vld [vmem:[#allocation3 + $0x28] sm:$0xff]
    %v1024 = vld [vmem:[#allocation3 + $0x30] sm:$0xff]
    %v1025 = vld [vmem:[#allocation3 + $0x38] sm:$0xff]
    %v1026 = vld [vmem:[#allocation3 + $0x40] sm:$0xff]
    %v1027 = vld [vmem:[#allocation3 + $0x48] sm:$0xff]
    %v1028 = vld [vmem:[#allocation3 + $0x50] sm:$0xff]
    %v1029 = vld [vmem:[#allocation3 + $0x58] sm:$0xff]
    %v1030 = vld [vmem:[#allocation3 + $0x60] sm:$0xff]
    %v1031 = vld [vmem:[#allocation3 + $0x68] sm:$0xff]
    %v1032 = vld [vmem:[#allocation3 + $0x70] sm:$0xff]
    %v1033 = vld [vmem:[#allocation3 + $0x78] sm:$0xff]
    %v1034 = vld [vmem:[%s5] sm:$0x1]
    %v1036 = vlaneseq
    %v1037 = vshrl.u32 %v1036, 7
    %v1038 = vsub.s32 0, %v1037
    %v1039 = vrot.slane %v1034, %v1038
    %1041 = vmatprep.subr.mxu0 0.0
    %1042 = vmatpush1.msra.mxu0 %v1018
    %1043 = vmatprep.subr.mxu0 0.0
    %1044 = vmatpush1.msra.mxu0 %v1019
    %1045 = vmatprep.subr.mxu0 0.0
    %1046 = vmatpush1.msra.mxu0 %v1020
    %1047 = vmatprep.subr.mxu0 0.0
    %1048 = vmatpush1.msra.mxu0 %v1021
    %1049 = vmatprep.subr.mxu0 0.0
    %1050 = vmatpush1.msra.mxu0 %v1022
    %1051 = vmatprep.subr.mxu0 0.0
    %1052 = vmatpush1.msra.mxu0 %v1023
    %1053 = vmatprep.subr.mxu0 0.0
    %1054 = vmatpush1.msra.mxu0 %v1024
    %1055 = vmatprep.subr.mxu0 0.0
    %1056 = vmatpush1.msra.mxu0 %v1025
    %1057 = vmatprep.subr.mxu0 0.0
    %1058 = vmatpush1.msra.mxu0 %v1026
    %1059 = vmatprep.subr.mxu0 0.0
    %1060 = vmatpush1.msra.mxu0 %v1027
    %1061 = vmatprep.subr.mxu0 0.0
    %1062 = vmatpush1.msra.mxu0 %v1028
    %1063 = vmatprep.subr.mxu0 0.0
    %1064 = vmatpush1.msra.mxu0 %v1029
    %1065 = vmatprep.subr.mxu0 0.0
    %1066 = vmatpush1.msra.mxu0 %v1030
    %1067 = vmatprep.subr.mxu0 0.0
    %1068 = vmatpush1.msra.mxu0 %v1031
    %1069 = vmatprep.subr.mxu0 0.0
    %1070 = vmatpush1.msra.mxu0 %v1032
    %1071 = vmatprep.subr.mxu0 0.0
    %1072 = vmatpush1.msra.mxu0 %v1033
    %1073 = vmatprep.subr.mxu0 0.0
    %1074 = vmatpush1.msra.mxu0 0.0
    %1075 = vmatprep.subr.mxu0 0.0
    %1076 = vmatpush1.msra.mxu0 0.0
    %1077 = vmatprep.subr.mxu0 0.0
    %1078 = vmatpush1.msra.mxu0 0.0
    %1079 = vmatprep.subr.mxu0 0.0
    %1080 = vmatpush1.msra.mxu0 0.0
    %1081 = vmatprep.subr.mxu0 0.0
    %1082 = vmatpush1.msra.mxu0 0.0
    %1083 = vmatprep.subr.mxu0 0.0
    %1084 = vmatpush1.msra.mxu0 0.0
    %1085 = vmatprep.subr.mxu0 0.0
    %1086 = vmatpush1.msra.mxu0 0.0
    %1087 = vmatprep.subr.mxu0 0.0
    %1088 = vmatpush1.msra.mxu0 0.0
    %1089 = vmatprep.subr.mxu0 0.0
    %1090 = vmatpush1.msra.mxu0 0.0
    %1091 = vmatprep.subr.mxu0 0.0
    %1092 = vmatpush1.msra.mxu0 0.0
    %1093 = vmatprep.subr.mxu0 0.0
    %1094 = vmatpush1.msra.mxu0 0.0
    %1095 = vmatprep.subr.mxu0 0.0
    %1096 = vmatpush1.msra.mxu0 0.0
    %1097 = vmatprep.subr.mxu0 0.0
    %1098 = vmatpush1.msra.mxu0 0.0
    %1099 = vmatprep.subr.mxu0 0.0
    %1100 = vmatpush1.msra.mxu0 0.0
    %1101 = vmatprep.subr.mxu0 0.0
    %1102 = vmatpush1.msra.mxu0 0.0
    %1103 = vmatprep.subr.mxu0 0.0
    %1104 = vmatpush1.msra.mxu0 0.0
    %1105 = vmatprep.mubr.f32.mxu0 0.0
    %1106 = vmatmul.mubr.f32.gmra.mrb[0].mxu0 %v954
    %v1107 = vpop.f32.mrb[0].mxu0
    %v1108 = vadd.f32 %v1039, %v1107
    %v1109 = vpop.f32.mrb[0].mxu0
    %1110 = vmatprep.mubr.f32.mxu0 0.0
    %1111 = vmatmul.mubr.f32.gmra.mrb[0].mxu0 %v955
    %v1112 = vpop.f32.mrb[0].mxu0
    %v1113 = vadd.f32 %v1039, %v1112
    %v1114 = vpop.f32.mrb[0].mxu0
    %1115 = vmatprep.mubr.f32.mxu0 0.0
    %1116 = vmatmul.mubr.f32.gmra.mrb[0].mxu0 %v956
    %v1117 = vpop.f32.mrb[0].mxu0
    %v1118 = vadd.f32 %v1039, %v1117
    %v1119 = vpop.f32.mrb[0].mxu0
    %1120 = vmatprep.mubr.f32.mxu0 0.0
    %1121 = vmatmul.mubr.f32.gmra.mrb[0].mxu0 %v957
    %v1122 = vpop.f32.mrb[0].mxu0
    %v1123 = vadd.f32 %v1039, %v1122
    %v1124 = vpop.f32.mrb[0].mxu0
    %1125 = vmatprep.mubr.f32.mxu0 0.0
    %1126 = vmatmul.mubr.f32.gmra.mrb[0].mxu0 %v958
    %v1127 = vpop.f32.mrb[0].mxu0
    %v1128 = vadd.f32 %v1039, %v1127
    %v1129 = vpop.f32.mrb[0].mxu0
    %1130 = vmatprep.mubr.f32.mxu0 0.0
    %1131 = vmatmul.mubr.f32.gmra.mrb[0].mxu0 %v959
    %v1132 = vpop.f32.mrb[0].mxu0
    %v1133 = vadd.f32 %v1039, %v1132
    %v1134 = vpop.f32.mrb[0].mxu0
    %1135 = vmatprep.mubr.f32.mxu0 0.0
    %1136 = vmatmul.mubr.f32.gmra.mrb[0].mxu0 %v960
    %v1137 = vpop.f32.mrb[0].mxu0
    %v1138 = vadd.f32 %v1039, %v1137
    %v1139 = vpop.f32.mrb[0].mxu0
    %1140 = vmatprep.mubr.f32.mxu0 0.0
    %1141 = vmatmul.mubr.f32.gmra.mrb[0].mxu0 %v961
    %v1142 = vpop.f32.mrb[0].mxu0
    %v1143 = vadd.f32 %v1039, %v1142
    %v1144 = vpop.f32.mrb[0].mxu0
    %1145 = vmatprep.mubr.f32.mxu0 0.0
    %1146 = vmatmul.mubr.f32.gmra.mrb[0].mxu0 %v962
    %v1147 = vpop.f32.mrb[0].mxu0
    %v1148 = vadd.f32 %v1039, %v1147
    %v1149 = vpop.f32.mrb[0].mxu0
    %1150 = vmatprep.mubr.f32.mxu0 0.0
    %1151 = vmatmul.mubr.f32.gmra.mrb[0].mxu0 %v963
    %v1152 = vpop.f32.mrb[0].mxu0
    %v1153 = vadd.f32 %v1039, %v1152
    %v1154 = vpop.f32.mrb[0].mxu0
    %1155 = vmatprep.mubr.f32.mxu0 0.0
    %1156 = vmatmul.mubr.f32.gmra.mrb[0].mxu0 %v964
    %v1157 = vpop.f32.mrb[0].mxu0
    %v1158 = vadd.f32 %v1039, %v1157
    %v1159 = vpop.f32.mrb[0].mxu0
    %1160 = vmatprep.mubr.f32.mxu0 0.0
    %1161 = vmatmul.mubr.f32.gmra.mrb[0].mxu0 %v965
    %v1162 = vpop.f32.mrb[0].mxu0
    %v1163 = vadd.f32 %v1039, %v1162
    %v1164 = vpop.f32.mrb[0].mxu0
    %1165 = vmatprep.mubr.f32.mxu0 0.0
    %1166 = vmatmul.mubr.f32.gmra.mrb[0].mxu0 %v966
    %v1167 = vpop.f32.mrb[0].mxu0
    %v1168 = vadd.f32 %v1039, %v1167
    %v1169 = vpop.f32.mrb[0].mxu0
    %1170 = vmatprep.mubr.f32.mxu0 0.0
    %1171 = vmatmul.mubr.f32.gmra.mrb[0].mxu0 %v967
    %v1172 = vpop.f32.mrb[0].mxu0
    %v1173 = vadd.f32 %v1039, %v1172
    %v1174 = vpop.f32.mrb[0].mxu0
    %1175 = vmatprep.mubr.f32.mxu0 0.0
    %1176 = vmatmul.mubr.f32.gmra.mrb[0].mxu0 %v968
    %v1177 = vpop.f32.mrb[0].mxu0
    %v1178 = vadd.f32 %v1039, %v1177
    %v1179 = vpop.f32.mrb[0].mxu0
    %1180 = vmatprep.mubr.f32.mxu0 0.0
    %1181 = vmatmul.mubr.f32.gmra.mrb[0].mxu0 %v969
    %v1182 = vpop.f32.mrb[0].mxu0
    %v1183 = vadd.f32 %v1039, %v1182
    %v1184 = vpop.f32.mrb[0].mxu0
    %1185 = vmatprep.mubr.f32.mxu0 0.0
    %1186 = vmatmul.mubr.f32.gmra.mrb[0].mxu0 %v970
    %v1187 = vpop.f32.mrb[0].mxu0
    %v1188 = vadd.f32 %v1039, %v1187
    %v1189 = vpop.f32.mrb[0].mxu0
    %1190 = vmatprep.mubr.f32.mxu0 0.0
    %1191 = vmatmul.mubr.f32.gmra.mrb[0].mxu0 %v971
    %v1192 = vpop.f32.mrb[0].mxu0
    %v1193 = vadd.f32 %v1039, %v1192
    %v1194 = vpop.f32.mrb[0].mxu0
    %1195 = vmatprep.mubr.f32.mxu0 0.0
    %1196 = vmatmul.mubr.f32.gmra.mrb[0].mxu0 %v972
    %v1197 = vpop.f32.mrb[0].mxu0
    %v1198 = vadd.f32 %v1039, %v1197
    %v1199 = vpop.f32.mrb[0].mxu0
    %1200 = vmatprep.mubr.f32.mxu0 0.0
    %1201 = vmatmul.mubr.f32.gmra.mrb[0].mxu0 %v973
    %v1202 = vpop.f32.mrb[0].mxu0
    %v1203 = vadd.f32 %v1039, %v1202
    %v1204 = vpop.f32.mrb[0].mxu0
    %1205 = vmatprep.mubr.f32.mxu0 0.0
    %1206 = vmatmul.mubr.f32.gmra.mrb[0].mxu0 %v974
    %v1207 = vpop.f32.mrb[0].mxu0
    %v1208 = vadd.f32 %v1039, %v1207
    %v1209 = vpop.f32.mrb[0].mxu0
    %1210 = vmatprep.mubr.f32.mxu0 0.0
    %1211 = vmatmul.mubr.f32.gmra.mrb[0].mxu0 %v975
    %v1212 = vpop.f32.mrb[0].mxu0
    %v1213 = vadd.f32 %v1039, %v1212
    %v1214 = vpop.f32.mrb[0].mxu0
    %1215 = vmatprep.mubr.f32.mxu0 0.0
    %1216 = vmatmul.mubr.f32.gmra.mrb[0].mxu0 %v976
    %v1217 = vpop.f32.mrb[0].mxu0
    %v1218 = vadd.f32 %v1039, %v1217
    %v1219 = vpop.f32.mrb[0].mxu0
    %1220 = vmatprep.mubr.f32.mxu0 0.0
    %1221 = vmatmul.mubr.f32.gmra.mrb[0].mxu0 %v977
    %v1222 = vpop.f32.mrb[0].mxu0
    %v1223 = vadd.f32 %v1039, %v1222
    %v1224 = vpop.f32.mrb[0].mxu0
    %1225 = vmatprep.mubr.f32.mxu0 0.0
    %1226 = vmatmul.mubr.f32.gmra.mrb[0].mxu0 %v978
    %v1227 = vpop.f32.mrb[0].mxu0
    %v1228 = vadd.f32 %v1039, %v1227
    %v1229 = vpop.f32.mrb[0].mxu0
    %1230 = vmatprep.mubr.f32.mxu0 0.0
    %1231 = vmatmul.mubr.f32.gmra.mrb[0].mxu0 %v979
    %v1232 = vpop.f32.mrb[0].mxu0
    %v1233 = vadd.f32 %v1039, %v1232
    %v1234 = vpop.f32.mrb[0].mxu0
    %1235 = vmatprep.mubr.f32.mxu0 0.0
    %1236 = vmatmul.mubr.f32.gmra.mrb[0].mxu0 %v980
    %v1237 = vpop.f32.mrb[0].mxu0
    %v1238 = vadd.f32 %v1039, %v1237
    %v1239 = vpop.f32.mrb[0].mxu0
    %1240 = vmatprep.mubr.f32.mxu0 0.0
    %1241 = vmatmul.mubr.f32.gmra.mrb[0].mxu0 %v981
    %v1242 = vpop.f32.mrb[0].mxu0
    %v1243 = vadd.f32 %v1039, %v1242
    %v1244 = vpop.f32.mrb[0].mxu0
    %1245 = vmatprep.mubr.f32.mxu0 0.0
    %1246 = vmatmul.mubr.f32.gmra.mrb[0].mxu0 %v982
    %v1247 = vpop.f32.mrb[0].mxu0
    %v1248 = vadd.f32 %v1039, %v1247
    %v1249 = vpop.f32.mrb[0].mxu0
    %1250 = vmatprep.mubr.f32.mxu0 0.0
    %1251 = vmatmul.mubr.f32.gmra.mrb[0].mxu0 %v983
    %v1252 = vpop.f32.mrb[0].mxu0
    %v1253 = vadd.f32 %v1039, %v1252
    %v1254 = vpop.f32.mrb[0].mxu0
    %1255 = vmatprep.mubr.f32.mxu0 0.0
    %1256 = vmatmul.mubr.f32.gmra.mrb[0].mxu0 %v984
    %v1257 = vpop.f32.mrb[0].mxu0
    %v1258 = vadd.f32 %v1039, %v1257
    %v1259 = vpop.f32.mrb[0].mxu0
    %1260 = vmatprep.mubr.f32.mxu0 0.0
    %1261 = vmatmul.mubr.f32.gmra.mrb[0].mxu0 %v985
    %v1262 = vpop.f32.mrb[0].mxu0
    %v1263 = vadd.f32 %v1039, %v1262
    %v1264 = vpop.f32.mrb[0].mxu0
    %1265 = vmatprep.mubr.f32.mxu0 0.0
    %1266 = vmatmul.mubr.f32.gmra.mrb[0].mxu0 %v986
    %v1267 = vpop.f32.mrb[0].mxu0
    %v1268 = vadd.f32 %v1039, %v1267
    %v1269 = vpop.f32.mrb[0].mxu0
    %1270 = vmatprep.mubr.f32.mxu0 0.0
    %1271 = vmatmul.mubr.f32.gmra.mrb[0].mxu0 %v987
    %v1272 = vpop.f32.mrb[0].mxu0
    %v1273 = vadd.f32 %v1039, %v1272
    %v1274 = vpop.f32.mrb[0].mxu0
    %1275 = vmatprep.mubr.f32.mxu0 0.0
    %1276 = vmatmul.mubr.f32.gmra.mrb[0].mxu0 %v988
    %v1277 = vpop.f32.mrb[0].mxu0
    %v1278 = vadd.f32 %v1039, %v1277
    %v1279 = vpop.f32.mrb[0].mxu0
    %1280 = vmatprep.mubr.f32.mxu0 0.0
    %1281 = vmatmul.mubr.f32.gmra.mrb[0].mxu0 %v989
    %v1282 = vpop.f32.mrb[0].mxu0
    %v1283 = vadd.f32 %v1039, %v1282
    %v1284 = vpop.f32.mrb[0].mxu0
    %1285 = vmatprep.mubr.f32.mxu0 0.0
    %1286 = vmatmul.mubr.f32.gmra.mrb[0].mxu0 %v990
    %v1287 = vpop.f32.mrb[0].mxu0
    %v1288 = vadd.f32 %v1039, %v1287
    %v1289 = vpop.f32.mrb[0].mxu0
    %1290 = vmatprep.mubr.f32.mxu0 0.0
    %1291 = vmatmul.mubr.f32.gmra.mrb[0].mxu0 %v991
    %v1292 = vpop.f32.mrb[0].mxu0
    %v1293 = vadd.f32 %v1039, %v1292
    %v1294 = vpop.f32.mrb[0].mxu0
    %1295 = vmatprep.mubr.f32.mxu0 0.0
    %1296 = vmatmul.mubr.f32.gmra.mrb[0].mxu0 %v992
    %v1297 = vpop.f32.mrb[0].mxu0
    %v1298 = vadd.f32 %v1039, %v1297
    %v1299 = vpop.f32.mrb[0].mxu0
    %1300 = vmatprep.mubr.f32.mxu0 0.0
    %1301 = vmatmul.mubr.f32.gmra.mrb[0].mxu0 %v993
    %v1302 = vpop.f32.mrb[0].mxu0
    %v1303 = vadd.f32 %v1039, %v1302
    %v1304 = vpop.f32.mrb[0].mxu0
    %1305 = vmatprep.mubr.f32.mxu0 0.0
    %1306 = vmatmul.mubr.f32.gmra.mrb[0].mxu0 %v994
    %v1307 = vpop.f32.mrb[0].mxu0
    %v1308 = vadd.f32 %v1039, %v1307
    %v1309 = vpop.f32.mrb[0].mxu0
    %1310 = vmatprep.mubr.f32.mxu0 0.0
    %1311 = vmatmul.mubr.f32.gmra.mrb[0].mxu0 %v995
    %v1312 = vpop.f32.mrb[0].mxu0
    %v1313 = vadd.f32 %v1039, %v1312
    %v1314 = vpop.f32.mrb[0].mxu0
    %1315 = vmatprep.mubr.f32.mxu0 0.0
    %1316 = vmatmul.mubr.f32.gmra.mrb[0].mxu0 %v996
    %v1317 = vpop.f32.mrb[0].mxu0
    %v1318 = vadd.f32 %v1039, %v1317
    %v1319 = vpop.f32.mrb[0].mxu0
    %1320 = vmatprep.mubr.f32.mxu0 0.0
    %1321 = vmatmul.mubr.f32.gmra.mrb[0].mxu0 %v997
    %v1322 = vpop.f32.mrb[0].mxu0
    %v1323 = vadd.f32 %v1039, %v1322
    %v1324 = vpop.f32.mrb[0].mxu0
    %1325 = vmatprep.mubr.f32.mxu0 0.0
    %1326 = vmatmul.mubr.f32.gmra.mrb[0].mxu0 %v998
    %v1327 = vpop.f32.mrb[0].mxu0
    %v1328 = vadd.f32 %v1039, %v1327
    %v1329 = vpop.f32.mrb[0].mxu0
    %1330 = vmatprep.mubr.f32.mxu0 0.0
    %1331 = vmatmul.mubr.f32.gmra.mrb[0].mxu0 %v999
    %v1332 = vpop.f32.mrb[0].mxu0
    %v1333 = vadd.f32 %v1039, %v1332
    %v1334 = vpop.f32.mrb[0].mxu0
    %1335 = vmatprep.mubr.f32.mxu0 0.0
    %1336 = vmatmul.mubr.f32.gmra.mrb[0].mxu0 %v1000
    %v1337 = vpop.f32.mrb[0].mxu0
    %v1338 = vadd.f32 %v1039, %v1337
    %v1339 = vpop.f32.mrb[0].mxu0
    %1340 = vmatprep.mubr.f32.mxu0 0.0
    %1341 = vmatmul.mubr.f32.gmra.mrb[0].mxu0 %v1001
    %v1342 = vpop.f32.mrb[0].mxu0
    %v1343 = vadd.f32 %v1039, %v1342
    %v1344 = vpop.f32.mrb[0].mxu0
    %1345 = vmatprep.mubr.f32.mxu0 0.0
    %1346 = vmatmul.mubr.f32.gmra.mrb[0].mxu0 %v1002
    %v1347 = vpop.f32.mrb[0].mxu0
    %v1348 = vadd.f32 %v1039, %v1347
    %v1349 = vpop.f32.mrb[0].mxu0
    %1350 = vmatprep.mubr.f32.mxu0 0.0
    %1351 = vmatmul.mubr.f32.gmra.mrb[0].mxu0 %v1003
    %v1352 = vpop.f32.mrb[0].mxu0
    %v1353 = vadd.f32 %v1039, %v1352
    %v1354 = vpop.f32.mrb[0].mxu0
    %1355 = vmatprep.mubr.f32.mxu0 0.0
    %1356 = vmatmul.mubr.f32.gmra.mrb[0].mxu0 %v1004
    %v1357 = vpop.f32.mrb[0].mxu0
    %v1358 = vadd.f32 %v1039, %v1357
    %v1359 = vpop.f32.mrb[0].mxu0
    %1360 = vmatprep.mubr.f32.mxu0 0.0
    %1361 = vmatmul.mubr.f32.gmra.mrb[0].mxu0 %v1005
    %v1362 = vpop.f32.mrb[0].mxu0
    %v1363 = vadd.f32 %v1039, %v1362
    %v1364 = vpop.f32.mrb[0].mxu0
    %1365 = vmatprep.mubr.f32.mxu0 0.0
    %1366 = vmatmul.mubr.f32.gmra.mrb[0].mxu0 %v1006
    %v1367 = vpop.f32.mrb[0].mxu0
    %v1368 = vadd.f32 %v1039, %v1367
    %v1369 = vpop.f32.mrb[0].mxu0
    %1370 = vmatprep.mubr.f32.mxu0 0.0
    %1371 = vmatmul.mubr.f32.gmra.mrb[0].mxu0 %v1007
    %v1372 = vpop.f32.mrb[0].mxu0
    %v1373 = vadd.f32 %v1039, %v1372
    %v1374 = vpop.f32.mrb[0].mxu0
    %1375 = vmatprep.mubr.f32.mxu0 0.0
    %1376 = vmatmul.mubr.f32.gmra.mrb[0].mxu0 %v1008
    %v1377 = vpop.f32.mrb[0].mxu0
    %v1378 = vadd.f32 %v1039, %v1377
    %v1379 = vpop.f32.mrb[0].mxu0
    %1380 = vmatprep.mubr.f32.mxu0 0.0
    %1381 = vmatmul.mubr.f32.gmra.mrb[0].mxu0 %v1009
    %v1382 = vpop.f32.mrb[0].mxu0
    %v1383 = vadd.f32 %v1039, %v1382
    %v1384 = vpop.f32.mrb[0].mxu0
    %1385 = vmatprep.mubr.f32.mxu0 0.0
    %1386 = vmatmul.mubr.f32.gmra.mrb[0].mxu0 %v1010
    %v1387 = vpop.f32.mrb[0].mxu0
    %v1388 = vadd.f32 %v1039, %v1387
    %v1389 = vpop.f32.mrb[0].mxu0
    %1390 = vmatprep.mubr.f32.mxu0 0.0
    %1391 = vmatmul.mubr.f32.gmra.mrb[0].mxu0 %v1011
    %v1392 = vpop.f32.mrb[0].mxu0
    %v1393 = vadd.f32 %v1039, %v1392
    %v1394 = vpop.f32.mrb[0].mxu0
    %1395 = vmatprep.mubr.f32.mxu0 0.0
    %1396 = vmatmul.mubr.f32.gmra.mrb[0].mxu0 %v1012
    %v1397 = vpop.f32.mrb[0].mxu0
    %v1398 = vadd.f32 %v1039, %v1397
    %v1399 = vpop.f32.mrb[0].mxu0
    %1400 = vmatprep.mubr.f32.mxu0 0.0
    %1401 = vmatmul.mubr.f32.gmra.mrb[0].mxu0 %v1013
    %v1402 = vpop.f32.mrb[0].mxu0
    %v1403 = vadd.f32 %v1039, %v1402
    %v1404 = vpop.f32.mrb[0].mxu0
    %1405 = vmatprep.mubr.f32.mxu0 0.0
    %1406 = vmatmul.mubr.f32.gmra.mrb[0].mxu0 %v1014
    %v1407 = vpop.f32.mrb[0].mxu0
    %v1408 = vadd.f32 %v1039, %v1407
    %v1409 = vpop.f32.mrb[0].mxu0
    %1410 = vmatprep.mubr.f32.mxu0 0.0
    %1411 = vmatmul.mubr.f32.gmra.mrb[0].mxu0 %v1015
    %v1412 = vpop.f32.mrb[0].mxu0
    %v1413 = vadd.f32 %v1039, %v1412
    %v1414 = vpop.f32.mrb[0].mxu0
    %1415 = vmatprep.mubr.f32.mxu0 0.0
    %1416 = vmatmul.mubr.f32.gmra.mrb[0].mxu0 %v1016
    %v1417 = vpop.f32.mrb[0].mxu0
    %v1418 = vadd.f32 %v1039, %v1417
    %v1419 = vpop.f32.mrb[0].mxu0
    %1420 = vmatprep.mubr.f32.mxu0 0.0
    %1421 = vmatmul.mubr.f32.gmra.mrb[0].mxu0 %v1017
    %v1422 = vpop.f32.mrb[0].mxu0
    %v1423 = vadd.f32 %v1039, %v1422
    %v1424 = vpop.f32.mrb[0].mxu0
    %1425 = vdwg.mxu0
    %v1426 = vmul.f32 %v1108, 0.5
    %v1427 = vmul.f32 %v1113, 0.5
    %v1428 = vmul.f32 %v1118, 0.5
    %v1429 = vmul.f32 %v1123, 0.5
    %v1430 = vmul.f32 %v1128, 0.5
    %v1431 = vmul.f32 %v1133, 0.5
    %v1432 = vmul.f32 %v1138, 0.5
    %v1433 = vmul.f32 %v1143, 0.5
    %v1434 = vmul.f32 %v1148, 0.5
    %v1435 = vmul.f32 %v1153, 0.5
    %v1436 = vmul.f32 %v1158, 0.5
    %v1437 = vmul.f32 %v1163, 0.5
    %v1438 = vmul.f32 %v1168, 0.5
    %v1439 = vmul.f32 %v1173, 0.5
    %v1440 = vmul.f32 %v1178, 0.5
    %v1441 = vmul.f32 %v1183, 0.5
    %v1442 = vmul.f32 %v1188, 0.5
    %v1443 = vmul.f32 %v1193, 0.5
    %v1444 = vmul.f32 %v1198, 0.5
    %v1445 = vmul.f32 %v1203, 0.5
    %v1446 = vmul.f32 %v1208, 0.5
    %v1447 = vmul.f32 %v1213, 0.5
    %v1448 = vmul.f32 %v1218, 0.5
    %v1449 = vmul.f32 %v1223, 0.5
    %v1450 = vmul.f32 %v1228, 0.5
    %v1451 = vmul.f32 %v1233, 0.5
    %v1452 = vmul.f32 %v1238, 0.5
    %v1453 = vmul.f32 %v1243, 0.5
    %v1454 = vmul.f32 %v1248, 0.5
    %v1455 = vmul.f32 %v1253, 0.5
    %v1456 = vmul.f32 %v1258, 0.5
    %v1457 = vmul.f32 %v1263, 0.5
    %v1458 = vmul.f32 %v1268, 0.5
    %v1459 = vmul.f32 %v1273, 0.5
    %v1460 = vmul.f32 %v1278, 0.5
    %v1461 = vmul.f32 %v1283, 0.5
    %v1462 = vmul.f32 %v1288, 0.5
    %v1463 = vmul.f32 %v1293, 0.5
    %v1464 = vmul.f32 %v1298, 0.5
    %v1465 = vmul.f32 %v1303, 0.5
    %v1466 = vmul.f32 %v1308, 0.5
    %v1467 = vmul.f32 %v1313, 0.5
    %v1468 = vmul.f32 %v1318, 0.5
    %v1469 = vmul.f32 %v1323, 0.5
    %v1470 = vmul.f32 %v1328, 0.5
    %v1471 = vmul.f32 %v1333, 0.5
    %v1472 = vmul.f32 %v1338, 0.5
    %v1473 = vmul.f32 %v1343, 0.5
    %v1474 = vmul.f32 %v1348, 0.5
    %v1475 = vmul.f32 %v1353, 0.5
    %v1476 = vmul.f32 %v1358, 0.5
    %v1477 = vmul.f32 %v1363, 0.5
    %v1478 = vmul.f32 %v1368, 0.5
    %v1479 = vmul.f32 %v1373, 0.5
    %v1480 = vmul.f32 %v1378, 0.5
    %v1481 = vmul.f32 %v1383, 0.5
    %v1482 = vmul.f32 %v1388, 0.5
    %v1483 = vmul.f32 %v1393, 0.5
    %v1484 = vmul.f32 %v1398, 0.5
    %v1485 = vmul.f32 %v1403, 0.5
    %v1486 = vmul.f32 %v1408, 0.5
    %v1487 = vmul.f32 %v1413, 0.5
    %v1488 = vmul.f32 %v1418, 0.5
    %v1489 = vmul.f32 %v1423, 0.5
    %v1490 = vtanh.pop %v1426
    %v1491 = vtanh.pop %v1427
    %v1492 = vtanh.pop %v1428
    %v1493 = vtanh.pop %v1429
    %v1494 = vtanh.pop %v1430
    %v1495 = vtanh.pop %v1431
    %v1496 = vtanh.pop %v1432
    %v1497 = vtanh.pop %v1433
    %v1498 = vtanh.pop %v1434
    %v1499 = vtanh.pop %v1435
    %v1500 = vtanh.pop %v1436
    %v1501 = vtanh.pop %v1437
    %v1502 = vtanh.pop %v1438
    %v1503 = vtanh.pop %v1439
    %v1504 = vtanh.pop %v1440
    %v1505 = vtanh.pop %v1441
    %v1506 = vtanh.pop %v1442
    %v1507 = vtanh.pop %v1443
    %v1508 = vtanh.pop %v1444
    %v1509 = vtanh.pop %v1445
    %v1510 = vtanh.pop %v1446
    %v1511 = vtanh.pop %v1447
    %v1512 = vtanh.pop %v1448
    %v1513 = vtanh.pop %v1449
    %v1514 = vtanh.pop %v1450
    %v1515 = vtanh.pop %v1451
    %v1516 = vtanh.pop %v1452
    %v1517 = vtanh.pop %v1453
    %v1518 = vtanh.pop %v1454
    %v1519 = vtanh.pop %v1455
    %v1520 = vtanh.pop %v1456
    %v1521 = vtanh.pop %v1457
    %v1522 = vtanh.pop %v1458
    %v1523 = vtanh.pop %v1459
    %v1524 = vtanh.pop %v1460
    %v1525 = vtanh.pop %v1461
    %v1526 = vtanh.pop %v1462
    %v1527 = vtanh.pop %v1463
    %v1528 = vtanh.pop %v1464
    %v1529 = vtanh.pop %v1465
    %v1530 = vtanh.pop %v1466
    %v1531 = vtanh.pop %v1467
    %v1532 = vtanh.pop %v1468
    %v1533 = vtanh.pop %v1469
    %v1534 = vtanh.pop %v1470
    %v1535 = vtanh.pop %v1471
    %v1536 = vtanh.pop %v1472
    %v1537 = vtanh.pop %v1473
    %v1538 = vtanh.pop %v1474
    %v1539 = vtanh.pop %v1475
    %v1540 = vtanh.pop %v1476
    %v1541 = vtanh.pop %v1477
    %v1542 = vtanh.pop %v1478
    %v1543 = vtanh.pop %v1479
    %v1544 = vtanh.pop %v1480
    %v1545 = vtanh.pop %v1481
    %v1546 = vtanh.pop %v1482
    %v1547 = vtanh.pop %v1483
    %v1548 = vtanh.pop %v1484
    %v1549 = vtanh.pop %v1485
    %v1550 = vtanh.pop %v1486
    %v1551 = vtanh.pop %v1487
    %v1552 = vtanh.pop %v1488
    %v1553 = vtanh.pop %v1489
    %v1554 = vadd.f32 %v1490, 1.0
    %v1555 = vadd.f32 %v1491, 1.0
    %v1556 = vadd.f32 %v1492, 1.0
    %v1557 = vadd.f32 %v1493, 1.0
    %v1558 = vadd.f32 %v1494, 1.0
    %v1559 = vadd.f32 %v1495, 1.0
    %v1560 = vadd.f32 %v1496, 1.0
    %v1561 = vadd.f32 %v1497, 1.0
    %v1562 = vadd.f32 %v1498, 1.0
    %v1563 = vadd.f32 %v1499, 1.0
    %v1564 = vadd.f32 %v1500, 1.0
    %v1565 = vadd.f32 %v1501, 1.0
    %v1566 = vadd.f32 %v1502, 1.0
    %v1567 = vadd.f32 %v1503, 1.0
    %v1568 = vadd.f32 %v1504, 1.0
    %v1569 = vadd.f32 %v1505, 1.0
    %v1570 = vadd.f32 %v1506, 1.0
    %v1571 = vadd.f32 %v1507, 1.0
    %v1572 = vadd.f32 %v1508, 1.0
    %v1573 = vadd.f32 %v1509, 1.0
    %v1574 = vadd.f32 %v1510, 1.0
    %v1575 = vadd.f32 %v1511, 1.0
    %v1576 = vadd.f32 %v1512, 1.0
    %v1577 = vadd.f32 %v1513, 1.0
    %v1578 = vadd.f32 %v1514, 1.0
    %v1579 = vadd.f32 %v1515, 1.0
    %v1580 = vadd.f32 %v1516, 1.0
    %v1581 = vadd.f32 %v1517, 1.0
    %v1582 = vadd.f32 %v1518, 1.0
    %v1583 = vadd.f32 %v1519, 1.0
    %v1584 = vadd.f32 %v1520, 1.0
    %v1585 = vadd.f32 %v1521, 1.0
    %v1586 = vadd.f32 %v1522, 1.0
    %v1587 = vadd.f32 %v1523, 1.0
    %v1588 = vadd.f32 %v1524, 1.0
    %v1589 = vadd.f32 %v1525, 1.0
    %v1590 = vadd.f32 %v1526, 1.0
    %v1591 = vadd.f32 %v1527, 1.0
    %v1592 = vadd.f32 %v1528, 1.0
    %v1593 = vadd.f32 %v1529, 1.0
    %v1594 = vadd.f32 %v1530, 1.0
    %v1595 = vadd.f32 %v1531, 1.0
    %v1596 = vadd.f32 %v1532, 1.0
    %v1597 = vadd.f32 %v1533, 1.0
    %v1598 = vadd.f32 %v1534, 1.0
    %v1599 = vadd.f32 %v1535, 1.0
    %v1600 = vadd.f32 %v1536, 1.0
    %v1601 = vadd.f32 %v1537, 1.0
    %v1602 = vadd.f32 %v1538, 1.0
    %v1603 = vadd.f32 %v1539, 1.0
    %v1604 = vadd.f32 %v1540, 1.0
    %v1605 = vadd.f32 %v1541, 1.0
    %v1606 = vadd.f32 %v1542, 1.0
    %v1607 = vadd.f32 %v1543, 1.0
    %v1608 = vadd.f32 %v1544, 1.0
    %v1609 = vadd.f32 %v1545, 1.0
    %v1610 = vadd.f32 %v1546, 1.0
    %v1611 = vadd.f32 %v1547, 1.0
    %v1612 = vadd.f32 %v1548, 1.0
    %v1613 = vadd.f32 %v1549, 1.0
    %v1614 = vadd.f32 %v1550, 1.0
    %v1615 = vadd.f32 %v1551, 1.0
    %v1616 = vadd.f32 %v1552, 1.0
    %v1617 = vadd.f32 %v1553, 1.0
    %v1618 = vmul.f32 %v1554, 0.5
    %v1619 = vmul.f32 %v1555, 0.5
    %v1620 = vmul.f32 %v1556, 0.5
    %v1621 = vmul.f32 %v1557, 0.5
    %v1622 = vmul.f32 %v1558, 0.5
    %v1623 = vmul.f32 %v1559, 0.5
    %v1624 = vmul.f32 %v1560, 0.5
    %v1625 = vmul.f32 %v1561, 0.5
    %v1626 = vmul.f32 %v1562, 0.5
    %v1627 = vmul.f32 %v1563, 0.5
    %v1628 = vmul.f32 %v1564, 0.5
    %v1629 = vmul.f32 %v1565, 0.5
    %v1630 = vmul.f32 %v1566, 0.5
    %v1631 = vmul.f32 %v1567, 0.5
    %v1632 = vmul.f32 %v1568, 0.5
    %v1633 = vmul.f32 %v1569, 0.5
    %v1634 = vmul.f32 %v1570, 0.5
    %v1635 = vmul.f32 %v1571, 0.5
    %v1636 = vmul.f32 %v1572, 0.5
    %v1637 = vmul.f32 %v1573, 0.5
    %v1638 = vmul.f32 %v1574, 0.5
    %v1639 = vmul.f32 %v1575, 0.5
    %v1640 = vmul.f32 %v1576, 0.5
    %v1641 = vmul.f32 %v1577, 0.5
    %v1642 = vmul.f32 %v1578, 0.5
    %v1643 = vmul.f32 %v1579, 0.5
    %v1644 = vmul.f32 %v1580, 0.5
    %v1645 = vmul.f32 %v1581, 0.5
    %v1646 = vmul.f32 %v1582, 0.5
    %v1647 = vmul.f32 %v1583, 0.5
    %v1648 = vmul.f32 %v1584, 0.5
    %v1649 = vmul.f32 %v1585, 0.5
    %v1650 = vmul.f32 %v1586, 0.5
    %v1651 = vmul.f32 %v1587, 0.5
    %v1652 = vmul.f32 %v1588, 0.5
    %v1653 = vmul.f32 %v1589, 0.5
    %v1654 = vmul.f32 %v1590, 0.5
    %v1655 = vmul.f32 %v1591, 0.5
    %v1656 = vmul.f32 %v1592, 0.5
    %v1657 = vmul.f32 %v1593, 0.5
    %v1658 = vmul.f32 %v1594, 0.5
    %v1659 = vmul.f32 %v1595, 0.5
    %v1660 = vmul.f32 %v1596, 0.5
    %v1661 = vmul.f32 %v1597, 0.5
    %v1662 = vmul.f32 %v1598, 0.5
    %v1663 = vmul.f32 %v1599, 0.5
    %v1664 = vmul.f32 %v1600, 0.5
    %v1665 = vmul.f32 %v1601, 0.5
    %v1666 = vmul.f32 %v1602, 0.5
    %v1667 = vmul.f32 %v1603, 0.5
    %v1668 = vmul.f32 %v1604, 0.5
    %v1669 = vmul.f32 %v1605, 0.5
    %v1670 = vmul.f32 %v1606, 0.5
    %v1671 = vmul.f32 %v1607, 0.5
    %v1672 = vmul.f32 %v1608, 0.5
    %v1673 = vmul.f32 %v1609, 0.5
    %v1674 = vmul.f32 %v1610, 0.5
    %v1675 = vmul.f32 %v1611, 0.5
    %v1676 = vmul.f32 %v1612, 0.5
    %v1677 = vmul.f32 %v1613, 0.5
    %v1678 = vmul.f32 %v1614, 0.5
    %v1679 = vmul.f32 %v1615, 0.5
    %v1680 = vmul.f32 %v1616, 0.5
    %v1681 = vmul.f32 %v1617, 0.5
    %v1682 = vmul.f32 %v1108, %v1618
    %v1683 = vmul.f32 %v1113, %v1619
    %v1684 = vmul.f32 %v1118, %v1620
    %v1685 = vmul.f32 %v1123, %v1621
    %v1686 = vmul.f32 %v1128, %v1622
    %v1687 = vmul.f32 %v1133, %v1623
    %v1688 = vmul.f32 %v1138, %v1624
    %v1689 = vmul.f32 %v1143, %v1625
    %v1690 = vmul.f32 %v1148, %v1626
    %v1691 = vmul.f32 %v1153, %v1627
    %v1692 = vmul.f32 %v1158, %v1628
    %v1693 = vmul.f32 %v1163, %v1629
    %v1694 = vmul.f32 %v1168, %v1630
    %v1695 = vmul.f32 %v1173, %v1631
    %v1696 = vmul.f32 %v1178, %v1632
    %v1697 = vmul.f32 %v1183, %v1633
    %v1698 = vmul.f32 %v1188, %v1634
    %v1699 = vmul.f32 %v1193, %v1635
    %v1700 = vmul.f32 %v1198, %v1636
    %v1701 = vmul.f32 %v1203, %v1637
    %v1702 = vmul.f32 %v1208, %v1638
    %v1703 = vmul.f32 %v1213, %v1639
    %v1704 = vmul.f32 %v1218, %v1640
    %v1705 = vmul.f32 %v1223, %v1641
    %v1706 = vmul.f32 %v1228, %v1642
    %v1707 = vmul.f32 %v1233, %v1643
    %v1708 = vmul.f32 %v1238, %v1644
    %v1709 = vmul.f32 %v1243, %v1645
    %v1710 = vmul.f32 %v1248, %v1646
    %v1711 = vmul.f32 %v1253, %v1647
    %v1712 = vmul.f32 %v1258, %v1648
    %v1713 = vmul.f32 %v1263, %v1649
    %v1714 = vmul.f32 %v1268, %v1650
    %v1715 = vmul.f32 %v1273, %v1651
    %v1716 = vmul.f32 %v1278, %v1652
    %v1717 = vmul.f32 %v1283, %v1653
    %v1718 = vmul.f32 %v1288, %v1654
    %v1719 = vmul.f32 %v1293, %v1655
    %v1720 = vmul.f32 %v1298, %v1656
    %v1721 = vmul.f32 %v1303, %v1657
    %v1722 = vmul.f32 %v1308, %v1658
    %v1723 = vmul.f32 %v1313, %v1659
    %v1724 = vmul.f32 %v1318, %v1660
    %v1725 = vmul.f32 %v1323, %v1661
    %v1726 = vmul.f32 %v1328, %v1662
    %v1727 = vmul.f32 %v1333, %v1663
    %v1728 = vmul.f32 %v1338, %v1664
    %v1729 = vmul.f32 %v1343, %v1665
    %v1730 = vmul.f32 %v1348, %v1666
    %v1731 = vmul.f32 %v1353, %v1667
    %v1732 = vmul.f32 %v1358, %v1668
    %v1733 = vmul.f32 %v1363, %v1669
    %v1734 = vmul.f32 %v1368, %v1670
    %v1735 = vmul.f32 %v1373, %v1671
    %v1736 = vmul.f32 %v1378, %v1672
    %v1737 = vmul.f32 %v1383, %v1673
    %v1738 = vmul.f32 %v1388, %v1674
    %v1739 = vmul.f32 %v1393, %v1675
    %v1740 = vmul.f32 %v1398, %v1676
    %v1741 = vmul.f32 %v1403, %v1677
    %v1742 = vmul.f32 %v1408, %v1678
    %v1743 = vmul.f32 %v1413, %v1679
    %v1744 = vmul.f32 %v1418, %v1680
    %v1745 = vmul.f32 %v1423, %v1681
    %s1746 = scalar_lea.vmem [#allocation3], 128
    %v1747 = vld [vmem:[%s1746] sm:$0xff]
    %v1748 = vld [vmem:[%s1746 + $0x8] sm:$0xff]
    %v1749 = vld [vmem:[%s1746 + $0x10] sm:$0xff]
    %v1750 = vld [vmem:[%s1746 + $0x18] sm:$0xff]
    %v1751 = vld [vmem:[%s1746 + $0x20] sm:$0xff]
    %v1752 = vld [vmem:[%s1746 + $0x28] sm:$0xff]
    %v1753 = vld [vmem:[%s1746 + $0x30] sm:$0xff]
    %v1754 = vld [vmem:[%s1746 + $0x38] sm:$0xff]
    %v1755 = vld [vmem:[%s1746 + $0x40] sm:$0xff]
    %v1756 = vld [vmem:[%s1746 + $0x48] sm:$0xff]
    %v1757 = vld [vmem:[%s1746 + $0x50] sm:$0xff]
    %v1758 = vld [vmem:[%s1746 + $0x58] sm:$0xff]
    %v1759 = vld [vmem:[%s1746 + $0x60] sm:$0xff]
    %v1760 = vld [vmem:[%s1746 + $0x68] sm:$0xff]
    %v1761 = vld [vmem:[%s1746 + $0x70] sm:$0xff]
    %v1762 = vld [vmem:[%s1746 + $0x78] sm:$0xff]
    %s1763 = scalar_lea.vmem %s5, 1
    %v1764 = vld [vmem:[%s1763] sm:$0x1]
    %v1766 = vlaneseq
    %v1767 = vshrl.u32 %v1766, 7
    %v1768 = vsub.s32 0, %v1767
    %v1769 = vrot.slane %v1764, %v1768
    %1771 = vmatprep.subr.mxu0 0.0
    %1772 = vmatpush1.msra.mxu0 %v1747
    %1773 = vmatprep.subr.mxu0 0.0
    %1774 = vmatpush1.msra.mxu0 %v1748
    %1775 = vmatprep.subr.mxu0 0.0
    %1776 = vmatpush1.msra.mxu0 %v1749
    %1777 = vmatprep.subr.mxu0 0.0
    %1778 = vmatpush1.msra.mxu0 %v1750
    %1779 = vmatprep.subr.mxu0 0.0
    %1780 = vmatpush1.msra.mxu0 %v1751
    %1781 = vmatprep.subr.mxu0 0.0
    %1782 = vmatpush1.msra.mxu0 %v1752
    %1783 = vmatprep.subr.mxu0 0.0
    %1784 = vmatpush1.msra.mxu0 %v1753
    %1785 = vmatprep.subr.mxu0 0.0
    %1786 = vmatpush1.msra.mxu0 %v1754
    %1787 = vmatprep.subr.mxu0 0.0
    %1788 = vmatpush1.msra.mxu0 %v1755
    %1789 = vmatprep.subr.mxu0 0.0
    %1790 = vmatpush1.msra.mxu0 %v1756
    %1791 = vmatprep.subr.mxu0 0.0
    %1792 = vmatpush1.msra.mxu0 %v1757
    %1793 = vmatprep.subr.mxu0 0.0
    %1794 = vmatpush1.msra.mxu0 %v1758
    %1795 = vmatprep.subr.mxu0 0.0
    %1796 = vmatpush1.msra.mxu0 %v1759
    %1797 = vmatprep.subr.mxu0 0.0
    %1798 = vmatpush1.msra.mxu0 %v1760
    %1799 = vmatprep.subr.mxu0 0.0
    %1800 = vmatpush1.msra.mxu0 %v1761
    %1801 = vmatprep.subr.mxu0 0.0
    %1802 = vmatpush1.msra.mxu0 %v1762
    %1803 = vmatprep.subr.mxu0 0.0
    %1804 = vmatpush1.msra.mxu0 0.0
    %1805 = vmatprep.subr.mxu0 0.0
    %1806 = vmatpush1.msra.mxu0 0.0
    %1807 = vmatprep.subr.mxu0 0.0
    %1808 = vmatpush1.msra.mxu0 0.0
    %1809 = vmatprep.subr.mxu0 0.0
    %1810 = vmatpush1.msra.mxu0 0.0
    %1811 = vmatprep.subr.mxu0 0.0
    %1812 = vmatpush1.msra.mxu0 0.0
    %1813 = vmatprep.subr.mxu0 0.0
    %1814 = vmatpush1.msra.mxu0 0.0
    %1815 = vmatprep.subr.mxu0 0.0
    %1816 = vmatpush1.msra.mxu0 0.0
    %1817 = vmatprep.subr.mxu0 0.0
    %1818 = vmatpush1.msra.mxu0 0.0
    %1819 = vmatprep.subr.mxu0 0.0
    %1820 = vmatpush1.msra.mxu0 0.0
    %1821 = vmatprep.subr.mxu0 0.0
    %1822 = vmatpush1.msra.mxu0 0.0
    %1823 = vmatprep.subr.mxu0 0.0
    %1824 = vmatpush1.msra.mxu0 0.0
    %1825 = vmatprep.subr.mxu0 0.0
    %1826 = vmatpush1.msra.mxu0 0.0
    %1827 = vmatprep.subr.mxu0 0.0
    %1828 = vmatpush1.msra.mxu0 0.0
    %1829 = vmatprep.subr.mxu0 0.0
    %1830 = vmatpush1.msra.mxu0 0.0
    %1831 = vmatprep.subr.mxu0 0.0
    %1832 = vmatpush1.msra.mxu0 0.0
    %1833 = vmatprep.subr.mxu0 0.0
    %1834 = vmatpush1.msra.mxu0 0.0
    %1835 = vmatprep.mubr.f32.mxu0 0.0
    %1836 = vmatmul.mubr.f32.gmra.mrb[0].mxu0 %v1682
    %v1837 = vpop.f32.mrb[0].mxu0
    %v1838 = vadd.f32 %v1769, %v1837
    %v1839 = vpop.f32.mrb[0].mxu0
    %1840 = vmatprep.mubr.f32.mxu0 0.0
    %1841 = vmatmul.mubr.f32.gmra.mrb[0].mxu0 %v1683
    %v1842 = vpop.f32.mrb[0].mxu0
    %v1843 = vadd.f32 %v1769, %v1842
    %v1844 = vpop.f32.mrb[0].mxu0
    %1845 = vmatprep.mubr.f32.mxu0 0.0
    %1846 = vmatmul.mubr.f32.gmra.mrb[0].mxu0 %v1684
    %v1847 = vpop.f32.mrb[0].mxu0
    %v1848 = vadd.f32 %v1769, %v1847
    %v1849 = vpop.f32.mrb[0].mxu0
    %1850 = vmatprep.mubr.f32.mxu0 0.0
    %1851 = vmatmul.mubr.f32.gmra.mrb[0].mxu0 %v1685
    %v1852 = vpop.f32.mrb[0].mxu0
    %v1853 = vadd.f32 %v1769, %v1852
    %v1854 = vpop.f32.mrb[0].mxu0
    %1855 = vmatprep.mubr.f32.mxu0 0.0
    %1856 = vmatmul.mubr.f32.gmra.mrb[0].mxu0 %v1686
    %v1857 = vpop.f32.mrb[0].mxu0
    %v1858 = vadd.f32 %v1769, %v1857
    %v1859 = vpop.f32.mrb[0].mxu0
    %1860 = vmatprep.mubr.f32.mxu0 0.0
    %1861 = vmatmul.mubr.f32.gmra.mrb[0].mxu0 %v1687
    %v1862 = vpop.f32.mrb[0].mxu0
    %v1863 = vadd.f32 %v1769, %v1862
    %v1864 = vpop.f32.mrb[0].mxu0
    %1865 = vmatprep.mubr.f32.mxu0 0.0
    %1866 = vmatmul.mubr.f32.gmra.mrb[0].mxu0 %v1688
    %v1867 = vpop.f32.mrb[0].mxu0
    %v1868 = vadd.f32 %v1769, %v1867
    %v1869 = vpop.f32.mrb[0].mxu0
    %1870 = vmatprep.mubr.f32.mxu0 0.0
    %1871 = vmatmul.mubr.f32.gmra.mrb[0].mxu0 %v1689
    %v1872 = vpop.f32.mrb[0].mxu0
    %v1873 = vadd.f32 %v1769, %v1872
    %v1874 = vpop.f32.mrb[0].mxu0
    %1875 = vmatprep.mubr.f32.mxu0 0.0
    %1876 = vmatmul.mubr.f32.gmra.mrb[0].mxu0 %v1690
    %v1877 = vpop.f32.mrb[0].mxu0
    %v1878 = vadd.f32 %v1769, %v1877
    %v1879 = vpop.f32.mrb[0].mxu0
    %1880 = vmatprep.mubr.f32.mxu0 0.0
    %1881 = vmatmul.mubr.f32.gmra.mrb[0].mxu0 %v1691
    %v1882 = vpop.f32.mrb[0].mxu0
    %v1883 = vadd.f32 %v1769, %v1882
    %v1884 = vpop.f32.mrb[0].mxu0
    %1885 = vmatprep.mubr.f32.mxu0 0.0
    %1886 = vmatmul.mubr.f32.gmra.mrb[0].mxu0 %v1692
    %v1887 = vpop.f32.mrb[0].mxu0
    %v1888 = vadd.f32 %v1769, %v1887
    %v1889 = vpop.f32.mrb[0].mxu0
    %1890 = vmatprep.mubr.f32.mxu0 0.0
    %1891 = vmatmul.mubr.f32.gmra.mrb[0].mxu0 %v1693
    %v1892 = vpop.f32.mrb[0].mxu0
    %v1893 = vadd.f32 %v1769, %v1892
    %v1894 = vpop.f32.mrb[0].mxu0
    %1895 = vmatprep.mubr.f32.mxu0 0.0
    %1896 = vmatmul.mubr.f32.gmra.mrb[0].mxu0 %v1694
    %v1897 = vpop.f32.mrb[0].mxu0
    %v1898 = vadd.f32 %v1769, %v1897
    %v1899 = vpop.f32.mrb[0].mxu0
    %1900 = vmatprep.mubr.f32.mxu0 0.0
    %1901 = vmatmul.mubr.f32.gmra.mrb[0].mxu0 %v1695
    %v1902 = vpop.f32.mrb[0].mxu0
    %v1903 = vadd.f32 %v1769, %v1902
    %v1904 = vpop.f32.mrb[0].mxu0
    %1905 = vmatprep.mubr.f32.mxu0 0.0
    %1906 = vmatmul.mubr.f32.gmra.mrb[0].mxu0 %v1696
    %v1907 = vpop.f32.mrb[0].mxu0
    %v1908 = vadd.f32 %v1769, %v1907
    %v1909 = vpop.f32.mrb[0].mxu0
    %1910 = vmatprep.mubr.f32.mxu0 0.0
    %1911 = vmatmul.mubr.f32.gmra.mrb[0].mxu0 %v1697
    %v1912 = vpop.f32.mrb[0].mxu0
    %v1913 = vadd.f32 %v1769, %v1912
    %v1914 = vpop.f32.mrb[0].mxu0
    %1915 = vmatprep.mubr.f32.mxu0 0.0
    %1916 = vmatmul.mubr.f32.gmra.mrb[0].mxu0 %v1698
    %v1917 = vpop.f32.mrb[0].mxu0
    %v1918 = vadd.f32 %v1769, %v1917
    %v1919 = vpop.f32.mrb[0].mxu0
    %1920 = vmatprep.mubr.f32.mxu0 0.0
    %1921 = vmatmul.mubr.f32.gmra.mrb[0].mxu0 %v1699
    %v1922 = vpop.f32.mrb[0].mxu0
    %v1923 = vadd.f32 %v1769, %v1922
    %v1924 = vpop.f32.mrb[0].mxu0
    %1925 = vmatprep.mubr.f32.mxu0 0.0
    %1926 = vmatmul.mubr.f32.gmra.mrb[0].mxu0 %v1700
    %v1927 = vpop.f32.mrb[0].mxu0
    %v1928 = vadd.f32 %v1769, %v1927
    %v1929 = vpop.f32.mrb[0].mxu0
    %1930 = vmatprep.mubr.f32.mxu0 0.0
    %1931 = vmatmul.mubr.f32.gmra.mrb[0].mxu0 %v1701
    %v1932 = vpop.f32.mrb[0].mxu0
    %v1933 = vadd.f32 %v1769, %v1932
    %v1934 = vpop.f32.mrb[0].mxu0
    %1935 = vmatprep.mubr.f32.mxu0 0.0
    %1936 = vmatmul.mubr.f32.gmra.mrb[0].mxu0 %v1702
    %v1937 = vpop.f32.mrb[0].mxu0
    %v1938 = vadd.f32 %v1769, %v1937
    %v1939 = vpop.f32.mrb[0].mxu0
    %1940 = vmatprep.mubr.f32.mxu0 0.0
    %1941 = vmatmul.mubr.f32.gmra.mrb[0].mxu0 %v1703
    %v1942 = vpop.f32.mrb[0].mxu0
    %v1943 = vadd.f32 %v1769, %v1942
    %v1944 = vpop.f32.mrb[0].mxu0
    %1945 = vmatprep.mubr.f32.mxu0 0.0
    %1946 = vmatmul.mubr.f32.gmra.mrb[0].mxu0 %v1704
    %v1947 = vpop.f32.mrb[0].mxu0
    %v1948 = vadd.f32 %v1769, %v1947
    %v1949 = vpop.f32.mrb[0].mxu0
    %1950 = vmatprep.mubr.f32.mxu0 0.0
    %1951 = vmatmul.mubr.f32.gmra.mrb[0].mxu0 %v1705
    %v1952 = vpop.f32.mrb[0].mxu0
    %v1953 = vadd.f32 %v1769, %v1952
    %v1954 = vpop.f32.mrb[0].mxu0
    %1955 = vmatprep.mubr.f32.mxu0 0.0
    %1956 = vmatmul.mubr.f32.gmra.mrb[0].mxu0 %v1706
    %v1957 = vpop.f32.mrb[0].mxu0
    %v1958 = vadd.f32 %v1769, %v1957
    %v1959 = vpop.f32.mrb[0].mxu0
    %1960 = vmatprep.mubr.f32.mxu0 0.0
    %1961 = vmatmul.mubr.f32.gmra.mrb[0].mxu0 %v1707
    %v1962 = vpop.f32.mrb[0].mxu0
    %v1963 = vadd.f32 %v1769, %v1962
    %v1964 = vpop.f32.mrb[0].mxu0
    %1965 = vmatprep.mubr.f32.mxu0 0.0
    %1966 = vmatmul.mubr.f32.gmra.mrb[0].mxu0 %v1708
    %v1967 = vpop.f32.mrb[0].mxu0
    %v1968 = vadd.f32 %v1769, %v1967
    %v1969 = vpop.f32.mrb[0].mxu0
    %1970 = vmatprep.mubr.f32.mxu0 0.0
    %1971 = vmatmul.mubr.f32.gmra.mrb[0].mxu0 %v1709
    %v1972 = vpop.f32.mrb[0].mxu0
    %v1973 = vadd.f32 %v1769, %v1972
    %v1974 = vpop.f32.mrb[0].mxu0
    %1975 = vmatprep.mubr.f32.mxu0 0.0
    %1976 = vmatmul.mubr.f32.gmra.mrb[0].mxu0 %v1710
    %v1977 = vpop.f32.mrb[0].mxu0
    %v1978 = vadd.f32 %v1769, %v1977
    %v1979 = vpop.f32.mrb[0].mxu0
    %1980 = vmatprep.mubr.f32.mxu0 0.0
    %1981 = vmatmul.mubr.f32.gmra.mrb[0].mxu0 %v1711
    %v1982 = vpop.f32.mrb[0].mxu0
    %v1983 = vadd.f32 %v1769, %v1982
    %v1984 = vpop.f32.mrb[0].mxu0
    %1985 = vmatprep.mubr.f32.mxu0 0.0
    %1986 = vmatmul.mubr.f32.gmra.mrb[0].mxu0 %v1712
    %v1987 = vpop.f32.mrb[0].mxu0
    %v1988 = vadd.f32 %v1769, %v1987
    %v1989 = vpop.f32.mrb[0].mxu0
    %1990 = vmatprep.mubr.f32.mxu0 0.0
    %1991 = vmatmul.mubr.f32.gmra.mrb[0].mxu0 %v1713
    %v1992 = vpop.f32.mrb[0].mxu0
    %v1993 = vadd.f32 %v1769, %v1992
    %v1994 = vpop.f32.mrb[0].mxu0
    %1995 = vmatprep.mubr.f32.mxu0 0.0
    %1996 = vmatmul.mubr.f32.gmra.mrb[0].mxu0 %v1714
    %v1997 = vpop.f32.mrb[0].mxu0
    %v1998 = vadd.f32 %v1769, %v1997
    %v1999 = vpop.f32.mrb[0].mxu0
    %2000 = vmatprep.mubr.f32.mxu0 0.0
    %2001 = vmatmul.mubr.f32.gmra.mrb[0].mxu0 %v1715
    %v2002 = vpop.f32.mrb[0].mxu0
    %v2003 = vadd.f32 %v1769, %v2002
    %v2004 = vpop.f32.mrb[0].mxu0
    %2005 = vmatprep.mubr.f32.mxu0 0.0
    %2006 = vmatmul.mubr.f32.gmra.mrb[0].mxu0 %v1716
    %v2007 = vpop.f32.mrb[0].mxu0
    %v2008 = vadd.f32 %v1769, %v2007
    %v2009 = vpop.f32.mrb[0].mxu0
    %2010 = vmatprep.mubr.f32.mxu0 0.0
    %2011 = vmatmul.mubr.f32.gmra.mrb[0].mxu0 %v1717
    %v2012 = vpop.f32.mrb[0].mxu0
    %v2013 = vadd.f32 %v1769, %v2012
    %v2014 = vpop.f32.mrb[0].mxu0
    %2015 = vmatprep.mubr.f32.mxu0 0.0
    %2016 = vmatmul.mubr.f32.gmra.mrb[0].mxu0 %v1718
    %v2017 = vpop.f32.mrb[0].mxu0
    %v2018 = vadd.f32 %v1769, %v2017
    %v2019 = vpop.f32.mrb[0].mxu0
    %2020 = vmatprep.mubr.f32.mxu0 0.0
    %2021 = vmatmul.mubr.f32.gmra.mrb[0].mxu0 %v1719
    %v2022 = vpop.f32.mrb[0].mxu0
    %v2023 = vadd.f32 %v1769, %v2022
    %v2024 = vpop.f32.mrb[0].mxu0
    %2025 = vmatprep.mubr.f32.mxu0 0.0
    %2026 = vmatmul.mubr.f32.gmra.mrb[0].mxu0 %v1720
    %v2027 = vpop.f32.mrb[0].mxu0
    %v2028 = vadd.f32 %v1769, %v2027
    %v2029 = vpop.f32.mrb[0].mxu0
    %2030 = vmatprep.mubr.f32.mxu0 0.0
    %2031 = vmatmul.mubr.f32.gmra.mrb[0].mxu0 %v1721
    %v2032 = vpop.f32.mrb[0].mxu0
    %v2033 = vadd.f32 %v1769, %v2032
    %v2034 = vpop.f32.mrb[0].mxu0
    %2035 = vmatprep.mubr.f32.mxu0 0.0
    %2036 = vmatmul.mubr.f32.gmra.mrb[0].mxu0 %v1722
    %v2037 = vpop.f32.mrb[0].mxu0
    %v2038 = vadd.f32 %v1769, %v2037
    %v2039 = vpop.f32.mrb[0].mxu0
    %2040 = vmatprep.mubr.f32.mxu0 0.0
    %2041 = vmatmul.mubr.f32.gmra.mrb[0].mxu0 %v1723
    %v2042 = vpop.f32.mrb[0].mxu0
    %v2043 = vadd.f32 %v1769, %v2042
    %v2044 = vpop.f32.mrb[0].mxu0
    %2045 = vmatprep.mubr.f32.mxu0 0.0
    %2046 = vmatmul.mubr.f32.gmra.mrb[0].mxu0 %v1724
    %v2047 = vpop.f32.mrb[0].mxu0
    %v2048 = vadd.f32 %v1769, %v2047
    %v2049 = vpop.f32.mrb[0].mxu0
    %2050 = vmatprep.mubr.f32.mxu0 0.0
    %2051 = vmatmul.mubr.f32.gmra.mrb[0].mxu0 %v1725
    %v2052 = vpop.f32.mrb[0].mxu0
    %v2053 = vadd.f32 %v1769, %v2052
    %v2054 = vpop.f32.mrb[0].mxu0
    %2055 = vmatprep.mubr.f32.mxu0 0.0
    %2056 = vmatmul.mubr.f32.gmra.mrb[0].mxu0 %v1726
    %v2057 = vpop.f32.mrb[0].mxu0
    %v2058 = vadd.f32 %v1769, %v2057
    %v2059 = vpop.f32.mrb[0].mxu0
    %2060 = vmatprep.mubr.f32.mxu0 0.0
    %2061 = vmatmul.mubr.f32.gmra.mrb[0].mxu0 %v1727
    %v2062 = vpop.f32.mrb[0].mxu0
    %v2063 = vadd.f32 %v1769, %v2062
    %v2064 = vpop.f32.mrb[0].mxu0
    %2065 = vmatprep.mubr.f32.mxu0 0.0
    %2066 = vmatmul.mubr.f32.gmra.mrb[0].mxu0 %v1728
    %v2067 = vpop.f32.mrb[0].mxu0
    %v2068 = vadd.f32 %v1769, %v2067
    %v2069 = vpop.f32.mrb[0].mxu0
    %2070 = vmatprep.mubr.f32.mxu0 0.0
    %2071 = vmatmul.mubr.f32.gmra.mrb[0].mxu0 %v1729
    %v2072 = vpop.f32.mrb[0].mxu0
    %v2073 = vadd.f32 %v1769, %v2072
    %v2074 = vpop.f32.mrb[0].mxu0
    %2075 = vmatprep.mubr.f32.mxu0 0.0
    %2076 = vmatmul.mubr.f32.gmra.mrb[0].mxu0 %v1730
    %v2077 = vpop.f32.mrb[0].mxu0
    %v2078 = vadd.f32 %v1769, %v2077
    %v2079 = vpop.f32.mrb[0].mxu0
    %2080 = vmatprep.mubr.f32.mxu0 0.0
    %2081 = vmatmul.mubr.f32.gmra.mrb[0].mxu0 %v1731
    %v2082 = vpop.f32.mrb[0].mxu0
    %v2083 = vadd.f32 %v1769, %v2082
    %v2084 = vpop.f32.mrb[0].mxu0
    %2085 = vmatprep.mubr.f32.mxu0 0.0
    %2086 = vmatmul.mubr.f32.gmra.mrb[0].mxu0 %v1732
    %v2087 = vpop.f32.mrb[0].mxu0
    %v2088 = vadd.f32 %v1769, %v2087
    %v2089 = vpop.f32.mrb[0].mxu0
    %2090 = vmatprep.mubr.f32.mxu0 0.0
    %2091 = vmatmul.mubr.f32.gmra.mrb[0].mxu0 %v1733
    %v2092 = vpop.f32.mrb[0].mxu0
    %v2093 = vadd.f32 %v1769, %v2092
    %v2094 = vpop.f32.mrb[0].mxu0
    %2095 = vmatprep.mubr.f32.mxu0 0.0
    %2096 = vmatmul.mubr.f32.gmra.mrb[0].mxu0 %v1734
    %v2097 = vpop.f32.mrb[0].mxu0
    %v2098 = vadd.f32 %v1769, %v2097
    %v2099 = vpop.f32.mrb[0].mxu0
    %2100 = vmatprep.mubr.f32.mxu0 0.0
    %2101 = vmatmul.mubr.f32.gmra.mrb[0].mxu0 %v1735
    %v2102 = vpop.f32.mrb[0].mxu0
    %v2103 = vadd.f32 %v1769, %v2102
    %v2104 = vpop.f32.mrb[0].mxu0
    %2105 = vmatprep.mubr.f32.mxu0 0.0
    %2106 = vmatmul.mubr.f32.gmra.mrb[0].mxu0 %v1736
    %v2107 = vpop.f32.mrb[0].mxu0
    %v2108 = vadd.f32 %v1769, %v2107
    %v2109 = vpop.f32.mrb[0].mxu0
    %2110 = vmatprep.mubr.f32.mxu0 0.0
    %2111 = vmatmul.mubr.f32.gmra.mrb[0].mxu0 %v1737
    %v2112 = vpop.f32.mrb[0].mxu0
    %v2113 = vadd.f32 %v1769, %v2112
    %v2114 = vpop.f32.mrb[0].mxu0
    %2115 = vmatprep.mubr.f32.mxu0 0.0
    %2116 = vmatmul.mubr.f32.gmra.mrb[0].mxu0 %v1738
    %v2117 = vpop.f32.mrb[0].mxu0
    %v2118 = vadd.f32 %v1769, %v2117
    %v2119 = vpop.f32.mrb[0].mxu0
    %2120 = vmatprep.mubr.f32.mxu0 0.0
    %2121 = vmatmul.mubr.f32.gmra.mrb[0].mxu0 %v1739
    %v2122 = vpop.f32.mrb[0].mxu0
    %v2123 = vadd.f32 %v1769, %v2122
    %v2124 = vpop.f32.mrb[0].mxu0
    %2125 = vmatprep.mubr.f32.mxu0 0.0
    %2126 = vmatmul.mubr.f32.gmra.mrb[0].mxu0 %v1740
    %v2127 = vpop.f32.mrb[0].mxu0
    %v2128 = vadd.f32 %v1769, %v2127
    %v2129 = vpop.f32.mrb[0].mxu0
    %2130 = vmatprep.mubr.f32.mxu0 0.0
    %2131 = vmatmul.mubr.f32.gmra.mrb[0].mxu0 %v1741
    %v2132 = vpop.f32.mrb[0].mxu0
    %v2133 = vadd.f32 %v1769, %v2132
    %v2134 = vpop.f32.mrb[0].mxu0
    %2135 = vmatprep.mubr.f32.mxu0 0.0
    %2136 = vmatmul.mubr.f32.gmra.mrb[0].mxu0 %v1742
    %v2137 = vpop.f32.mrb[0].mxu0
    %v2138 = vadd.f32 %v1769, %v2137
    %v2139 = vpop.f32.mrb[0].mxu0
    %2140 = vmatprep.mubr.f32.mxu0 0.0
    %2141 = vmatmul.mubr.f32.gmra.mrb[0].mxu0 %v1743
    %v2142 = vpop.f32.mrb[0].mxu0
    %v2143 = vadd.f32 %v1769, %v2142
    %v2144 = vpop.f32.mrb[0].mxu0
    %2145 = vmatprep.mubr.f32.mxu0 0.0
    %2146 = vmatmul.mubr.f32.gmra.mrb[0].mxu0 %v1744
    %v2147 = vpop.f32.mrb[0].mxu0
    %v2148 = vadd.f32 %v1769, %v2147
    %v2149 = vpop.f32.mrb[0].mxu0
    %2150 = vmatprep.mubr.f32.mxu0 0.0
    %2151 = vmatmul.mubr.f32.gmra.mrb[0].mxu0 %v1745
    %v2152 = vpop.f32.mrb[0].mxu0
    %v2153 = vadd.f32 %v1769, %v2152
    %v2154 = vpop.f32.mrb[0].mxu0
    %2155 = vdwg.mxu0
    %v2156 = vmul.f32 %v1838, 0.5
    %v2157 = vmul.f32 %v1843, 0.5
    %v2158 = vmul.f32 %v1848, 0.5
    %v2159 = vmul.f32 %v1853, 0.5
    %v2160 = vmul.f32 %v1858, 0.5
    %v2161 = vmul.f32 %v1863, 0.5
    %v2162 = vmul.f32 %v1868, 0.5
    %v2163 = vmul.f32 %v1873, 0.5
    %v2164 = vmul.f32 %v1878, 0.5
    %v2165 = vmul.f32 %v1883, 0.5
    %v2166 = vmul.f32 %v1888, 0.5
    %v2167 = vmul.f32 %v1893, 0.5
    %v2168 = vmul.f32 %v1898, 0.5
    %v2169 = vmul.f32 %v1903, 0.5
    %v2170 = vmul.f32 %v1908, 0.5
    %v2171 = vmul.f32 %v1913, 0.5
    %v2172 = vmul.f32 %v1918, 0.5
    %v2173 = vmul.f32 %v1923, 0.5
    %v2174 = vmul.f32 %v1928, 0.5
    %v2175 = vmul.f32 %v1933, 0.5
    %v2176 = vmul.f32 %v1938, 0.5
    %v2177 = vmul.f32 %v1943, 0.5
    %v2178 = vmul.f32 %v1948, 0.5
    %v2179 = vmul.f32 %v1953, 0.5
    %v2180 = vmul.f32 %v1958, 0.5
    %v2181 = vmul.f32 %v1963, 0.5
    %v2182 = vmul.f32 %v1968, 0.5
    %v2183 = vmul.f32 %v1973, 0.5
    %v2184 = vmul.f32 %v1978, 0.5
    %v2185 = vmul.f32 %v1983, 0.5
    %v2186 = vmul.f32 %v1988, 0.5
    %v2187 = vmul.f32 %v1993, 0.5
    %v2188 = vmul.f32 %v1998, 0.5
    %v2189 = vmul.f32 %v2003, 0.5
    %v2190 = vmul.f32 %v2008, 0.5
    %v2191 = vmul.f32 %v2013, 0.5
    %v2192 = vmul.f32 %v2018, 0.5
    %v2193 = vmul.f32 %v2023, 0.5
    %v2194 = vmul.f32 %v2028, 0.5
    %v2195 = vmul.f32 %v2033, 0.5
    %v2196 = vmul.f32 %v2038, 0.5
    %v2197 = vmul.f32 %v2043, 0.5
    %v2198 = vmul.f32 %v2048, 0.5
    %v2199 = vmul.f32 %v2053, 0.5
    %v2200 = vmul.f32 %v2058, 0.5
    %v2201 = vmul.f32 %v2063, 0.5
    %v2202 = vmul.f32 %v2068, 0.5
    %v2203 = vmul.f32 %v2073, 0.5
    %v2204 = vmul.f32 %v2078, 0.5
    %v2205 = vmul.f32 %v2083, 0.5
    %v2206 = vmul.f32 %v2088, 0.5
    %v2207 = vmul.f32 %v2093, 0.5
    %v2208 = vmul.f32 %v2098, 0.5
    %v2209 = vmul.f32 %v2103, 0.5
    %v2210 = vmul.f32 %v2108, 0.5
    %v2211 = vmul.f32 %v2113, 0.5
    %v2212 = vmul.f32 %v2118, 0.5
    %v2213 = vmul.f32 %v2123, 0.5
    %v2214 = vmul.f32 %v2128, 0.5
    %v2215 = vmul.f32 %v2133, 0.5
    %v2216 = vmul.f32 %v2138, 0.5
    %v2217 = vmul.f32 %v2143, 0.5
    %v2218 = vmul.f32 %v2148, 0.5
    %v2219 = vmul.f32 %v2153, 0.5
    %v2220 = vtanh.pop %v2156
    %v2221 = vtanh.pop %v2157
    %v2222 = vtanh.pop %v2158
    %v2223 = vtanh.pop %v2159
    %v2224 = vtanh.pop %v2160
    %v2225 = vtanh.pop %v2161
    %v2226 = vtanh.pop %v2162
    %v2227 = vtanh.pop %v2163
    %v2228 = vtanh.pop %v2164
    %v2229 = vtanh.pop %v2165
    %v2230 = vtanh.pop %v2166
    %v2231 = vtanh.pop %v2167
    %v2232 = vtanh.pop %v2168
    %v2233 = vtanh.pop %v2169
    %v2234 = vtanh.pop %v2170
    %v2235 = vtanh.pop %v2171
    %v2236 = vtanh.pop %v2172
    %v2237 = vtanh.pop %v2173
    %v2238 = vtanh.pop %v2174
    %v2239 = vtanh.pop %v2175
    %v2240 = vtanh.pop %v2176
    %v2241 = vtanh.pop %v2177
    %v2242 = vtanh.pop %v2178
    %v2243 = vtanh.pop %v2179
    %v2244 = vtanh.pop %v2180
    %v2245 = vtanh.pop %v2181
    %v2246 = vtanh.pop %v2182
    %v2247 = vtanh.pop %v2183
    %v2248 = vtanh.pop %v2184
    %v2249 = vtanh.pop %v2185
    %v2250 = vtanh.pop %v2186
    %v2251 = vtanh.pop %v2187
    %v2252 = vtanh.pop %v2188
    %v2253 = vtanh.pop %v2189
    %v2254 = vtanh.pop %v2190
    %v2255 = vtanh.pop %v2191
    %v2256 = vtanh.pop %v2192
    %v2257 = vtanh.pop %v2193
    %v2258 = vtanh.pop %v2194
    %v2259 = vtanh.pop %v2195
    %v2260 = vtanh.pop %v2196
    %v2261 = vtanh.pop %v2197
    %v2262 = vtanh.pop %v2198
    %v2263 = vtanh.pop %v2199
    %v2264 = vtanh.pop %v2200
    %v2265 = vtanh.pop %v2201
    %v2266 = vtanh.pop %v2202
    %v2267 = vtanh.pop %v2203
    %v2268 = vtanh.pop %v2204
    %v2269 = vtanh.pop %v2205
    %v2270 = vtanh.pop %v2206
    %v2271 = vtanh.pop %v2207
    %v2272 = vtanh.pop %v2208
    %v2273 = vtanh.pop %v2209
    %v2274 = vtanh.pop %v2210
    %v2275 = vtanh.pop %v2211
    %v2276 = vtanh.pop %v2212
    %v2277 = vtanh.pop %v2213
    %v2278 = vtanh.pop %v2214
    %v2279 = vtanh.pop %v2215
    %v2280 = vtanh.pop %v2216
    %v2281 = vtanh.pop %v2217
    %v2282 = vtanh.pop %v2218
    %v2283 = vtanh.pop %v2219
    %v2284 = vadd.f32 %v2220, 1.0
    %v2285 = vadd.f32 %v2221, 1.0
    %v2286 = vadd.f32 %v2222, 1.0
    %v2287 = vadd.f32 %v2223, 1.0
    %v2288 = vadd.f32 %v2224, 1.0
    %v2289 = vadd.f32 %v2225, 1.0
    %v2290 = vadd.f32 %v2226, 1.0
    %v2291 = vadd.f32 %v2227, 1.0
    %v2292 = vadd.f32 %v2228, 1.0
    %v2293 = vadd.f32 %v2229, 1.0
    %v2294 = vadd.f32 %v2230, 1.0
    %v2295 = vadd.f32 %v2231, 1.0
    %v2296 = vadd.f32 %v2232, 1.0
    %v2297 = vadd.f32 %v2233, 1.0
    %v2298 = vadd.f32 %v2234, 1.0
    %v2299 = vadd.f32 %v2235, 1.0
    %v2300 = vadd.f32 %v2236, 1.0
    %v2301 = vadd.f32 %v2237, 1.0
    %v2302 = vadd.f32 %v2238, 1.0
    %v2303 = vadd.f32 %v2239, 1.0
    %v2304 = vadd.f32 %v2240, 1.0
    %v2305 = vadd.f32 %v2241, 1.0
    %v2306 = vadd.f32 %v2242, 1.0
    %v2307 = vadd.f32 %v2243, 1.0
    %v2308 = vadd.f32 %v2244, 1.0
    %v2309 = vadd.f32 %v2245, 1.0
    %v2310 = vadd.f32 %v2246, 1.0
    %v2311 = vadd.f32 %v2247, 1.0
    %v2312 = vadd.f32 %v2248, 1.0
    %v2313 = vadd.f32 %v2249, 1.0
    %v2314 = vadd.f32 %v2250, 1.0
    %v2315 = vadd.f32 %v2251, 1.0
    %v2316 = vadd.f32 %v2252, 1.0
    %v2317 = vadd.f32 %v2253, 1.0
    %v2318 = vadd.f32 %v2254, 1.0
    %v2319 = vadd.f32 %v2255, 1.0
    %v2320 = vadd.f32 %v2256, 1.0
    %v2321 = vadd.f32 %v2257, 1.0
    %v2322 = vadd.f32 %v2258, 1.0
    %v2323 = vadd.f32 %v2259, 1.0
    %v2324 = vadd.f32 %v2260, 1.0
    %v2325 = vadd.f32 %v2261, 1.0
    %v2326 = vadd.f32 %v2262, 1.0
    %v2327 = vadd.f32 %v2263, 1.0
    %v2328 = vadd.f32 %v2264, 1.0
    %v2329 = vadd.f32 %v2265, 1.0
    %v2330 = vadd.f32 %v2266, 1.0
    %v2331 = vadd.f32 %v2267, 1.0
    %v2332 = vadd.f32 %v2268, 1.0
    %v2333 = vadd.f32 %v2269, 1.0
    %v2334 = vadd.f32 %v2270, 1.0
    %v2335 = vadd.f32 %v2271, 1.0
    %v2336 = vadd.f32 %v2272, 1.0
    %v2337 = vadd.f32 %v2273, 1.0
    %v2338 = vadd.f32 %v2274, 1.0
    %v2339 = vadd.f32 %v2275, 1.0
    %v2340 = vadd.f32 %v2276, 1.0
    %v2341 = vadd.f32 %v2277, 1.0
    %v2342 = vadd.f32 %v2278, 1.0
    %v2343 = vadd.f32 %v2279, 1.0
    %v2344 = vadd.f32 %v2280, 1.0
    %v2345 = vadd.f32 %v2281, 1.0
    %v2346 = vadd.f32 %v2282, 1.0
    %v2347 = vadd.f32 %v2283, 1.0
    %v2348 = vmul.f32 %v2284, 0.5
    %v2349 = vmul.f32 %v2285, 0.5
    %v2350 = vmul.f32 %v2286, 0.5
    %v2351 = vmul.f32 %v2287, 0.5
    %v2352 = vmul.f32 %v2288, 0.5
    %v2353 = vmul.f32 %v2289, 0.5
    %v2354 = vmul.f32 %v2290, 0.5
    %v2355 = vmul.f32 %v2291, 0.5
    %v2356 = vmul.f32 %v2292, 0.5
    %v2357 = vmul.f32 %v2293, 0.5
    %v2358 = vmul.f32 %v2294, 0.5
    %v2359 = vmul.f32 %v2295, 0.5
    %v2360 = vmul.f32 %v2296, 0.5
    %v2361 = vmul.f32 %v2297, 0.5
    %v2362 = vmul.f32 %v2298, 0.5
    %v2363 = vmul.f32 %v2299, 0.5
    %v2364 = vmul.f32 %v2300, 0.5
    %v2365 = vmul.f32 %v2301, 0.5
    %v2366 = vmul.f32 %v2302, 0.5
    %v2367 = vmul.f32 %v2303, 0.5
    %v2368 = vmul.f32 %v2304, 0.5
    %v2369 = vmul.f32 %v2305, 0.5
    %v2370 = vmul.f32 %v2306, 0.5
    %v2371 = vmul.f32 %v2307, 0.5
    %v2372 = vmul.f32 %v2308, 0.5
    %v2373 = vmul.f32 %v2309, 0.5
    %v2374 = vmul.f32 %v2310, 0.5
    %v2375 = vmul.f32 %v2311, 0.5
    %v2376 = vmul.f32 %v2312, 0.5
    %v2377 = vmul.f32 %v2313, 0.5
    %v2378 = vmul.f32 %v2314, 0.5
    %v2379 = vmul.f32 %v2315, 0.5
    %v2380 = vmul.f32 %v2316, 0.5
    %v2381 = vmul.f32 %v2317, 0.5
    %v2382 = vmul.f32 %v2318, 0.5
    %v2383 = vmul.f32 %v2319, 0.5
    %v2384 = vmul.f32 %v2320, 0.5
    %v2385 = vmul.f32 %v2321, 0.5
    %v2386 = vmul.f32 %v2322, 0.5
    %v2387 = vmul.f32 %v2323, 0.5
    %v2388 = vmul.f32 %v2324, 0.5
    %v2389 = vmul.f32 %v2325, 0.5
    %v2390 = vmul.f32 %v2326, 0.5
    %v2391 = vmul.f32 %v2327, 0.5
    %v2392 = vmul.f32 %v2328, 0.5
    %v2393 = vmul.f32 %v2329, 0.5
    %v2394 = vmul.f32 %v2330, 0.5
    %v2395 = vmul.f32 %v2331, 0.5
    %v2396 = vmul.f32 %v2332, 0.5
    %v2397 = vmul.f32 %v2333, 0.5
    %v2398 = vmul.f32 %v2334, 0.5
    %v2399 = vmul.f32 %v2335, 0.5
    %v2400 = vmul.f32 %v2336, 0.5
    %v2401 = vmul.f32 %v2337, 0.5
    %v2402 = vmul.f32 %v2338, 0.5
    %v2403 = vmul.f32 %v2339, 0.5
    %v2404 = vmul.f32 %v2340, 0.5
    %v2405 = vmul.f32 %v2341, 0.5
    %v2406 = vmul.f32 %v2342, 0.5
    %v2407 = vmul.f32 %v2343, 0.5
    %v2408 = vmul.f32 %v2344, 0.5
    %v2409 = vmul.f32 %v2345, 0.5
    %v2410 = vmul.f32 %v2346, 0.5
    %v2411 = vmul.f32 %v2347, 0.5
    %v2412 = vmul.f32 %v1838, %v2348
    %v2413 = vmul.f32 %v1843, %v2349
    %v2414 = vmul.f32 %v1848, %v2350
    %v2415 = vmul.f32 %v1853, %v2351
    %v2416 = vmul.f32 %v1858, %v2352
    %v2417 = vmul.f32 %v1863, %v2353
    %v2418 = vmul.f32 %v1868, %v2354
    %v2419 = vmul.f32 %v1873, %v2355
    %v2420 = vmul.f32 %v1878, %v2356
    %v2421 = vmul.f32 %v1883, %v2357
    %v2422 = vmul.f32 %v1888, %v2358
    %v2423 = vmul.f32 %v1893, %v2359
    %v2424 = vmul.f32 %v1898, %v2360
    %v2425 = vmul.f32 %v1903, %v2361
    %v2426 = vmul.f32 %v1908, %v2362
    %v2427 = vmul.f32 %v1913, %v2363
    %v2428 = vmul.f32 %v1918, %v2364
    %v2429 = vmul.f32 %v1923, %v2365
    %v2430 = vmul.f32 %v1928, %v2366
    %v2431 = vmul.f32 %v1933, %v2367
    %v2432 = vmul.f32 %v1938, %v2368
    %v2433 = vmul.f32 %v1943, %v2369
    %v2434 = vmul.f32 %v1948, %v2370
    %v2435 = vmul.f32 %v1953, %v2371
    %v2436 = vmul.f32 %v1958, %v2372
    %v2437 = vmul.f32 %v1963, %v2373
    %v2438 = vmul.f32 %v1968, %v2374
    %v2439 = vmul.f32 %v1973, %v2375
    %v2440 = vmul.f32 %v1978, %v2376
    %v2441 = vmul.f32 %v1983, %v2377
    %v2442 = vmul.f32 %v1988, %v2378
    %v2443 = vmul.f32 %v1993, %v2379
    %v2444 = vmul.f32 %v1998, %v2380
    %v2445 = vmul.f32 %v2003, %v2381
    %v2446 = vmul.f32 %v2008, %v2382
    %v2447 = vmul.f32 %v2013, %v2383
    %v2448 = vmul.f32 %v2018, %v2384
    %v2449 = vmul.f32 %v2023, %v2385
    %v2450 = vmul.f32 %v2028, %v2386
    %v2451 = vmul.f32 %v2033, %v2387
    %v2452 = vmul.f32 %v2038, %v2388
    %v2453 = vmul.f32 %v2043, %v2389
    %v2454 = vmul.f32 %v2048, %v2390
    %v2455 = vmul.f32 %v2053, %v2391
    %v2456 = vmul.f32 %v2058, %v2392
    %v2457 = vmul.f32 %v2063, %v2393
    %v2458 = vmul.f32 %v2068, %v2394
    %v2459 = vmul.f32 %v2073, %v2395
    %v2460 = vmul.f32 %v2078, %v2396
    %v2461 = vmul.f32 %v2083, %v2397
    %v2462 = vmul.f32 %v2088, %v2398
    %v2463 = vmul.f32 %v2093, %v2399
    %v2464 = vmul.f32 %v2098, %v2400
    %v2465 = vmul.f32 %v2103, %v2401
    %v2466 = vmul.f32 %v2108, %v2402
    %v2467 = vmul.f32 %v2113, %v2403
    %v2468 = vmul.f32 %v2118, %v2404
    %v2469 = vmul.f32 %v2123, %v2405
    %v2470 = vmul.f32 %v2128, %v2406
    %v2471 = vmul.f32 %v2133, %v2407
    %v2472 = vmul.f32 %v2138, %v2408
    %v2473 = vmul.f32 %v2143, %v2409
    %v2474 = vmul.f32 %v2148, %v2410
    %v2475 = vmul.f32 %v2153, %v2411
    %s2476 = scalar_lea.vmem [#allocation3], 256
    %v2477 = vld [vmem:[%s2476] sm:$0xff]
    %v2478 = vld [vmem:[%s2476 + $0x8] sm:$0xff]
    %v2479 = vld [vmem:[%s2476 + $0x10] sm:$0xff]
    %v2480 = vld [vmem:[%s2476 + $0x18] sm:$0xff]
    %v2481 = vld [vmem:[%s2476 + $0x20] sm:$0xff]
    %v2482 = vld [vmem:[%s2476 + $0x28] sm:$0xff]
    %v2483 = vld [vmem:[%s2476 + $0x30] sm:$0xff]
    %v2484 = vld [vmem:[%s2476 + $0x38] sm:$0xff]
    %v2485 = vld [vmem:[%s2476 + $0x40] sm:$0xff]
    %v2486 = vld [vmem:[%s2476 + $0x48] sm:$0xff]
    %v2487 = vld [vmem:[%s2476 + $0x50] sm:$0xff]
    %v2488 = vld [vmem:[%s2476 + $0x58] sm:$0xff]
    %v2489 = vld [vmem:[%s2476 + $0x60] sm:$0xff]
    %v2490 = vld [vmem:[%s2476 + $0x68] sm:$0xff]
    %v2491 = vld [vmem:[%s2476 + $0x70] sm:$0xff]
    %v2492 = vld [vmem:[%s2476 + $0x78] sm:$0xff]
    %s2493 = scalar_lea.vmem %s5, 2
    %v2494 = vld [vmem:[%s2493] sm:$0x1]
    %v2496 = vlaneseq
    %v2497 = vshrl.u32 %v2496, 7
    %v2498 = vsub.s32 0, %v2497
    %v2499 = vrot.slane %v2494, %v2498
    %2501 = vmatprep.subr.mxu0 0.0
    %2502 = vmatpush1.msra.mxu0 %v2477
    %2503 = vmatprep.subr.mxu0 0.0
    %2504 = vmatpush1.msra.mxu0 %v2478
    %2505 = vmatprep.subr.mxu0 0.0
    %2506 = vmatpush1.msra.mxu0 %v2479
    %2507 = vmatprep.subr.mxu0 0.0
    %2508 = vmatpush1.msra.mxu0 %v2480
    %2509 = vmatprep.subr.mxu0 0.0
    %2510 = vmatpush1.msra.mxu0 %v2481
    %2511 = vmatprep.subr.mxu0 0.0
    %2512 = vmatpush1.msra.mxu0 %v2482
    %2513 = vmatprep.subr.mxu0 0.0
    %2514 = vmatpush1.msra.mxu0 %v2483
    %2515 = vmatprep.subr.mxu0 0.0
    %2516 = vmatpush1.msra.mxu0 %v2484
    %2517 = vmatprep.subr.mxu0 0.0
    %2518 = vmatpush1.msra.mxu0 %v2485
    %2519 = vmatprep.subr.mxu0 0.0
    %2520 = vmatpush1.msra.mxu0 %v2486
    %2521 = vmatprep.subr.mxu0 0.0
    %2522 = vmatpush1.msra.mxu0 %v2487
    %2523 = vmatprep.subr.mxu0 0.0
    %2524 = vmatpush1.msra.mxu0 %v2488
    %2525 = vmatprep.subr.mxu0 0.0
    %2526 = vmatpush1.msra.mxu0 %v2489
    %2527 = vmatprep.subr.mxu0 0.0
    %2528 = vmatpush1.msra.mxu0 %v2490
    %2529 = vmatprep.subr.mxu0 0.0
    %2530 = vmatpush1.msra.mxu0 %v2491
    %2531 = vmatprep.subr.mxu0 0.0
    %2532 = vmatpush1.msra.mxu0 %v2492
    %2533 = vmatprep.subr.mxu0 0.0
    %2534 = vmatpush1.msra.mxu0 0.0
    %2535 = vmatprep.subr.mxu0 0.0
    %2536 = vmatpush1.msra.mxu0 0.0
    %2537 = vmatprep.subr.mxu0 0.0
    %2538 = vmatpush1.msra.mxu0 0.0
    %2539 = vmatprep.subr.mxu0 0.0
    %2540 = vmatpush1.msra.mxu0 0.0
    %2541 = vmatprep.subr.mxu0 0.0
    %2542 = vmatpush1.msra.mxu0 0.0
    %2543 = vmatprep.subr.mxu0 0.0
    %2544 = vmatpush1.msra.mxu0 0.0
    %2545 = vmatprep.subr.mxu0 0.0
    %2546 = vmatpush1.msra.mxu0 0.0
    %2547 = vmatprep.subr.mxu0 0.0
    %2548 = vmatpush1.msra.mxu0 0.0
    %2549 = vmatprep.subr.mxu0 0.0
    %2550 = vmatpush1.msra.mxu0 0.0
    %2551 = vmatprep.subr.mxu0 0.0
    %2552 = vmatpush1.msra.mxu0 0.0
    %2553 = vmatprep.subr.mxu0 0.0
    %2554 = vmatpush1.msra.mxu0 0.0
    %2555 = vmatprep.subr.mxu0 0.0
    %2556 = vmatpush1.msra.mxu0 0.0
    %2557 = vmatprep.subr.mxu0 0.0
    %2558 = vmatpush1.msra.mxu0 0.0
    %2559 = vmatprep.subr.mxu0 0.0
    %2560 = vmatpush1.msra.mxu0 0.0
    %2561 = vmatprep.subr.mxu0 0.0
    %2562 = vmatpush1.msra.mxu0 0.0
    %2563 = vmatprep.subr.mxu0 0.0
    %2564 = vmatpush1.msra.mxu0 0.0
    %2565 = vmatprep.mubr.f32.mxu0 0.0
    %2566 = vmatmul.mubr.f32.gmra.mrb[0].mxu0 %v2412
    %v2567 = vpop.f32.mrb[0].mxu0
    %v2568 = vadd.f32 %v2499, %v2567
    %v2569 = vpop.f32.mrb[0].mxu0
    %2570 = vmatprep.mubr.f32.mxu0 0.0
    %2571 = vmatmul.mubr.f32.gmra.mrb[0].mxu0 %v2413
    %v2572 = vpop.f32.mrb[0].mxu0
    %v2573 = vadd.f32 %v2499, %v2572
    %v2574 = vpop.f32.mrb[0].mxu0
    %2575 = vmatprep.mubr.f32.mxu0 0.0
    %2576 = vmatmul.mubr.f32.gmra.mrb[0].mxu0 %v2414
    %v2577 = vpop.f32.mrb[0].mxu0
    %v2578 = vadd.f32 %v2499, %v2577
    %v2579 = vpop.f32.mrb[0].mxu0
    %2580 = vmatprep.mubr.f32.mxu0 0.0
    %2581 = vmatmul.mubr.f32.gmra.mrb[0].mxu0 %v2415
    %v2582 = vpop.f32.mrb[0].mxu0
    %v2583 = vadd.f32 %v2499, %v2582
    %v2584 = vpop.f32.mrb[0].mxu0
    %2585 = vmatprep.mubr.f32.mxu0 0.0
    %2586 = vmatmul.mubr.f32.gmra.mrb[0].mxu0 %v2416
    %v2587 = vpop.f32.mrb[0].mxu0
    %v2588 = vadd.f32 %v2499, %v2587
    %v2589 = vpop.f32.mrb[0].mxu0
    %2590 = vmatprep.mubr.f32.mxu0 0.0
    %2591 = vmatmul.mubr.f32.gmra.mrb[0].mxu0 %v2417
    %v2592 = vpop.f32.mrb[0].mxu0
    %v2593 = vadd.f32 %v2499, %v2592
    %v2594 = vpop.f32.mrb[0].mxu0
    %2595 = vmatprep.mubr.f32.mxu0 0.0
    %2596 = vmatmul.mubr.f32.gmra.mrb[0].mxu0 %v2418
    %v2597 = vpop.f32.mrb[0].mxu0
    %v2598 = vadd.f32 %v2499, %v2597
    %v2599 = vpop.f32.mrb[0].mxu0
    %2600 = vmatprep.mubr.f32.mxu0 0.0
    %2601 = vmatmul.mubr.f32.gmra.mrb[0].mxu0 %v2419
    %v2602 = vpop.f32.mrb[0].mxu0
    %v2603 = vadd.f32 %v2499, %v2602
    %v2604 = vpop.f32.mrb[0].mxu0
    %2605 = vmatprep.mubr.f32.mxu0 0.0
    %2606 = vmatmul.mubr.f32.gmra.mrb[0].mxu0 %v2420
    %v2607 = vpop.f32.mrb[0].mxu0
    %v2608 = vadd.f32 %v2499, %v2607
    %v2609 = vpop.f32.mrb[0].mxu0
    %2610 = vmatprep.mubr.f32.mxu0 0.0
    %2611 = vmatmul.mubr.f32.gmra.mrb[0].mxu0 %v2421
    %v2612 = vpop.f32.mrb[0].mxu0
    %v2613 = vadd.f32 %v2499, %v2612
    %v2614 = vpop.f32.mrb[0].mxu0
    %2615 = vmatprep.mubr.f32.mxu0 0.0
    %2616 = vmatmul.mubr.f32.gmra.mrb[0].mxu0 %v2422
    %v2617 = vpop.f32.mrb[0].mxu0
    %v2618 = vadd.f32 %v2499, %v2617
    %v2619 = vpop.f32.mrb[0].mxu0
    %2620 = vmatprep.mubr.f32.mxu0 0.0
    %2621 = vmatmul.mubr.f32.gmra.mrb[0].mxu0 %v2423
    %v2622 = vpop.f32.mrb[0].mxu0
    %v2623 = vadd.f32 %v2499, %v2622
    %v2624 = vpop.f32.mrb[0].mxu0
    %2625 = vmatprep.mubr.f32.mxu0 0.0
    %2626 = vmatmul.mubr.f32.gmra.mrb[0].mxu0 %v2424
    %v2627 = vpop.f32.mrb[0].mxu0
    %v2628 = vadd.f32 %v2499, %v2627
    %v2629 = vpop.f32.mrb[0].mxu0
    %2630 = vmatprep.mubr.f32.mxu0 0.0
    %2631 = vmatmul.mubr.f32.gmra.mrb[0].mxu0 %v2425
    %v2632 = vpop.f32.mrb[0].mxu0
    %v2633 = vadd.f32 %v2499, %v2632
    %v2634 = vpop.f32.mrb[0].mxu0
    %2635 = vmatprep.mubr.f32.mxu0 0.0
    %2636 = vmatmul.mubr.f32.gmra.mrb[0].mxu0 %v2426
    %v2637 = vpop.f32.mrb[0].mxu0
    %v2638 = vadd.f32 %v2499, %v2637
    %v2639 = vpop.f32.mrb[0].mxu0
    %2640 = vmatprep.mubr.f32.mxu0 0.0
    %2641 = vmatmul.mubr.f32.gmra.mrb[0].mxu0 %v2427
    %v2642 = vpop.f32.mrb[0].mxu0
    %v2643 = vadd.f32 %v2499, %v2642
    %v2644 = vpop.f32.mrb[0].mxu0
    %2645 = vmatprep.mubr.f32.mxu0 0.0
    %2646 = vmatmul.mubr.f32.gmra.mrb[0].mxu0 %v2428
    %v2647 = vpop.f32.mrb[0].mxu0
    %v2648 = vadd.f32 %v2499, %v2647
    %v2649 = vpop.f32.mrb[0].mxu0
    %2650 = vmatprep.mubr.f32.mxu0 0.0
    %2651 = vmatmul.mubr.f32.gmra.mrb[0].mxu0 %v2429
    %v2652 = vpop.f32.mrb[0].mxu0
    %v2653 = vadd.f32 %v2499, %v2652
    %v2654 = vpop.f32.mrb[0].mxu0
    %2655 = vmatprep.mubr.f32.mxu0 0.0
    %2656 = vmatmul.mubr.f32.gmra.mrb[0].mxu0 %v2430
    %v2657 = vpop.f32.mrb[0].mxu0
    %v2658 = vadd.f32 %v2499, %v2657
    %v2659 = vpop.f32.mrb[0].mxu0
    %2660 = vmatprep.mubr.f32.mxu0 0.0
    %2661 = vmatmul.mubr.f32.gmra.mrb[0].mxu0 %v2431
    %v2662 = vpop.f32.mrb[0].mxu0
    %v2663 = vadd.f32 %v2499, %v2662
    %v2664 = vpop.f32.mrb[0].mxu0
    %2665 = vmatprep.mubr.f32.mxu0 0.0
    %2666 = vmatmul.mubr.f32.gmra.mrb[0].mxu0 %v2432
    %v2667 = vpop.f32.mrb[0].mxu0
    %v2668 = vadd.f32 %v2499, %v2667
    %v2669 = vpop.f32.mrb[0].mxu0
    %2670 = vmatprep.mubr.f32.mxu0 0.0
    %2671 = vmatmul.mubr.f32.gmra.mrb[0].mxu0 %v2433
    %v2672 = vpop.f32.mrb[0].mxu0
    %v2673 = vadd.f32 %v2499, %v2672
    %v2674 = vpop.f32.mrb[0].mxu0
    %2675 = vmatprep.mubr.f32.mxu0 0.0
    %2676 = vmatmul.mubr.f32.gmra.mrb[0].mxu0 %v2434
    %v2677 = vpop.f32.mrb[0].mxu0
    %v2678 = vadd.f32 %v2499, %v2677
    %v2679 = vpop.f32.mrb[0].mxu0
    %2680 = vmatprep.mubr.f32.mxu0 0.0
    %2681 = vmatmul.mubr.f32.gmra.mrb[0].mxu0 %v2435
    %v2682 = vpop.f32.mrb[0].mxu0
    %v2683 = vadd.f32 %v2499, %v2682
    %v2684 = vpop.f32.mrb[0].mxu0
    %2685 = vmatprep.mubr.f32.mxu0 0.0
    %2686 = vmatmul.mubr.f32.gmra.mrb[0].mxu0 %v2436
    %v2687 = vpop.f32.mrb[0].mxu0
    %v2688 = vadd.f32 %v2499, %v2687
    %v2689 = vpop.f32.mrb[0].mxu0
    %2690 = vmatprep.mubr.f32.mxu0 0.0
    %2691 = vmatmul.mubr.f32.gmra.mrb[0].mxu0 %v2437
    %v2692 = vpop.f32.mrb[0].mxu0
    %v2693 = vadd.f32 %v2499, %v2692
    %v2694 = vpop.f32.mrb[0].mxu0
    %2695 = vmatprep.mubr.f32.mxu0 0.0
    %2696 = vmatmul.mubr.f32.gmra.mrb[0].mxu0 %v2438
    %v2697 = vpop.f32.mrb[0].mxu0
    %v2698 = vadd.f32 %v2499, %v2697
    %v2699 = vpop.f32.mrb[0].mxu0
    %2700 = vmatprep.mubr.f32.mxu0 0.0
    %2701 = vmatmul.mubr.f32.gmra.mrb[0].mxu0 %v2439
    %v2702 = vpop.f32.mrb[0].mxu0
    %v2703 = vadd.f32 %v2499, %v2702
    %v2704 = vpop.f32.mrb[0].mxu0
    %2705 = vmatprep.mubr.f32.mxu0 0.0
    %2706 = vmatmul.mubr.f32.gmra.mrb[0].mxu0 %v2440
    %v2707 = vpop.f32.mrb[0].mxu0
    %v2708 = vadd.f32 %v2499, %v2707
    %v2709 = vpop.f32.mrb[0].mxu0
    %2710 = vmatprep.mubr.f32.mxu0 0.0
    %2711 = vmatmul.mubr.f32.gmra.mrb[0].mxu0 %v2441
    %v2712 = vpop.f32.mrb[0].mxu0
    %v2713 = vadd.f32 %v2499, %v2712
    %v2714 = vpop.f32.mrb[0].mxu0
    %2715 = vmatprep.mubr.f32.mxu0 0.0
    %2716 = vmatmul.mubr.f32.gmra.mrb[0].mxu0 %v2442
    %v2717 = vpop.f32.mrb[0].mxu0
    %v2718 = vadd.f32 %v2499, %v2717
    %v2719 = vpop.f32.mrb[0].mxu0
    %2720 = vmatprep.mubr.f32.mxu0 0.0
    %2721 = vmatmul.mubr.f32.gmra.mrb[0].mxu0 %v2443
    %v2722 = vpop.f32.mrb[0].mxu0
    %v2723 = vadd.f32 %v2499, %v2722
    %v2724 = vpop.f32.mrb[0].mxu0
    %2725 = vmatprep.mubr.f32.mxu0 0.0
    %2726 = vmatmul.mubr.f32.gmra.mrb[0].mxu0 %v2444
    %v2727 = vpop.f32.mrb[0].mxu0
    %v2728 = vadd.f32 %v2499, %v2727
    %v2729 = vpop.f32.mrb[0].mxu0
    %2730 = vmatprep.mubr.f32.mxu0 0.0
    %2731 = vmatmul.mubr.f32.gmra.mrb[0].mxu0 %v2445
    %v2732 = vpop.f32.mrb[0].mxu0
    %v2733 = vadd.f32 %v2499, %v2732
    %v2734 = vpop.f32.mrb[0].mxu0
    %2735 = vmatprep.mubr.f32.mxu0 0.0
    %2736 = vmatmul.mubr.f32.gmra.mrb[0].mxu0 %v2446
    %v2737 = vpop.f32.mrb[0].mxu0
    %v2738 = vadd.f32 %v2499, %v2737
    %v2739 = vpop.f32.mrb[0].mxu0
    %2740 = vmatprep.mubr.f32.mxu0 0.0
    %2741 = vmatmul.mubr.f32.gmra.mrb[0].mxu0 %v2447
    %v2742 = vpop.f32.mrb[0].mxu0
    %v2743 = vadd.f32 %v2499, %v2742
    %v2744 = vpop.f32.mrb[0].mxu0
    %2745 = vmatprep.mubr.f32.mxu0 0.0
    %2746 = vmatmul.mubr.f32.gmra.mrb[0].mxu0 %v2448
    %v2747 = vpop.f32.mrb[0].mxu0
    %v2748 = vadd.f32 %v2499, %v2747
    %v2749 = vpop.f32.mrb[0].mxu0
    %2750 = vmatprep.mubr.f32.mxu0 0.0
    %2751 = vmatmul.mubr.f32.gmra.mrb[0].mxu0 %v2449
    %v2752 = vpop.f32.mrb[0].mxu0
    %v2753 = vadd.f32 %v2499, %v2752
    %v2754 = vpop.f32.mrb[0].mxu0
    %2755 = vmatprep.mubr.f32.mxu0 0.0
    %2756 = vmatmul.mubr.f32.gmra.mrb[0].mxu0 %v2450
    %v2757 = vpop.f32.mrb[0].mxu0
    %v2758 = vadd.f32 %v2499, %v2757
    %v2759 = vpop.f32.mrb[0].mxu0
    %2760 = vmatprep.mubr.f32.mxu0 0.0
    %2761 = vmatmul.mubr.f32.gmra.mrb[0].mxu0 %v2451
    %v2762 = vpop.f32.mrb[0].mxu0
    %v2763 = vadd.f32 %v2499, %v2762
    %v2764 = vpop.f32.mrb[0].mxu0
    %2765 = vmatprep.mubr.f32.mxu0 0.0
    %2766 = vmatmul.mubr.f32.gmra.mrb[0].mxu0 %v2452
    %v2767 = vpop.f32.mrb[0].mxu0
    %v2768 = vadd.f32 %v2499, %v2767
    %v2769 = vpop.f32.mrb[0].mxu0
    %2770 = vmatprep.mubr.f32.mxu0 0.0
    %2771 = vmatmul.mubr.f32.gmra.mrb[0].mxu0 %v2453
    %v2772 = vpop.f32.mrb[0].mxu0
    %v2773 = vadd.f32 %v2499, %v2772
    %v2774 = vpop.f32.mrb[0].mxu0
    %2775 = vmatprep.mubr.f32.mxu0 0.0
    %2776 = vmatmul.mubr.f32.gmra.mrb[0].mxu0 %v2454
    %v2777 = vpop.f32.mrb[0].mxu0
    %v2778 = vadd.f32 %v2499, %v2777
    %v2779 = vpop.f32.mrb[0].mxu0
    %2780 = vmatprep.mubr.f32.mxu0 0.0
    %2781 = vmatmul.mubr.f32.gmra.mrb[0].mxu0 %v2455
    %v2782 = vpop.f32.mrb[0].mxu0
    %v2783 = vadd.f32 %v2499, %v2782
    %v2784 = vpop.f32.mrb[0].mxu0
    %2785 = vmatprep.mubr.f32.mxu0 0.0
    %2786 = vmatmul.mubr.f32.gmra.mrb[0].mxu0 %v2456
    %v2787 = vpop.f32.mrb[0].mxu0
    %v2788 = vadd.f32 %v2499, %v2787
    %v2789 = vpop.f32.mrb[0].mxu0
    %2790 = vmatprep.mubr.f32.mxu0 0.0
    %2791 = vmatmul.mubr.f32.gmra.mrb[0].mxu0 %v2457
    %v2792 = vpop.f32.mrb[0].mxu0
    %v2793 = vadd.f32 %v2499, %v2792
    %v2794 = vpop.f32.mrb[0].mxu0
    %2795 = vmatprep.mubr.f32.mxu0 0.0
    %2796 = vmatmul.mubr.f32.gmra.mrb[0].mxu0 %v2458
    %v2797 = vpop.f32.mrb[0].mxu0
    %v2798 = vadd.f32 %v2499, %v2797
    %v2799 = vpop.f32.mrb[0].mxu0
    %2800 = vmatprep.mubr.f32.mxu0 0.0
    %2801 = vmatmul.mubr.f32.gmra.mrb[0].mxu0 %v2459
    %v2802 = vpop.f32.mrb[0].mxu0
    %v2803 = vadd.f32 %v2499, %v2802
    %v2804 = vpop.f32.mrb[0].mxu0
    %2805 = vmatprep.mubr.f32.mxu0 0.0
    %2806 = vmatmul.mubr.f32.gmra.mrb[0].mxu0 %v2460
    %v2807 = vpop.f32.mrb[0].mxu0
    %v2808 = vadd.f32 %v2499, %v2807
    %v2809 = vpop.f32.mrb[0].mxu0
    %2810 = vmatprep.mubr.f32.mxu0 0.0
    %2811 = vmatmul.mubr.f32.gmra.mrb[0].mxu0 %v2461
    %v2812 = vpop.f32.mrb[0].mxu0
    %v2813 = vadd.f32 %v2499, %v2812
    %v2814 = vpop.f32.mrb[0].mxu0
    %2815 = vmatprep.mubr.f32.mxu0 0.0
    %2816 = vmatmul.mubr.f32.gmra.mrb[0].mxu0 %v2462
    %v2817 = vpop.f32.mrb[0].mxu0
    %v2818 = vadd.f32 %v2499, %v2817
    %v2819 = vpop.f32.mrb[0].mxu0
    %2820 = vmatprep.mubr.f32.mxu0 0.0
    %2821 = vmatmul.mubr.f32.gmra.mrb[0].mxu0 %v2463
    %v2822 = vpop.f32.mrb[0].mxu0
    %v2823 = vadd.f32 %v2499, %v2822
    %v2824 = vpop.f32.mrb[0].mxu0
    %2825 = vmatprep.mubr.f32.mxu0 0.0
    %2826 = vmatmul.mubr.f32.gmra.mrb[0].mxu0 %v2464
    %v2827 = vpop.f32.mrb[0].mxu0
    %v2828 = vadd.f32 %v2499, %v2827
    %v2829 = vpop.f32.mrb[0].mxu0
    %2830 = vmatprep.mubr.f32.mxu0 0.0
    %2831 = vmatmul.mubr.f32.gmra.mrb[0].mxu0 %v2465
    %v2832 = vpop.f32.mrb[0].mxu0
    %v2833 = vadd.f32 %v2499, %v2832
    %v2834 = vpop.f32.mrb[0].mxu0
    %2835 = vmatprep.mubr.f32.mxu0 0.0
    %2836 = vmatmul.mubr.f32.gmra.mrb[0].mxu0 %v2466
    %v2837 = vpop.f32.mrb[0].mxu0
    %v2838 = vadd.f32 %v2499, %v2837
    %v2839 = vpop.f32.mrb[0].mxu0
    %2840 = vmatprep.mubr.f32.mxu0 0.0
    %2841 = vmatmul.mubr.f32.gmra.mrb[0].mxu0 %v2467
    %v2842 = vpop.f32.mrb[0].mxu0
    %v2843 = vadd.f32 %v2499, %v2842
    %v2844 = vpop.f32.mrb[0].mxu0
    %2845 = vmatprep.mubr.f32.mxu0 0.0
    %2846 = vmatmul.mubr.f32.gmra.mrb[0].mxu0 %v2468
    %v2847 = vpop.f32.mrb[0].mxu0
    %v2848 = vadd.f32 %v2499, %v2847
    %v2849 = vpop.f32.mrb[0].mxu0
    %2850 = vmatprep.mubr.f32.mxu0 0.0
    %2851 = vmatmul.mubr.f32.gmra.mrb[0].mxu0 %v2469
    %v2852 = vpop.f32.mrb[0].mxu0
    %v2853 = vadd.f32 %v2499, %v2852
    %v2854 = vpop.f32.mrb[0].mxu0
    %2855 = vmatprep.mubr.f32.mxu0 0.0
    %2856 = vmatmul.mubr.f32.gmra.mrb[0].mxu0 %v2470
    %v2857 = vpop.f32.mrb[0].mxu0
    %v2858 = vadd.f32 %v2499, %v2857
    %v2859 = vpop.f32.mrb[0].mxu0
    %2860 = vmatprep.mubr.f32.mxu0 0.0
    %2861 = vmatmul.mubr.f32.gmra.mrb[0].mxu0 %v2471
    %v2862 = vpop.f32.mrb[0].mxu0
    %v2863 = vadd.f32 %v2499, %v2862
    %v2864 = vpop.f32.mrb[0].mxu0
    %2865 = vmatprep.mubr.f32.mxu0 0.0
    %2866 = vmatmul.mubr.f32.gmra.mrb[0].mxu0 %v2472
    %v2867 = vpop.f32.mrb[0].mxu0
    %v2868 = vadd.f32 %v2499, %v2867
    %v2869 = vpop.f32.mrb[0].mxu0
    %2870 = vmatprep.mubr.f32.mxu0 0.0
    %2871 = vmatmul.mubr.f32.gmra.mrb[0].mxu0 %v2473
    %v2872 = vpop.f32.mrb[0].mxu0
    %v2873 = vadd.f32 %v2499, %v2872
    %v2874 = vpop.f32.mrb[0].mxu0
    %2875 = vmatprep.mubr.f32.mxu0 0.0
    %2876 = vmatmul.mubr.f32.gmra.mrb[0].mxu0 %v2474
    %v2877 = vpop.f32.mrb[0].mxu0
    %v2878 = vadd.f32 %v2499, %v2877
    %v2879 = vpop.f32.mrb[0].mxu0
    %2880 = vmatprep.mubr.f32.mxu0 0.0
    %2881 = vmatmul.mubr.f32.gmra.mrb[0].mxu0 %v2475
    %v2882 = vpop.f32.mrb[0].mxu0
    %v2883 = vadd.f32 %v2499, %v2882
    %v2884 = vpop.f32.mrb[0].mxu0
    %2885 = vdwg.mxu0
    %v2886 = vmul.f32 %v2568, 0.5
    %v2887 = vmul.f32 %v2573, 0.5
    %v2888 = vmul.f32 %v2578, 0.5
    %v2889 = vmul.f32 %v2583, 0.5
    %v2890 = vmul.f32 %v2588, 0.5
    %v2891 = vmul.f32 %v2593, 0.5
    %v2892 = vmul.f32 %v2598, 0.5
    %v2893 = vmul.f32 %v2603, 0.5
    %v2894 = vmul.f32 %v2608, 0.5
    %v2895 = vmul.f32 %v2613, 0.5
    %v2896 = vmul.f32 %v2618, 0.5
    %v2897 = vmul.f32 %v2623, 0.5
    %v2898 = vmul.f32 %v2628, 0.5
    %v2899 = vmul.f32 %v2633, 0.5
    %v2900 = vmul.f32 %v2638, 0.5
    %v2901 = vmul.f32 %v2643, 0.5
    %v2902 = vmul.f32 %v2648, 0.5
    %v2903 = vmul.f32 %v2653, 0.5
    %v2904 = vmul.f32 %v2658, 0.5
    %v2905 = vmul.f32 %v2663, 0.5
    %v2906 = vmul.f32 %v2668, 0.5
    %v2907 = vmul.f32 %v2673, 0.5
    %v2908 = vmul.f32 %v2678, 0.5
    %v2909 = vmul.f32 %v2683, 0.5
    %v2910 = vmul.f32 %v2688, 0.5
    %v2911 = vmul.f32 %v2693, 0.5
    %v2912 = vmul.f32 %v2698, 0.5
    %v2913 = vmul.f32 %v2703, 0.5
    %v2914 = vmul.f32 %v2708, 0.5
    %v2915 = vmul.f32 %v2713, 0.5
    %v2916 = vmul.f32 %v2718, 0.5
    %v2917 = vmul.f32 %v2723, 0.5
    %v2918 = vmul.f32 %v2728, 0.5
    %v2919 = vmul.f32 %v2733, 0.5
    %v2920 = vmul.f32 %v2738, 0.5
    %v2921 = vmul.f32 %v2743, 0.5
    %v2922 = vmul.f32 %v2748, 0.5
    %v2923 = vmul.f32 %v2753, 0.5
    %v2924 = vmul.f32 %v2758, 0.5
    %v2925 = vmul.f32 %v2763, 0.5
    %v2926 = vmul.f32 %v2768, 0.5
    %v2927 = vmul.f32 %v2773, 0.5
    %v2928 = vmul.f32 %v2778, 0.5
    %v2929 = vmul.f32 %v2783, 0.5
    %v2930 = vmul.f32 %v2788, 0.5
    %v2931 = vmul.f32 %v2793, 0.5
    %v2932 = vmul.f32 %v2798, 0.5
    %v2933 = vmul.f32 %v2803, 0.5
    %v2934 = vmul.f32 %v2808, 0.5
    %v2935 = vmul.f32 %v2813, 0.5
    %v2936 = vmul.f32 %v2818, 0.5
    %v2937 = vmul.f32 %v2823, 0.5
    %v2938 = vmul.f32 %v2828, 0.5
    %v2939 = vmul.f32 %v2833, 0.5
    %v2940 = vmul.f32 %v2838, 0.5
    %v2941 = vmul.f32 %v2843, 0.5
    %v2942 = vmul.f32 %v2848, 0.5
    %v2943 = vmul.f32 %v2853, 0.5
    %v2944 = vmul.f32 %v2858, 0.5
    %v2945 = vmul.f32 %v2863, 0.5
    %v2946 = vmul.f32 %v2868, 0.5
    %v2947 = vmul.f32 %v2873, 0.5
    %v2948 = vmul.f32 %v2878, 0.5
    %v2949 = vmul.f32 %v2883, 0.5
    %v2950 = vtanh.pop %v2886
    %v2951 = vtanh.pop %v2887
    %v2952 = vtanh.pop %v2888
    %v2953 = vtanh.pop %v2889
    %v2954 = vtanh.pop %v2890
    %v2955 = vtanh.pop %v2891
    %v2956 = vtanh.pop %v2892
    %v2957 = vtanh.pop %v2893
    %v2958 = vtanh.pop %v2894
    %v2959 = vtanh.pop %v2895
    %v2960 = vtanh.pop %v2896
    %v2961 = vtanh.pop %v2897
    %v2962 = vtanh.pop %v2898
    %v2963 = vtanh.pop %v2899
    %v2964 = vtanh.pop %v2900
    %v2965 = vtanh.pop %v2901
    %v2966 = vtanh.pop %v2902
    %v2967 = vtanh.pop %v2903
    %v2968 = vtanh.pop %v2904
    %v2969 = vtanh.pop %v2905
    %v2970 = vtanh.pop %v2906
    %v2971 = vtanh.pop %v2907
    %v2972 = vtanh.pop %v2908
    %v2973 = vtanh.pop %v2909
    %v2974 = vtanh.pop %v2910
    %v2975 = vtanh.pop %v2911
    %v2976 = vtanh.pop %v2912
    %v2977 = vtanh.pop %v2913
    %v2978 = vtanh.pop %v2914
    %v2979 = vtanh.pop %v2915
    %v2980 = vtanh.pop %v2916
    %v2981 = vtanh.pop %v2917
    %v2982 = vtanh.pop %v2918
    %v2983 = vtanh.pop %v2919
    %v2984 = vtanh.pop %v2920
    %v2985 = vtanh.pop %v2921
    %v2986 = vtanh.pop %v2922
    %v2987 = vtanh.pop %v2923
    %v2988 = vtanh.pop %v2924
    %v2989 = vtanh.pop %v2925
    %v2990 = vtanh.pop %v2926
    %v2991 = vtanh.pop %v2927
    %v2992 = vtanh.pop %v2928
    %v2993 = vtanh.pop %v2929
    %v2994 = vtanh.pop %v2930
    %v2995 = vtanh.pop %v2931
    %v2996 = vtanh.pop %v2932
    %v2997 = vtanh.pop %v2933
    %v2998 = vtanh.pop %v2934
    %v2999 = vtanh.pop %v2935
    %v3000 = vtanh.pop %v2936
    %v3001 = vtanh.pop %v2937
    %v3002 = vtanh.pop %v2938
    %v3003 = vtanh.pop %v2939
    %v3004 = vtanh.pop %v2940
    %v3005 = vtanh.pop %v2941
    %v3006 = vtanh.pop %v2942
    %v3007 = vtanh.pop %v2943
    %v3008 = vtanh.pop %v2944
    %v3009 = vtanh.pop %v2945
    %v3010 = vtanh.pop %v2946
    %v3011 = vtanh.pop %v2947
    %v3012 = vtanh.pop %v2948
    %v3013 = vtanh.pop %v2949
    %v3014 = vadd.f32 %v2950, 1.0
    %v3015 = vadd.f32 %v2951, 1.0
    %v3016 = vadd.f32 %v2952, 1.0
    %v3017 = vadd.f32 %v2953, 1.0
    %v3018 = vadd.f32 %v2954, 1.0
    %v3019 = vadd.f32 %v2955, 1.0
    %v3020 = vadd.f32 %v2956, 1.0
    %v3021 = vadd.f32 %v2957, 1.0
    %v3022 = vadd.f32 %v2958, 1.0
    %v3023 = vadd.f32 %v2959, 1.0
    %v3024 = vadd.f32 %v2960, 1.0
    %v3025 = vadd.f32 %v2961, 1.0
    %v3026 = vadd.f32 %v2962, 1.0
    %v3027 = vadd.f32 %v2963, 1.0
    %v3028 = vadd.f32 %v2964, 1.0
    %v3029 = vadd.f32 %v2965, 1.0
    %v3030 = vadd.f32 %v2966, 1.0
    %v3031 = vadd.f32 %v2967, 1.0
    %v3032 = vadd.f32 %v2968, 1.0
    %v3033 = vadd.f32 %v2969, 1.0
    %v3034 = vadd.f32 %v2970, 1.0
    %v3035 = vadd.f32 %v2971, 1.0
    %v3036 = vadd.f32 %v2972, 1.0
    %v3037 = vadd.f32 %v2973, 1.0
    %v3038 = vadd.f32 %v2974, 1.0
    %v3039 = vadd.f32 %v2975, 1.0
    %v3040 = vadd.f32 %v2976, 1.0
    %v3041 = vadd.f32 %v2977, 1.0
    %v3042 = vadd.f32 %v2978, 1.0
    %v3043 = vadd.f32 %v2979, 1.0
    %v3044 = vadd.f32 %v2980, 1.0
    %v3045 = vadd.f32 %v2981, 1.0
    %v3046 = vadd.f32 %v2982, 1.0
    %v3047 = vadd.f32 %v2983, 1.0
    %v3048 = vadd.f32 %v2984, 1.0
    %v3049 = vadd.f32 %v2985, 1.0
    %v3050 = vadd.f32 %v2986, 1.0
    %v3051 = vadd.f32 %v2987, 1.0
    %v3052 = vadd.f32 %v2988, 1.0
    %v3053 = vadd.f32 %v2989, 1.0
    %v3054 = vadd.f32 %v2990, 1.0
    %v3055 = vadd.f32 %v2991, 1.0
    %v3056 = vadd.f32 %v2992, 1.0
    %v3057 = vadd.f32 %v2993, 1.0
    %v3058 = vadd.f32 %v2994, 1.0
    %v3059 = vadd.f32 %v2995, 1.0
    %v3060 = vadd.f32 %v2996, 1.0
    %v3061 = vadd.f32 %v2997, 1.0
    %v3062 = vadd.f32 %v2998, 1.0
    %v3063 = vadd.f32 %v2999, 1.0
    %v3064 = vadd.f32 %v3000, 1.0
    %v3065 = vadd.f32 %v3001, 1.0
    %v3066 = vadd.f32 %v3002, 1.0
    %v3067 = vadd.f32 %v3003, 1.0
    %v3068 = vadd.f32 %v3004, 1.0
    %v3069 = vadd.f32 %v3005, 1.0
    %v3070 = vadd.f32 %v3006, 1.0
    %v3071 = vadd.f32 %v3007, 1.0
    %v3072 = vadd.f32 %v3008, 1.0
    %v3073 = vadd.f32 %v3009, 1.0
    %v3074 = vadd.f32 %v3010, 1.0
    %v3075 = vadd.f32 %v3011, 1.0
    %v3076 = vadd.f32 %v3012, 1.0
    %v3077 = vadd.f32 %v3013, 1.0
    %v3078 = vmul.f32 %v3014, 0.5
    %v3079 = vmul.f32 %v3015, 0.5
    %v3080 = vmul.f32 %v3016, 0.5
    %v3081 = vmul.f32 %v3017, 0.5
    %v3082 = vmul.f32 %v3018, 0.5
    %v3083 = vmul.f32 %v3019, 0.5
    %v3084 = vmul.f32 %v3020, 0.5
    %v3085 = vmul.f32 %v3021, 0.5
    %v3086 = vmul.f32 %v3022, 0.5
    %v3087 = vmul.f32 %v3023, 0.5
    %v3088 = vmul.f32 %v3024, 0.5
    %v3089 = vmul.f32 %v3025, 0.5
    %v3090 = vmul.f32 %v3026, 0.5
    %v3091 = vmul.f32 %v3027, 0.5
    %v3092 = vmul.f32 %v3028, 0.5
    %v3093 = vmul.f32 %v3029, 0.5
    %v3094 = vmul.f32 %v3030, 0.5
    %v3095 = vmul.f32 %v3031, 0.5
    %v3096 = vmul.f32 %v3032, 0.5
    %v3097 = vmul.f32 %v3033, 0.5
    %v3098 = vmul.f32 %v3034, 0.5
    %v3099 = vmul.f32 %v3035, 0.5
    %v3100 = vmul.f32 %v3036, 0.5
    %v3101 = vmul.f32 %v3037, 0.5
    %v3102 = vmul.f32 %v3038, 0.5
    %v3103 = vmul.f32 %v3039, 0.5
    %v3104 = vmul.f32 %v3040, 0.5
    %v3105 = vmul.f32 %v3041, 0.5
    %v3106 = vmul.f32 %v3042, 0.5
    %v3107 = vmul.f32 %v3043, 0.5
    %v3108 = vmul.f32 %v3044, 0.5
    %v3109 = vmul.f32 %v3045, 0.5
    %v3110 = vmul.f32 %v3046, 0.5
    %v3111 = vmul.f32 %v3047, 0.5
    %v3112 = vmul.f32 %v3048, 0.5
    %v3113 = vmul.f32 %v3049, 0.5
    %v3114 = vmul.f32 %v3050, 0.5
    %v3115 = vmul.f32 %v3051, 0.5
    %v3116 = vmul.f32 %v3052, 0.5
    %v3117 = vmul.f32 %v3053, 0.5
    %v3118 = vmul.f32 %v3054, 0.5
    %v3119 = vmul.f32 %v3055, 0.5
    %v3120 = vmul.f32 %v3056, 0.5
    %v3121 = vmul.f32 %v3057, 0.5
    %v3122 = vmul.f32 %v3058, 0.5
    %v3123 = vmul.f32 %v3059, 0.5
    %v3124 = vmul.f32 %v3060, 0.5
    %v3125 = vmul.f32 %v3061, 0.5
    %v3126 = vmul.f32 %v3062, 0.5
    %v3127 = vmul.f32 %v3063, 0.5
    %v3128 = vmul.f32 %v3064, 0.5
    %v3129 = vmul.f32 %v3065, 0.5
    %v3130 = vmul.f32 %v3066, 0.5
    %v3131 = vmul.f32 %v3067, 0.5
    %v3132 = vmul.f32 %v3068, 0.5
    %v3133 = vmul.f32 %v3069, 0.5
    %v3134 = vmul.f32 %v3070, 0.5
    %v3135 = vmul.f32 %v3071, 0.5
    %v3136 = vmul.f32 %v3072, 0.5
    %v3137 = vmul.f32 %v3073, 0.5
    %v3138 = vmul.f32 %v3074, 0.5
    %v3139 = vmul.f32 %v3075, 0.5
    %v3140 = vmul.f32 %v3076, 0.5
    %v3141 = vmul.f32 %v3077, 0.5
    %v3142 = vmul.f32 %v2568, %v3078
    %v3143 = vmul.f32 %v2573, %v3079
    %v3144 = vmul.f32 %v2578, %v3080
    %v3145 = vmul.f32 %v2583, %v3081
    %v3146 = vmul.f32 %v2588, %v3082
    %v3147 = vmul.f32 %v2593, %v3083
    %v3148 = vmul.f32 %v2598, %v3084
    %v3149 = vmul.f32 %v2603, %v3085
    %v3150 = vmul.f32 %v2608, %v3086
    %v3151 = vmul.f32 %v2613, %v3087
    %v3152 = vmul.f32 %v2618, %v3088
    %v3153 = vmul.f32 %v2623, %v3089
    %v3154 = vmul.f32 %v2628, %v3090
    %v3155 = vmul.f32 %v2633, %v3091
    %v3156 = vmul.f32 %v2638, %v3092
    %v3157 = vmul.f32 %v2643, %v3093
    %v3158 = vmul.f32 %v2648, %v3094
    %v3159 = vmul.f32 %v2653, %v3095
    %v3160 = vmul.f32 %v2658, %v3096
    %v3161 = vmul.f32 %v2663, %v3097
    %v3162 = vmul.f32 %v2668, %v3098
    %v3163 = vmul.f32 %v2673, %v3099
    %v3164 = vmul.f32 %v2678, %v3100
    %v3165 = vmul.f32 %v2683, %v3101
    %v3166 = vmul.f32 %v2688, %v3102
    %v3167 = vmul.f32 %v2693, %v3103
    %v3168 = vmul.f32 %v2698, %v3104
    %v3169 = vmul.f32 %v2703, %v3105
    %v3170 = vmul.f32 %v2708, %v3106
    %v3171 = vmul.f32 %v2713, %v3107
    %v3172 = vmul.f32 %v2718, %v3108
    %v3173 = vmul.f32 %v2723, %v3109
    %v3174 = vmul.f32 %v2728, %v3110
    %v3175 = vmul.f32 %v2733, %v3111
    %v3176 = vmul.f32 %v2738, %v3112
    %v3177 = vmul.f32 %v2743, %v3113
    %v3178 = vmul.f32 %v2748, %v3114
    %v3179 = vmul.f32 %v2753, %v3115
    %v3180 = vmul.f32 %v2758, %v3116
    %v3181 = vmul.f32 %v2763, %v3117
    %v3182 = vmul.f32 %v2768, %v3118
    %v3183 = vmul.f32 %v2773, %v3119
    %v3184 = vmul.f32 %v2778, %v3120
    %v3185 = vmul.f32 %v2783, %v3121
    %v3186 = vmul.f32 %v2788, %v3122
    %v3187 = vmul.f32 %v2793, %v3123
    %v3188 = vmul.f32 %v2798, %v3124
    %v3189 = vmul.f32 %v2803, %v3125
    %v3190 = vmul.f32 %v2808, %v3126
    %v3191 = vmul.f32 %v2813, %v3127
    %v3192 = vmul.f32 %v2818, %v3128
    %v3193 = vmul.f32 %v2823, %v3129
    %v3194 = vmul.f32 %v2828, %v3130
    %v3195 = vmul.f32 %v2833, %v3131
    %v3196 = vmul.f32 %v2838, %v3132
    %v3197 = vmul.f32 %v2843, %v3133
    %v3198 = vmul.f32 %v2848, %v3134
    %v3199 = vmul.f32 %v2853, %v3135
    %v3200 = vmul.f32 %v2858, %v3136
    %v3201 = vmul.f32 %v2863, %v3137
    %v3202 = vmul.f32 %v2868, %v3138
    %v3203 = vmul.f32 %v2873, %v3139
    %v3204 = vmul.f32 %v2878, %v3140
    %v3205 = vmul.f32 %v2883, %v3141
    %s3206 = scalar_lea.vmem [#allocation3], 384
    %v3207 = vld [vmem:[%s3206] sm:$0xff]
    %v3208 = vld [vmem:[%s3206 + $0x8] sm:$0xff]
    %v3209 = vld [vmem:[%s3206 + $0x10] sm:$0xff]
    %v3210 = vld [vmem:[%s3206 + $0x18] sm:$0xff]
    %v3211 = vld [vmem:[%s3206 + $0x20] sm:$0xff]
    %v3212 = vld [vmem:[%s3206 + $0x28] sm:$0xff]
    %v3213 = vld [vmem:[%s3206 + $0x30] sm:$0xff]
    %v3214 = vld [vmem:[%s3206 + $0x38] sm:$0xff]
    %v3215 = vld [vmem:[%s3206 + $0x40] sm:$0xff]
    %v3216 = vld [vmem:[%s3206 + $0x48] sm:$0xff]
    %v3217 = vld [vmem:[%s3206 + $0x50] sm:$0xff]
    %v3218 = vld [vmem:[%s3206 + $0x58] sm:$0xff]
    %v3219 = vld [vmem:[%s3206 + $0x60] sm:$0xff]
    %v3220 = vld [vmem:[%s3206 + $0x68] sm:$0xff]
    %v3221 = vld [vmem:[%s3206 + $0x70] sm:$0xff]
    %v3222 = vld [vmem:[%s3206 + $0x78] sm:$0xff]
    %s3223 = scalar_lea.vmem %s5, 3
    %v3224 = vld [vmem:[%s3223] sm:$0x1]
    %v3226 = vlaneseq
    %v3227 = vshrl.u32 %v3226, 7
    %v3228 = vsub.s32 0, %v3227
    %v3229 = vrot.slane %v3224, %v3228
    %3231 = vmatprep.subr.mxu0 0.0
    %3232 = vmatpush1.msra.mxu0 %v3207
    %3233 = vmatprep.subr.mxu0 0.0
    %3234 = vmatpush1.msra.mxu0 %v3208
    %3235 = vmatprep.subr.mxu0 0.0
    %3236 = vmatpush1.msra.mxu0 %v3209
    %3237 = vmatprep.subr.mxu0 0.0
    %3238 = vmatpush1.msra.mxu0 %v3210
    %3239 = vmatprep.subr.mxu0 0.0
    %3240 = vmatpush1.msra.mxu0 %v3211
    %3241 = vmatprep.subr.mxu0 0.0
    %3242 = vmatpush1.msra.mxu0 %v3212
    %3243 = vmatprep.subr.mxu0 0.0
    %3244 = vmatpush1.msra.mxu0 %v3213
    %3245 = vmatprep.subr.mxu0 0.0
    %3246 = vmatpush1.msra.mxu0 %v3214
    %3247 = vmatprep.subr.mxu0 0.0
    %3248 = vmatpush1.msra.mxu0 %v3215
    %3249 = vmatprep.subr.mxu0 0.0
    %3250 = vmatpush1.msra.mxu0 %v3216
    %3251 = vmatprep.subr.mxu0 0.0
    %3252 = vmatpush1.msra.mxu0 %v3217
    %3253 = vmatprep.subr.mxu0 0.0
    %3254 = vmatpush1.msra.mxu0 %v3218
    %3255 = vmatprep.subr.mxu0 0.0
    %3256 = vmatpush1.msra.mxu0 %v3219
    %3257 = vmatprep.subr.mxu0 0.0
    %3258 = vmatpush1.msra.mxu0 %v3220
    %3259 = vmatprep.subr.mxu0 0.0
    %3260 = vmatpush1.msra.mxu0 %v3221
    %3261 = vmatprep.subr.mxu0 0.0
    %3262 = vmatpush1.msra.mxu0 %v3222
    %3263 = vmatprep.subr.mxu0 0.0
    %3264 = vmatpush1.msra.mxu0 0.0
    %3265 = vmatprep.subr.mxu0 0.0
    %3266 = vmatpush1.msra.mxu0 0.0
    %3267 = vmatprep.subr.mxu0 0.0
    %3268 = vmatpush1.msra.mxu0 0.0
    %3269 = vmatprep.subr.mxu0 0.0
    %3270 = vmatpush1.msra.mxu0 0.0
    %3271 = vmatprep.subr.mxu0 0.0
    %3272 = vmatpush1.msra.mxu0 0.0
    %3273 = vmatprep.subr.mxu0 0.0
    %3274 = vmatpush1.msra.mxu0 0.0
    %3275 = vmatprep.subr.mxu0 0.0
    %3276 = vmatpush1.msra.mxu0 0.0
    %3277 = vmatprep.subr.mxu0 0.0
    %3278 = vmatpush1.msra.mxu0 0.0
    %3279 = vmatprep.subr.mxu0 0.0
    %3280 = vmatpush1.msra.mxu0 0.0
    %3281 = vmatprep.subr.mxu0 0.0
    %3282 = vmatpush1.msra.mxu0 0.0
    %3283 = vmatprep.subr.mxu0 0.0
    %3284 = vmatpush1.msra.mxu0 0.0
    %3285 = vmatprep.subr.mxu0 0.0
    %3286 = vmatpush1.msra.mxu0 0.0
    %3287 = vmatprep.subr.mxu0 0.0
    %3288 = vmatpush1.msra.mxu0 0.0
    %3289 = vmatprep.subr.mxu0 0.0
    %3290 = vmatpush1.msra.mxu0 0.0
    %3291 = vmatprep.subr.mxu0 0.0
    %3292 = vmatpush1.msra.mxu0 0.0
    %3293 = vmatprep.subr.mxu0 0.0
    %3294 = vmatpush1.msra.mxu0 0.0
    %3295 = vmatprep.mubr.f32.mxu0 0.0
    %3296 = vmatmul.mubr.f32.gmra.mrb[0].mxu0 %v3142
    %v3297 = vpop.f32.mrb[0].mxu0
    %v3298 = vadd.f32 %v3229, %v3297
    %v3299 = vpop.f32.mrb[0].mxu0
    %3300 = vmatprep.mubr.f32.mxu0 0.0
    %3301 = vmatmul.mubr.f32.gmra.mrb[0].mxu0 %v3143
    %v3302 = vpop.f32.mrb[0].mxu0
    %v3303 = vadd.f32 %v3229, %v3302
    %v3304 = vpop.f32.mrb[0].mxu0
    %3305 = vmatprep.mubr.f32.mxu0 0.0
    %3306 = vmatmul.mubr.f32.gmra.mrb[0].mxu0 %v3144
    %v3307 = vpop.f32.mrb[0].mxu0
    %v3308 = vadd.f32 %v3229, %v3307
    %v3309 = vpop.f32.mrb[0].mxu0
    %3310 = vmatprep.mubr.f32.mxu0 0.0
    %3311 = vmatmul.mubr.f32.gmra.mrb[0].mxu0 %v3145
    %v3312 = vpop.f32.mrb[0].mxu0
    %v3313 = vadd.f32 %v3229, %v3312
    %v3314 = vpop.f32.mrb[0].mxu0
    %3315 = vmatprep.mubr.f32.mxu0 0.0
    %3316 = vmatmul.mubr.f32.gmra.mrb[0].mxu0 %v3146
    %v3317 = vpop.f32.mrb[0].mxu0
    %v3318 = vadd.f32 %v3229, %v3317
    %v3319 = vpop.f32.mrb[0].mxu0
    %3320 = vmatprep.mubr.f32.mxu0 0.0
    %3321 = vmatmul.mubr.f32.gmra.mrb[0].mxu0 %v3147
    %v3322 = vpop.f32.mrb[0].mxu0
    %v3323 = vadd.f32 %v3229, %v3322
    %v3324 = vpop.f32.mrb[0].mxu0
    %3325 = vmatprep.mubr.f32.mxu0 0.0
    %3326 = vmatmul.mubr.f32.gmra.mrb[0].mxu0 %v3148
    %v3327 = vpop.f32.mrb[0].mxu0
    %v3328 = vadd.f32 %v3229, %v3327
    %v3329 = vpop.f32.mrb[0].mxu0
    %3330 = vmatprep.mubr.f32.mxu0 0.0
    %3331 = vmatmul.mubr.f32.gmra.mrb[0].mxu0 %v3149
    %v3332 = vpop.f32.mrb[0].mxu0
    %v3333 = vadd.f32 %v3229, %v3332
    %v3334 = vpop.f32.mrb[0].mxu0
    %3335 = vmatprep.mubr.f32.mxu0 0.0
    %3336 = vmatmul.mubr.f32.gmra.mrb[0].mxu0 %v3150
    %v3337 = vpop.f32.mrb[0].mxu0
    %v3338 = vadd.f32 %v3229, %v3337
    %v3339 = vpop.f32.mrb[0].mxu0
    %3340 = vmatprep.mubr.f32.mxu0 0.0
    %3341 = vmatmul.mubr.f32.gmra.mrb[0].mxu0 %v3151
    %v3342 = vpop.f32.mrb[0].mxu0
    %v3343 = vadd.f32 %v3229, %v3342
    %v3344 = vpop.f32.mrb[0].mxu0
    %3345 = vmatprep.mubr.f32.mxu0 0.0
    %3346 = vmatmul.mubr.f32.gmra.mrb[0].mxu0 %v3152
    %v3347 = vpop.f32.mrb[0].mxu0
    %v3348 = vadd.f32 %v3229, %v3347
    %v3349 = vpop.f32.mrb[0].mxu0
    %3350 = vmatprep.mubr.f32.mxu0 0.0
    %3351 = vmatmul.mubr.f32.gmra.mrb[0].mxu0 %v3153
    %v3352 = vpop.f32.mrb[0].mxu0
    %v3353 = vadd.f32 %v3229, %v3352
    %v3354 = vpop.f32.mrb[0].mxu0
    %3355 = vmatprep.mubr.f32.mxu0 0.0
    %3356 = vmatmul.mubr.f32.gmra.mrb[0].mxu0 %v3154
    %v3357 = vpop.f32.mrb[0].mxu0
    %v3358 = vadd.f32 %v3229, %v3357
    %v3359 = vpop.f32.mrb[0].mxu0
    %3360 = vmatprep.mubr.f32.mxu0 0.0
    %3361 = vmatmul.mubr.f32.gmra.mrb[0].mxu0 %v3155
    %v3362 = vpop.f32.mrb[0].mxu0
    %v3363 = vadd.f32 %v3229, %v3362
    %v3364 = vpop.f32.mrb[0].mxu0
    %3365 = vmatprep.mubr.f32.mxu0 0.0
    %3366 = vmatmul.mubr.f32.gmra.mrb[0].mxu0 %v3156
    %v3367 = vpop.f32.mrb[0].mxu0
    %v3368 = vadd.f32 %v3229, %v3367
    %v3369 = vpop.f32.mrb[0].mxu0
    %3370 = vmatprep.mubr.f32.mxu0 0.0
    %3371 = vmatmul.mubr.f32.gmra.mrb[0].mxu0 %v3157
    %v3372 = vpop.f32.mrb[0].mxu0
    %v3373 = vadd.f32 %v3229, %v3372
    %v3374 = vpop.f32.mrb[0].mxu0
    %3375 = vmatprep.mubr.f32.mxu0 0.0
    %3376 = vmatmul.mubr.f32.gmra.mrb[0].mxu0 %v3158
    %v3377 = vpop.f32.mrb[0].mxu0
    %v3378 = vadd.f32 %v3229, %v3377
    %v3379 = vpop.f32.mrb[0].mxu0
    %3380 = vmatprep.mubr.f32.mxu0 0.0
    %3381 = vmatmul.mubr.f32.gmra.mrb[0].mxu0 %v3159
    %v3382 = vpop.f32.mrb[0].mxu0
    %v3383 = vadd.f32 %v3229, %v3382
    %v3384 = vpop.f32.mrb[0].mxu0
    %3385 = vmatprep.mubr.f32.mxu0 0.0
    %3386 = vmatmul.mubr.f32.gmra.mrb[0].mxu0 %v3160
    %v3387 = vpop.f32.mrb[0].mxu0
    %v3388 = vadd.f32 %v3229, %v3387
    %v3389 = vpop.f32.mrb[0].mxu0
    %3390 = vmatprep.mubr.f32.mxu0 0.0
    %3391 = vmatmul.mubr.f32.gmra.mrb[0].mxu0 %v3161
    %v3392 = vpop.f32.mrb[0].mxu0
    %v3393 = vadd.f32 %v3229, %v3392
    %v3394 = vpop.f32.mrb[0].mxu0
    %3395 = vmatprep.mubr.f32.mxu0 0.0
    %3396 = vmatmul.mubr.f32.gmra.mrb[0].mxu0 %v3162
    %v3397 = vpop.f32.mrb[0].mxu0
    %v3398 = vadd.f32 %v3229, %v3397
    %v3399 = vpop.f32.mrb[0].mxu0
    %3400 = vmatprep.mubr.f32.mxu0 0.0
    %3401 = vmatmul.mubr.f32.gmra.mrb[0].mxu0 %v3163
    %v3402 = vpop.f32.mrb[0].mxu0
    %v3403 = vadd.f32 %v3229, %v3402
    %v3404 = vpop.f32.mrb[0].mxu0
    %3405 = vmatprep.mubr.f32.mxu0 0.0
    %3406 = vmatmul.mubr.f32.gmra.mrb[0].mxu0 %v3164
    %v3407 = vpop.f32.mrb[0].mxu0
    %v3408 = vadd.f32 %v3229, %v3407
    %v3409 = vpop.f32.mrb[0].mxu0
    %3410 = vmatprep.mubr.f32.mxu0 0.0
    %3411 = vmatmul.mubr.f32.gmra.mrb[0].mxu0 %v3165
    %v3412 = vpop.f32.mrb[0].mxu0
    %v3413 = vadd.f32 %v3229, %v3412
    %v3414 = vpop.f32.mrb[0].mxu0
    %3415 = vmatprep.mubr.f32.mxu0 0.0
    %3416 = vmatmul.mubr.f32.gmra.mrb[0].mxu0 %v3166
    %v3417 = vpop.f32.mrb[0].mxu0
    %v3418 = vadd.f32 %v3229, %v3417
    %v3419 = vpop.f32.mrb[0].mxu0
    %3420 = vmatprep.mubr.f32.mxu0 0.0
    %3421 = vmatmul.mubr.f32.gmra.mrb[0].mxu0 %v3167
    %v3422 = vpop.f32.mrb[0].mxu0
    %v3423 = vadd.f32 %v3229, %v3422
    %v3424 = vpop.f32.mrb[0].mxu0
    %3425 = vmatprep.mubr.f32.mxu0 0.0
    %3426 = vmatmul.mubr.f32.gmra.mrb[0].mxu0 %v3168
    %v3427 = vpop.f32.mrb[0].mxu0
    %v3428 = vadd.f32 %v3229, %v3427
    %v3429 = vpop.f32.mrb[0].mxu0
    %3430 = vmatprep.mubr.f32.mxu0 0.0
    %3431 = vmatmul.mubr.f32.gmra.mrb[0].mxu0 %v3169
    %v3432 = vpop.f32.mrb[0].mxu0
    %v3433 = vadd.f32 %v3229, %v3432
    %v3434 = vpop.f32.mrb[0].mxu0
    %3435 = vmatprep.mubr.f32.mxu0 0.0
    %3436 = vmatmul.mubr.f32.gmra.mrb[0].mxu0 %v3170
    %v3437 = vpop.f32.mrb[0].mxu0
    %v3438 = vadd.f32 %v3229, %v3437
    %v3439 = vpop.f32.mrb[0].mxu0
    %3440 = vmatprep.mubr.f32.mxu0 0.0
    %3441 = vmatmul.mubr.f32.gmra.mrb[0].mxu0 %v3171
    %v3442 = vpop.f32.mrb[0].mxu0
    %v3443 = vadd.f32 %v3229, %v3442
    %v3444 = vpop.f32.mrb[0].mxu0
    %3445 = vmatprep.mubr.f32.mxu0 0.0
    %3446 = vmatmul.mubr.f32.gmra.mrb[0].mxu0 %v3172
    %v3447 = vpop.f32.mrb[0].mxu0
    %v3448 = vadd.f32 %v3229, %v3447
    %v3449 = vpop.f32.mrb[0].mxu0
    %3450 = vmatprep.mubr.f32.mxu0 0.0
    %3451 = vmatmul.mubr.f32.gmra.mrb[0].mxu0 %v3173
    %v3452 = vpop.f32.mrb[0].mxu0
    %v3453 = vadd.f32 %v3229, %v3452
    %v3454 = vpop.f32.mrb[0].mxu0
    %3455 = vmatprep.mubr.f32.mxu0 0.0
    %3456 = vmatmul.mubr.f32.gmra.mrb[0].mxu0 %v3174
    %v3457 = vpop.f32.mrb[0].mxu0
    %v3458 = vadd.f32 %v3229, %v3457
    %v3459 = vpop.f32.mrb[0].mxu0
    %3460 = vmatprep.mubr.f32.mxu0 0.0
    %3461 = vmatmul.mubr.f32.gmra.mrb[0].mxu0 %v3175
    %v3462 = vpop.f32.mrb[0].mxu0
    %v3463 = vadd.f32 %v3229, %v3462
    %v3464 = vpop.f32.mrb[0].mxu0
    %3465 = vmatprep.mubr.f32.mxu0 0.0
    %3466 = vmatmul.mubr.f32.gmra.mrb[0].mxu0 %v3176
    %v3467 = vpop.f32.mrb[0].mxu0
    %v3468 = vadd.f32 %v3229, %v3467
    %v3469 = vpop.f32.mrb[0].mxu0
    %3470 = vmatprep.mubr.f32.mxu0 0.0
    %3471 = vmatmul.mubr.f32.gmra.mrb[0].mxu0 %v3177
    %v3472 = vpop.f32.mrb[0].mxu0
    %v3473 = vadd.f32 %v3229, %v3472
    %v3474 = vpop.f32.mrb[0].mxu0
    %3475 = vmatprep.mubr.f32.mxu0 0.0
    %3476 = vmatmul.mubr.f32.gmra.mrb[0].mxu0 %v3178
    %v3477 = vpop.f32.mrb[0].mxu0
    %v3478 = vadd.f32 %v3229, %v3477
    %v3479 = vpop.f32.mrb[0].mxu0
    %3480 = vmatprep.mubr.f32.mxu0 0.0
    %3481 = vmatmul.mubr.f32.gmra.mrb[0].mxu0 %v3179
    %v3482 = vpop.f32.mrb[0].mxu0
    %v3483 = vadd.f32 %v3229, %v3482
    %v3484 = vpop.f32.mrb[0].mxu0
    %3485 = vmatprep.mubr.f32.mxu0 0.0
    %3486 = vmatmul.mubr.f32.gmra.mrb[0].mxu0 %v3180
    %v3487 = vpop.f32.mrb[0].mxu0
    %v3488 = vadd.f32 %v3229, %v3487
    %v3489 = vpop.f32.mrb[0].mxu0
    %3490 = vmatprep.mubr.f32.mxu0 0.0
    %3491 = vmatmul.mubr.f32.gmra.mrb[0].mxu0 %v3181
    %v3492 = vpop.f32.mrb[0].mxu0
    %v3493 = vadd.f32 %v3229, %v3492
    %v3494 = vpop.f32.mrb[0].mxu0
    %3495 = vmatprep.mubr.f32.mxu0 0.0
    %3496 = vmatmul.mubr.f32.gmra.mrb[0].mxu0 %v3182
    %v3497 = vpop.f32.mrb[0].mxu0
    %v3498 = vadd.f32 %v3229, %v3497
    %v3499 = vpop.f32.mrb[0].mxu0
    %3500 = vmatprep.mubr.f32.mxu0 0.0
    %3501 = vmatmul.mubr.f32.gmra.mrb[0].mxu0 %v3183
    %v3502 = vpop.f32.mrb[0].mxu0
    %v3503 = vadd.f32 %v3229, %v3502
    %v3504 = vpop.f32.mrb[0].mxu0
    %3505 = vmatprep.mubr.f32.mxu0 0.0
    %3506 = vmatmul.mubr.f32.gmra.mrb[0].mxu0 %v3184
    %v3507 = vpop.f32.mrb[0].mxu0
    %v3508 = vadd.f32 %v3229, %v3507
    %v3509 = vpop.f32.mrb[0].mxu0
    %3510 = vmatprep.mubr.f32.mxu0 0.0
    %3511 = vmatmul.mubr.f32.gmra.mrb[0].mxu0 %v3185
    %v3512 = vpop.f32.mrb[0].mxu0
    %v3513 = vadd.f32 %v3229, %v3512
    %v3514 = vpop.f32.mrb[0].mxu0
    %3515 = vmatprep.mubr.f32.mxu0 0.0
    %3516 = vmatmul.mubr.f32.gmra.mrb[0].mxu0 %v3186
    %v3517 = vpop.f32.mrb[0].mxu0
    %v3518 = vadd.f32 %v3229, %v3517
    %v3519 = vpop.f32.mrb[0].mxu0
    %3520 = vmatprep.mubr.f32.mxu0 0.0
    %3521 = vmatmul.mubr.f32.gmra.mrb[0].mxu0 %v3187
    %v3522 = vpop.f32.mrb[0].mxu0
    %v3523 = vadd.f32 %v3229, %v3522
    %v3524 = vpop.f32.mrb[0].mxu0
    %3525 = vmatprep.mubr.f32.mxu0 0.0
    %3526 = vmatmul.mubr.f32.gmra.mrb[0].mxu0 %v3188
    %v3527 = vpop.f32.mrb[0].mxu0
    %v3528 = vadd.f32 %v3229, %v3527
    %v3529 = vpop.f32.mrb[0].mxu0
    %3530 = vmatprep.mubr.f32.mxu0 0.0
    %3531 = vmatmul.mubr.f32.gmra.mrb[0].mxu0 %v3189
    %v3532 = vpop.f32.mrb[0].mxu0
    %v3533 = vadd.f32 %v3229, %v3532
    %v3534 = vpop.f32.mrb[0].mxu0
    %3535 = vmatprep.mubr.f32.mxu0 0.0
    %3536 = vmatmul.mubr.f32.gmra.mrb[0].mxu0 %v3190
    %v3537 = vpop.f32.mrb[0].mxu0
    %v3538 = vadd.f32 %v3229, %v3537
    %v3539 = vpop.f32.mrb[0].mxu0
    %3540 = vmatprep.mubr.f32.mxu0 0.0
    %3541 = vmatmul.mubr.f32.gmra.mrb[0].mxu0 %v3191
    %v3542 = vpop.f32.mrb[0].mxu0
    %v3543 = vadd.f32 %v3229, %v3542
    %v3544 = vpop.f32.mrb[0].mxu0
    %3545 = vmatprep.mubr.f32.mxu0 0.0
    %3546 = vmatmul.mubr.f32.gmra.mrb[0].mxu0 %v3192
    %v3547 = vpop.f32.mrb[0].mxu0
    %v3548 = vadd.f32 %v3229, %v3547
    %v3549 = vpop.f32.mrb[0].mxu0
    %3550 = vmatprep.mubr.f32.mxu0 0.0
    %3551 = vmatmul.mubr.f32.gmra.mrb[0].mxu0 %v3193
    %v3552 = vpop.f32.mrb[0].mxu0
    %v3553 = vadd.f32 %v3229, %v3552
    %v3554 = vpop.f32.mrb[0].mxu0
    %3555 = vmatprep.mubr.f32.mxu0 0.0
    %3556 = vmatmul.mubr.f32.gmra.mrb[0].mxu0 %v3194
    %v3557 = vpop.f32.mrb[0].mxu0
    %v3558 = vadd.f32 %v3229, %v3557
    %v3559 = vpop.f32.mrb[0].mxu0
    %3560 = vmatprep.mubr.f32.mxu0 0.0
    %3561 = vmatmul.mubr.f32.gmra.mrb[0].mxu0 %v3195
    %v3562 = vpop.f32.mrb[0].mxu0
    %v3563 = vadd.f32 %v3229, %v3562
    %v3564 = vpop.f32.mrb[0].mxu0
    %3565 = vmatprep.mubr.f32.mxu0 0.0
    %3566 = vmatmul.mubr.f32.gmra.mrb[0].mxu0 %v3196
    %v3567 = vpop.f32.mrb[0].mxu0
    %v3568 = vadd.f32 %v3229, %v3567
    %v3569 = vpop.f32.mrb[0].mxu0
    %3570 = vmatprep.mubr.f32.mxu0 0.0
    %3571 = vmatmul.mubr.f32.gmra.mrb[0].mxu0 %v3197
    %v3572 = vpop.f32.mrb[0].mxu0
    %v3573 = vadd.f32 %v3229, %v3572
    %v3574 = vpop.f32.mrb[0].mxu0
    %3575 = vmatprep.mubr.f32.mxu0 0.0
    %3576 = vmatmul.mubr.f32.gmra.mrb[0].mxu0 %v3198
    %v3577 = vpop.f32.mrb[0].mxu0
    %v3578 = vadd.f32 %v3229, %v3577
    %v3579 = vpop.f32.mrb[0].mxu0
    %3580 = vmatprep.mubr.f32.mxu0 0.0
    %3581 = vmatmul.mubr.f32.gmra.mrb[0].mxu0 %v3199
    %v3582 = vpop.f32.mrb[0].mxu0
    %v3583 = vadd.f32 %v3229, %v3582
    %v3584 = vpop.f32.mrb[0].mxu0
    %3585 = vmatprep.mubr.f32.mxu0 0.0
    %3586 = vmatmul.mubr.f32.gmra.mrb[0].mxu0 %v3200
    %v3587 = vpop.f32.mrb[0].mxu0
    %v3588 = vadd.f32 %v3229, %v3587
    %v3589 = vpop.f32.mrb[0].mxu0
    %3590 = vmatprep.mubr.f32.mxu0 0.0
    %3591 = vmatmul.mubr.f32.gmra.mrb[0].mxu0 %v3201
    %v3592 = vpop.f32.mrb[0].mxu0
    %v3593 = vadd.f32 %v3229, %v3592
    %v3594 = vpop.f32.mrb[0].mxu0
    %3595 = vmatprep.mubr.f32.mxu0 0.0
    %3596 = vmatmul.mubr.f32.gmra.mrb[0].mxu0 %v3202
    %v3597 = vpop.f32.mrb[0].mxu0
    %v3598 = vadd.f32 %v3229, %v3597
    %v3599 = vpop.f32.mrb[0].mxu0
    %3600 = vmatprep.mubr.f32.mxu0 0.0
    %3601 = vmatmul.mubr.f32.gmra.mrb[0].mxu0 %v3203
    %v3602 = vpop.f32.mrb[0].mxu0
    %v3603 = vadd.f32 %v3229, %v3602
    %v3604 = vpop.f32.mrb[0].mxu0
    %3605 = vmatprep.mubr.f32.mxu0 0.0
    %3606 = vmatmul.mubr.f32.gmra.mrb[0].mxu0 %v3204
    %v3607 = vpop.f32.mrb[0].mxu0
    %v3608 = vadd.f32 %v3229, %v3607
    %v3609 = vpop.f32.mrb[0].mxu0
    %3610 = vmatprep.mubr.f32.mxu0 0.0
    %3611 = vmatmul.mubr.f32.gmra.mrb[0].mxu0 %v3205
    %v3612 = vpop.f32.mrb[0].mxu0
    %v3613 = vadd.f32 %v3229, %v3612
    %v3614 = vpop.f32.mrb[0].mxu0
    %3615 = vdwg.mxu0
    %v3616 = vmul.f32 %v3298, 0.5
    %v3617 = vmul.f32 %v3303, 0.5
    %v3618 = vmul.f32 %v3308, 0.5
    %v3619 = vmul.f32 %v3313, 0.5
    %v3620 = vmul.f32 %v3318, 0.5
    %v3621 = vmul.f32 %v3323, 0.5
    %v3622 = vmul.f32 %v3328, 0.5
    %v3623 = vmul.f32 %v3333, 0.5
    %v3624 = vmul.f32 %v3338, 0.5
    %v3625 = vmul.f32 %v3343, 0.5
    %v3626 = vmul.f32 %v3348, 0.5
    %v3627 = vmul.f32 %v3353, 0.5
    %v3628 = vmul.f32 %v3358, 0.5
    %v3629 = vmul.f32 %v3363, 0.5
    %v3630 = vmul.f32 %v3368, 0.5
    %v3631 = vmul.f32 %v3373, 0.5
    %v3632 = vmul.f32 %v3378, 0.5
    %v3633 = vmul.f32 %v3383, 0.5
    %v3634 = vmul.f32 %v3388, 0.5
    %v3635 = vmul.f32 %v3393, 0.5
    %v3636 = vmul.f32 %v3398, 0.5
    %v3637 = vmul.f32 %v3403, 0.5
    %v3638 = vmul.f32 %v3408, 0.5
    %v3639 = vmul.f32 %v3413, 0.5
    %v3640 = vmul.f32 %v3418, 0.5
    %v3641 = vmul.f32 %v3423, 0.5
    %v3642 = vmul.f32 %v3428, 0.5
    %v3643 = vmul.f32 %v3433, 0.5
    %v3644 = vmul.f32 %v3438, 0.5
    %v3645 = vmul.f32 %v3443, 0.5
    %v3646 = vmul.f32 %v3448, 0.5
    %v3647 = vmul.f32 %v3453, 0.5
    %v3648 = vmul.f32 %v3458, 0.5
    %v3649 = vmul.f32 %v3463, 0.5
    %v3650 = vmul.f32 %v3468, 0.5
    %v3651 = vmul.f32 %v3473, 0.5
    %v3652 = vmul.f32 %v3478, 0.5
    %v3653 = vmul.f32 %v3483, 0.5
    %v3654 = vmul.f32 %v3488, 0.5
    %v3655 = vmul.f32 %v3493, 0.5
    %v3656 = vmul.f32 %v3498, 0.5
    %v3657 = vmul.f32 %v3503, 0.5
    %v3658 = vmul.f32 %v3508, 0.5
    %v3659 = vmul.f32 %v3513, 0.5
    %v3660 = vmul.f32 %v3518, 0.5
    %v3661 = vmul.f32 %v3523, 0.5
    %v3662 = vmul.f32 %v3528, 0.5
    %v3663 = vmul.f32 %v3533, 0.5
    %v3664 = vmul.f32 %v3538, 0.5
    %v3665 = vmul.f32 %v3543, 0.5
    %v3666 = vmul.f32 %v3548, 0.5
    %v3667 = vmul.f32 %v3553, 0.5
    %v3668 = vmul.f32 %v3558, 0.5
    %v3669 = vmul.f32 %v3563, 0.5
    %v3670 = vmul.f32 %v3568, 0.5
    %v3671 = vmul.f32 %v3573, 0.5
    %v3672 = vmul.f32 %v3578, 0.5
    %v3673 = vmul.f32 %v3583, 0.5
    %v3674 = vmul.f32 %v3588, 0.5
    %v3675 = vmul.f32 %v3593, 0.5
    %v3676 = vmul.f32 %v3598, 0.5
    %v3677 = vmul.f32 %v3603, 0.5
    %v3678 = vmul.f32 %v3608, 0.5
    %v3679 = vmul.f32 %v3613, 0.5
    %v3680 = vtanh.pop %v3616
    %v3681 = vtanh.pop %v3617
    %v3682 = vtanh.pop %v3618
    %v3683 = vtanh.pop %v3619
    %v3684 = vtanh.pop %v3620
    %v3685 = vtanh.pop %v3621
    %v3686 = vtanh.pop %v3622
    %v3687 = vtanh.pop %v3623
    %v3688 = vtanh.pop %v3624
    %v3689 = vtanh.pop %v3625
    %v3690 = vtanh.pop %v3626
    %v3691 = vtanh.pop %v3627
    %v3692 = vtanh.pop %v3628
    %v3693 = vtanh.pop %v3629
    %v3694 = vtanh.pop %v3630
    %v3695 = vtanh.pop %v3631
    %v3696 = vtanh.pop %v3632
    %v3697 = vtanh.pop %v3633
    %v3698 = vtanh.pop %v3634
    %v3699 = vtanh.pop %v3635
    %v3700 = vtanh.pop %v3636
    %v3701 = vtanh.pop %v3637
    %v3702 = vtanh.pop %v3638
    %v3703 = vtanh.pop %v3639
    %v3704 = vtanh.pop %v3640
    %v3705 = vtanh.pop %v3641
    %v3706 = vtanh.pop %v3642
    %v3707 = vtanh.pop %v3643
    %v3708 = vtanh.pop %v3644
    %v3709 = vtanh.pop %v3645
    %v3710 = vtanh.pop %v3646
    %v3711 = vtanh.pop %v3647
    %v3712 = vtanh.pop %v3648
    %v3713 = vtanh.pop %v3649
    %v3714 = vtanh.pop %v3650
    %v3715 = vtanh.pop %v3651
    %v3716 = vtanh.pop %v3652
    %v3717 = vtanh.pop %v3653
    %v3718 = vtanh.pop %v3654
    %v3719 = vtanh.pop %v3655
    %v3720 = vtanh.pop %v3656
    %v3721 = vtanh.pop %v3657
    %v3722 = vtanh.pop %v3658
    %v3723 = vtanh.pop %v3659
    %v3724 = vtanh.pop %v3660
    %v3725 = vtanh.pop %v3661
    %v3726 = vtanh.pop %v3662
    %v3727 = vtanh.pop %v3663
    %v3728 = vtanh.pop %v3664
    %v3729 = vtanh.pop %v3665
    %v3730 = vtanh.pop %v3666
    %v3731 = vtanh.pop %v3667
    %v3732 = vtanh.pop %v3668
    %v3733 = vtanh.pop %v3669
    %v3734 = vtanh.pop %v3670
    %v3735 = vtanh.pop %v3671
    %v3736 = vtanh.pop %v3672
    %v3737 = vtanh.pop %v3673
    %v3738 = vtanh.pop %v3674
    %v3739 = vtanh.pop %v3675
    %v3740 = vtanh.pop %v3676
    %v3741 = vtanh.pop %v3677
    %v3742 = vtanh.pop %v3678
    %v3743 = vtanh.pop %v3679
    %v3744 = vadd.f32 %v3680, 1.0
    %v3745 = vadd.f32 %v3681, 1.0
    %v3746 = vadd.f32 %v3682, 1.0
    %v3747 = vadd.f32 %v3683, 1.0
    %v3748 = vadd.f32 %v3684, 1.0
    %v3749 = vadd.f32 %v3685, 1.0
    %v3750 = vadd.f32 %v3686, 1.0
    %v3751 = vadd.f32 %v3687, 1.0
    %v3752 = vadd.f32 %v3688, 1.0
    %v3753 = vadd.f32 %v3689, 1.0
    %v3754 = vadd.f32 %v3690, 1.0
    %v3755 = vadd.f32 %v3691, 1.0
    %v3756 = vadd.f32 %v3692, 1.0
    %v3757 = vadd.f32 %v3693, 1.0
    %v3758 = vadd.f32 %v3694, 1.0
    %v3759 = vadd.f32 %v3695, 1.0
    %v3760 = vadd.f32 %v3696, 1.0
    %v3761 = vadd.f32 %v3697, 1.0
    %v3762 = vadd.f32 %v3698, 1.0
    %v3763 = vadd.f32 %v3699, 1.0
    %v3764 = vadd.f32 %v3700, 1.0
    %v3765 = vadd.f32 %v3701, 1.0
    %v3766 = vadd.f32 %v3702, 1.0
    %v3767 = vadd.f32 %v3703, 1.0
    %v3768 = vadd.f32 %v3704, 1.0
    %v3769 = vadd.f32 %v3705, 1.0
    %v3770 = vadd.f32 %v3706, 1.0
    %v3771 = vadd.f32 %v3707, 1.0
    %v3772 = vadd.f32 %v3708, 1.0
    %v3773 = vadd.f32 %v3709, 1.0
    %v3774 = vadd.f32 %v3710, 1.0
    %v3775 = vadd.f32 %v3711, 1.0
    %v3776 = vadd.f32 %v3712, 1.0
    %v3777 = vadd.f32 %v3713, 1.0
    %v3778 = vadd.f32 %v3714, 1.0
    %v3779 = vadd.f32 %v3715, 1.0
    %v3780 = vadd.f32 %v3716, 1.0
    %v3781 = vadd.f32 %v3717, 1.0
    %v3782 = vadd.f32 %v3718, 1.0
    %v3783 = vadd.f32 %v3719, 1.0
    %v3784 = vadd.f32 %v3720, 1.0
    %v3785 = vadd.f32 %v3721, 1.0
    %v3786 = vadd.f32 %v3722, 1.0
    %v3787 = vadd.f32 %v3723, 1.0
    %v3788 = vadd.f32 %v3724, 1.0
    %v3789 = vadd.f32 %v3725, 1.0
    %v3790 = vadd.f32 %v3726, 1.0
    %v3791 = vadd.f32 %v3727, 1.0
    %v3792 = vadd.f32 %v3728, 1.0
    %v3793 = vadd.f32 %v3729, 1.0
    %v3794 = vadd.f32 %v3730, 1.0
    %v3795 = vadd.f32 %v3731, 1.0
    %v3796 = vadd.f32 %v3732, 1.0
    %v3797 = vadd.f32 %v3733, 1.0
    %v3798 = vadd.f32 %v3734, 1.0
    %v3799 = vadd.f32 %v3735, 1.0
    %v3800 = vadd.f32 %v3736, 1.0
    %v3801 = vadd.f32 %v3737, 1.0
    %v3802 = vadd.f32 %v3738, 1.0
    %v3803 = vadd.f32 %v3739, 1.0
    %v3804 = vadd.f32 %v3740, 1.0
    %v3805 = vadd.f32 %v3741, 1.0
    %v3806 = vadd.f32 %v3742, 1.0
    %v3807 = vadd.f32 %v3743, 1.0
    %v3808 = vmul.f32 %v3744, 0.5
    %v3809 = vmul.f32 %v3745, 0.5
    %v3810 = vmul.f32 %v3746, 0.5
    %v3811 = vmul.f32 %v3747, 0.5
    %v3812 = vmul.f32 %v3748, 0.5
    %v3813 = vmul.f32 %v3749, 0.5
    %v3814 = vmul.f32 %v3750, 0.5
    %v3815 = vmul.f32 %v3751, 0.5
    %v3816 = vmul.f32 %v3752, 0.5
    %v3817 = vmul.f32 %v3753, 0.5
    %v3818 = vmul.f32 %v3754, 0.5
    %v3819 = vmul.f32 %v3755, 0.5
    %v3820 = vmul.f32 %v3756, 0.5
    %v3821 = vmul.f32 %v3757, 0.5
    %v3822 = vmul.f32 %v3758, 0.5
    %v3823 = vmul.f32 %v3759, 0.5
    %v3824 = vmul.f32 %v3760, 0.5
    %v3825 = vmul.f32 %v3761, 0.5
    %v3826 = vmul.f32 %v3762, 0.5
    %v3827 = vmul.f32 %v3763, 0.5
    %v3828 = vmul.f32 %v3764, 0.5
    %v3829 = vmul.f32 %v3765, 0.5
    %v3830 = vmul.f32 %v3766, 0.5
    %v3831 = vmul.f32 %v3767, 0.5
    %v3832 = vmul.f32 %v3768, 0.5
    %v3833 = vmul.f32 %v3769, 0.5
    %v3834 = vmul.f32 %v3770, 0.5
    %v3835 = vmul.f32 %v3771, 0.5
    %v3836 = vmul.f32 %v3772, 0.5
    %v3837 = vmul.f32 %v3773, 0.5
    %v3838 = vmul.f32 %v3774, 0.5
    %v3839 = vmul.f32 %v3775, 0.5
    %v3840 = vmul.f32 %v3776, 0.5
    %v3841 = vmul.f32 %v3777, 0.5
    %v3842 = vmul.f32 %v3778, 0.5
    %v3843 = vmul.f32 %v3779, 0.5
    %v3844 = vmul.f32 %v3780, 0.5
    %v3845 = vmul.f32 %v3781, 0.5
    %v3846 = vmul.f32 %v3782, 0.5
    %v3847 = vmul.f32 %v3783, 0.5
    %v3848 = vmul.f32 %v3784, 0.5
    %v3849 = vmul.f32 %v3785, 0.5
    %v3850 = vmul.f32 %v3786, 0.5
    %v3851 = vmul.f32 %v3787, 0.5
    %v3852 = vmul.f32 %v3788, 0.5
    %v3853 = vmul.f32 %v3789, 0.5
    %v3854 = vmul.f32 %v3790, 0.5
    %v3855 = vmul.f32 %v3791, 0.5
    %v3856 = vmul.f32 %v3792, 0.5
    %v3857 = vmul.f32 %v3793, 0.5
    %v3858 = vmul.f32 %v3794, 0.5
    %v3859 = vmul.f32 %v3795, 0.5
    %v3860 = vmul.f32 %v3796, 0.5
    %v3861 = vmul.f32 %v3797, 0.5
    %v3862 = vmul.f32 %v3798, 0.5
    %v3863 = vmul.f32 %v3799, 0.5
    %v3864 = vmul.f32 %v3800, 0.5
    %v3865 = vmul.f32 %v3801, 0.5
    %v3866 = vmul.f32 %v3802, 0.5
    %v3867 = vmul.f32 %v3803, 0.5
    %v3868 = vmul.f32 %v3804, 0.5
    %v3869 = vmul.f32 %v3805, 0.5
    %v3870 = vmul.f32 %v3806, 0.5
    %v3871 = vmul.f32 %v3807, 0.5
    %v3872 = vmul.f32 %v3298, %v3808
    %v3873 = vmul.f32 %v3303, %v3809
    %v3874 = vmul.f32 %v3308, %v3810
    %v3875 = vmul.f32 %v3313, %v3811
    %v3876 = vmul.f32 %v3318, %v3812
    %v3877 = vmul.f32 %v3323, %v3813
    %v3878 = vmul.f32 %v3328, %v3814
    %v3879 = vmul.f32 %v3333, %v3815
    %v3880 = vmul.f32 %v3338, %v3816
    %v3881 = vmul.f32 %v3343, %v3817
    %v3882 = vmul.f32 %v3348, %v3818
    %v3883 = vmul.f32 %v3353, %v3819
    %v3884 = vmul.f32 %v3358, %v3820
    %v3885 = vmul.f32 %v3363, %v3821
    %v3886 = vmul.f32 %v3368, %v3822
    %v3887 = vmul.f32 %v3373, %v3823
    %v3888 = vmul.f32 %v3378, %v3824
    %v3889 = vmul.f32 %v3383, %v3825
    %v3890 = vmul.f32 %v3388, %v3826
    %v3891 = vmul.f32 %v3393, %v3827
    %v3892 = vmul.f32 %v3398, %v3828
    %v3893 = vmul.f32 %v3403, %v3829
    %v3894 = vmul.f32 %v3408, %v3830
    %v3895 = vmul.f32 %v3413, %v3831
    %v3896 = vmul.f32 %v3418, %v3832
    %v3897 = vmul.f32 %v3423, %v3833
    %v3898 = vmul.f32 %v3428, %v3834
    %v3899 = vmul.f32 %v3433, %v3835
    %v3900 = vmul.f32 %v3438, %v3836
    %v3901 = vmul.f32 %v3443, %v3837
    %v3902 = vmul.f32 %v3448, %v3838
    %v3903 = vmul.f32 %v3453, %v3839
    %v3904 = vmul.f32 %v3458, %v3840
    %v3905 = vmul.f32 %v3463, %v3841
    %v3906 = vmul.f32 %v3468, %v3842
    %v3907 = vmul.f32 %v3473, %v3843
    %v3908 = vmul.f32 %v3478, %v3844
    %v3909 = vmul.f32 %v3483, %v3845
    %v3910 = vmul.f32 %v3488, %v3846
    %v3911 = vmul.f32 %v3493, %v3847
    %v3912 = vmul.f32 %v3498, %v3848
    %v3913 = vmul.f32 %v3503, %v3849
    %v3914 = vmul.f32 %v3508, %v3850
    %v3915 = vmul.f32 %v3513, %v3851
    %v3916 = vmul.f32 %v3518, %v3852
    %v3917 = vmul.f32 %v3523, %v3853
    %v3918 = vmul.f32 %v3528, %v3854
    %v3919 = vmul.f32 %v3533, %v3855
    %v3920 = vmul.f32 %v3538, %v3856
    %v3921 = vmul.f32 %v3543, %v3857
    %v3922 = vmul.f32 %v3548, %v3858
    %v3923 = vmul.f32 %v3553, %v3859
    %v3924 = vmul.f32 %v3558, %v3860
    %v3925 = vmul.f32 %v3563, %v3861
    %v3926 = vmul.f32 %v3568, %v3862
    %v3927 = vmul.f32 %v3573, %v3863
    %v3928 = vmul.f32 %v3578, %v3864
    %v3929 = vmul.f32 %v3583, %v3865
    %v3930 = vmul.f32 %v3588, %v3866
    %v3931 = vmul.f32 %v3593, %v3867
    %v3932 = vmul.f32 %v3598, %v3868
    %v3933 = vmul.f32 %v3603, %v3869
    %v3934 = vmul.f32 %v3608, %v3870
    %v3935 = vmul.f32 %v3613, %v3871
    %s3936 = scalar_lea.vmem [#allocation3], 512
    %v3937 = vld [vmem:[%s3936] sm:$0xff]
    %v3938 = vld [vmem:[%s3936 + $0x8] sm:$0xff]
    %v3939 = vld [vmem:[%s3936 + $0x10] sm:$0xff]
    %v3940 = vld [vmem:[%s3936 + $0x18] sm:$0xff]
    %v3941 = vld [vmem:[%s3936 + $0x20] sm:$0xff]
    %v3942 = vld [vmem:[%s3936 + $0x28] sm:$0xff]
    %v3943 = vld [vmem:[%s3936 + $0x30] sm:$0xff]
    %v3944 = vld [vmem:[%s3936 + $0x38] sm:$0xff]
    %v3945 = vld [vmem:[%s3936 + $0x40] sm:$0xff]
    %v3946 = vld [vmem:[%s3936 + $0x48] sm:$0xff]
    %v3947 = vld [vmem:[%s3936 + $0x50] sm:$0xff]
    %v3948 = vld [vmem:[%s3936 + $0x58] sm:$0xff]
    %v3949 = vld [vmem:[%s3936 + $0x60] sm:$0xff]
    %v3950 = vld [vmem:[%s3936 + $0x68] sm:$0xff]
    %v3951 = vld [vmem:[%s3936 + $0x70] sm:$0xff]
    %v3952 = vld [vmem:[%s3936 + $0x78] sm:$0xff]
    %s3953 = scalar_lea.vmem %s5, 4
    %v3954 = vld [vmem:[%s3953] sm:$0x1]
    %v3956 = vlaneseq
    %v3957 = vshrl.u32 %v3956, 7
    %v3958 = vsub.s32 0, %v3957
    %v3959 = vrot.slane %v3954, %v3958
    %3961 = vmatprep.subr.mxu0 0.0
    %3962 = vmatpush1.msra.mxu0 %v3937
    %3963 = vmatprep.subr.mxu0 0.0
    %3964 = vmatpush1.msra.mxu0 %v3938
    %3965 = vmatprep.subr.mxu0 0.0
    %3966 = vmatpush1.msra.mxu0 %v3939
    %3967 = vmatprep.subr.mxu0 0.0
    %3968 = vmatpush1.msra.mxu0 %v3940
    %3969 = vmatprep.subr.mxu0 0.0
    %3970 = vmatpush1.msra.mxu0 %v3941
    %3971 = vmatprep.subr.mxu0 0.0
    %3972 = vmatpush1.msra.mxu0 %v3942
    %3973 = vmatprep.subr.mxu0 0.0
    %3974 = vmatpush1.msra.mxu0 %v3943
    %3975 = vmatprep.subr.mxu0 0.0
    %3976 = vmatpush1.msra.mxu0 %v3944
    %3977 = vmatprep.subr.mxu0 0.0
    %3978 = vmatpush1.msra.mxu0 %v3945
    %3979 = vmatprep.subr.mxu0 0.0
    %3980 = vmatpush1.msra.mxu0 %v3946
    %3981 = vmatprep.subr.mxu0 0.0
    %3982 = vmatpush1.msra.mxu0 %v3947
    %3983 = vmatprep.subr.mxu0 0.0
    %3984 = vmatpush1.msra.mxu0 %v3948
    %3985 = vmatprep.subr.mxu0 0.0
    %3986 = vmatpush1.msra.mxu0 %v3949
    %3987 = vmatprep.subr.mxu0 0.0
    %3988 = vmatpush1.msra.mxu0 %v3950
    %3989 = vmatprep.subr.mxu0 0.0
    %3990 = vmatpush1.msra.mxu0 %v3951
    %3991 = vmatprep.subr.mxu0 0.0
    %3992 = vmatpush1.msra.mxu0 %v3952
    %3993 = vmatprep.subr.mxu0 0.0
    %3994 = vmatpush1.msra.mxu0 0.0
    %3995 = vmatprep.subr.mxu0 0.0
    %3996 = vmatpush1.msra.mxu0 0.0
    %3997 = vmatprep.subr.mxu0 0.0
    %3998 = vmatpush1.msra.mxu0 0.0
    %3999 = vmatprep.subr.mxu0 0.0
    %4000 = vmatpush1.msra.mxu0 0.0
    %4001 = vmatprep.subr.mxu0 0.0
    %4002 = vmatpush1.msra.mxu0 0.0
    %4003 = vmatprep.subr.mxu0 0.0
    %4004 = vmatpush1.msra.mxu0 0.0
    %4005 = vmatprep.subr.mxu0 0.0
    %4006 = vmatpush1.msra.mxu0 0.0
    %4007 = vmatprep.subr.mxu0 0.0
    %4008 = vmatpush1.msra.mxu0 0.0
    %4009 = vmatprep.subr.mxu0 0.0
    %4010 = vmatpush1.msra.mxu0 0.0
    %4011 = vmatprep.subr.mxu0 0.0
    %4012 = vmatpush1.msra.mxu0 0.0
    %4013 = vmatprep.subr.mxu0 0.0
    %4014 = vmatpush1.msra.mxu0 0.0
    %4015 = vmatprep.subr.mxu0 0.0
    %4016 = vmatpush1.msra.mxu0 0.0
    %4017 = vmatprep.subr.mxu0 0.0
    %4018 = vmatpush1.msra.mxu0 0.0
    %4019 = vmatprep.subr.mxu0 0.0
    %4020 = vmatpush1.msra.mxu0 0.0
    %4021 = vmatprep.subr.mxu0 0.0
    %4022 = vmatpush1.msra.mxu0 0.0
    %4023 = vmatprep.subr.mxu0 0.0
    %4024 = vmatpush1.msra.mxu0 0.0
    %4025 = vmatprep.mubr.f32.mxu0 0.0
    %4026 = vmatmul.mubr.f32.gmra.mrb[0].mxu0 %v3872
    %v4027 = vpop.f32.mrb[0].mxu0
    %v4028 = vadd.f32 %v3959, %v4027
    %v4029 = vpop.f32.mrb[0].mxu0
    %4030 = vmatprep.mubr.f32.mxu0 0.0
    %4031 = vmatmul.mubr.f32.gmra.mrb[0].mxu0 %v3873
    %v4032 = vpop.f32.mrb[0].mxu0
    %v4033 = vadd.f32 %v3959, %v4032
    %v4034 = vpop.f32.mrb[0].mxu0
    %4035 = vmatprep.mubr.f32.mxu0 0.0
    %4036 = vmatmul.mubr.f32.gmra.mrb[0].mxu0 %v3874
    %v4037 = vpop.f32.mrb[0].mxu0
    %v4038 = vadd.f32 %v3959, %v4037
    %v4039 = vpop.f32.mrb[0].mxu0
    %4040 = vmatprep.mubr.f32.mxu0 0.0
    %4041 = vmatmul.mubr.f32.gmra.mrb[0].mxu0 %v3875
    %v4042 = vpop.f32.mrb[0].mxu0
    %v4043 = vadd.f32 %v3959, %v4042
    %v4044 = vpop.f32.mrb[0].mxu0
    %4045 = vmatprep.mubr.f32.mxu0 0.0
    %4046 = vmatmul.mubr.f32.gmra.mrb[0].mxu0 %v3876
    %v4047 = vpop.f32.mrb[0].mxu0
    %v4048 = vadd.f32 %v3959, %v4047
    %v4049 = vpop.f32.mrb[0].mxu0
    %4050 = vmatprep.mubr.f32.mxu0 0.0
    %4051 = vmatmul.mubr.f32.gmra.mrb[0].mxu0 %v3877
    %v4052 = vpop.f32.mrb[0].mxu0
    %v4053 = vadd.f32 %v3959, %v4052
    %v4054 = vpop.f32.mrb[0].mxu0
    %4055 = vmatprep.mubr.f32.mxu0 0.0
    %4056 = vmatmul.mubr.f32.gmra.mrb[0].mxu0 %v3878
    %v4057 = vpop.f32.mrb[0].mxu0
    %v4058 = vadd.f32 %v3959, %v4057
    %v4059 = vpop.f32.mrb[0].mxu0
    %4060 = vmatprep.mubr.f32.mxu0 0.0
    %4061 = vmatmul.mubr.f32.gmra.mrb[0].mxu0 %v3879
    %v4062 = vpop.f32.mrb[0].mxu0
    %v4063 = vadd.f32 %v3959, %v4062
    %v4064 = vpop.f32.mrb[0].mxu0
    %4065 = vmatprep.mubr.f32.mxu0 0.0
    %4066 = vmatmul.mubr.f32.gmra.mrb[0].mxu0 %v3880
    %v4067 = vpop.f32.mrb[0].mxu0
    %v4068 = vadd.f32 %v3959, %v4067
    %v4069 = vpop.f32.mrb[0].mxu0
    %4070 = vmatprep.mubr.f32.mxu0 0.0
    %4071 = vmatmul.mubr.f32.gmra.mrb[0].mxu0 %v3881
    %v4072 = vpop.f32.mrb[0].mxu0
    %v4073 = vadd.f32 %v3959, %v4072
    %v4074 = vpop.f32.mrb[0].mxu0
    %4075 = vmatprep.mubr.f32.mxu0 0.0
    %4076 = vmatmul.mubr.f32.gmra.mrb[0].mxu0 %v3882
    %v4077 = vpop.f32.mrb[0].mxu0
    %v4078 = vadd.f32 %v3959, %v4077
    %v4079 = vpop.f32.mrb[0].mxu0
    %4080 = vmatprep.mubr.f32.mxu0 0.0
    %4081 = vmatmul.mubr.f32.gmra.mrb[0].mxu0 %v3883
    %v4082 = vpop.f32.mrb[0].mxu0
    %v4083 = vadd.f32 %v3959, %v4082
    %v4084 = vpop.f32.mrb[0].mxu0
    %4085 = vmatprep.mubr.f32.mxu0 0.0
    %4086 = vmatmul.mubr.f32.gmra.mrb[0].mxu0 %v3884
    %v4087 = vpop.f32.mrb[0].mxu0
    %v4088 = vadd.f32 %v3959, %v4087
    %v4089 = vpop.f32.mrb[0].mxu0
    %4090 = vmatprep.mubr.f32.mxu0 0.0
    %4091 = vmatmul.mubr.f32.gmra.mrb[0].mxu0 %v3885
    %v4092 = vpop.f32.mrb[0].mxu0
    %v4093 = vadd.f32 %v3959, %v4092
    %v4094 = vpop.f32.mrb[0].mxu0
    %4095 = vmatprep.mubr.f32.mxu0 0.0
    %4096 = vmatmul.mubr.f32.gmra.mrb[0].mxu0 %v3886
    %v4097 = vpop.f32.mrb[0].mxu0
    %v4098 = vadd.f32 %v3959, %v4097
    %v4099 = vpop.f32.mrb[0].mxu0
    %4100 = vmatprep.mubr.f32.mxu0 0.0
    %4101 = vmatmul.mubr.f32.gmra.mrb[0].mxu0 %v3887
    %v4102 = vpop.f32.mrb[0].mxu0
    %v4103 = vadd.f32 %v3959, %v4102
    %v4104 = vpop.f32.mrb[0].mxu0
    %4105 = vmatprep.mubr.f32.mxu0 0.0
    %4106 = vmatmul.mubr.f32.gmra.mrb[0].mxu0 %v3888
    %v4107 = vpop.f32.mrb[0].mxu0
    %v4108 = vadd.f32 %v3959, %v4107
    %v4109 = vpop.f32.mrb[0].mxu0
    %4110 = vmatprep.mubr.f32.mxu0 0.0
    %4111 = vmatmul.mubr.f32.gmra.mrb[0].mxu0 %v3889
    %v4112 = vpop.f32.mrb[0].mxu0
    %v4113 = vadd.f32 %v3959, %v4112
    %v4114 = vpop.f32.mrb[0].mxu0
    %4115 = vmatprep.mubr.f32.mxu0 0.0
    %4116 = vmatmul.mubr.f32.gmra.mrb[0].mxu0 %v3890
    %v4117 = vpop.f32.mrb[0].mxu0
    %v4118 = vadd.f32 %v3959, %v4117
    %v4119 = vpop.f32.mrb[0].mxu0
    %4120 = vmatprep.mubr.f32.mxu0 0.0
    %4121 = vmatmul.mubr.f32.gmra.mrb[0].mxu0 %v3891
    %v4122 = vpop.f32.mrb[0].mxu0
    %v4123 = vadd.f32 %v3959, %v4122
    %v4124 = vpop.f32.mrb[0].mxu0
    %4125 = vmatprep.mubr.f32.mxu0 0.0
    %4126 = vmatmul.mubr.f32.gmra.mrb[0].mxu0 %v3892
    %v4127 = vpop.f32.mrb[0].mxu0
    %v4128 = vadd.f32 %v3959, %v4127
    %v4129 = vpop.f32.mrb[0].mxu0
    %4130 = vmatprep.mubr.f32.mxu0 0.0
    %4131 = vmatmul.mubr.f32.gmra.mrb[0].mxu0 %v3893
    %v4132 = vpop.f32.mrb[0].mxu0
    %v4133 = vadd.f32 %v3959, %v4132
    %v4134 = vpop.f32.mrb[0].mxu0
    %4135 = vmatprep.mubr.f32.mxu0 0.0
    %4136 = vmatmul.mubr.f32.gmra.mrb[0].mxu0 %v3894
    %v4137 = vpop.f32.mrb[0].mxu0
    %v4138 = vadd.f32 %v3959, %v4137
    %v4139 = vpop.f32.mrb[0].mxu0
    %4140 = vmatprep.mubr.f32.mxu0 0.0
    %4141 = vmatmul.mubr.f32.gmra.mrb[0].mxu0 %v3895
    %v4142 = vpop.f32.mrb[0].mxu0
    %v4143 = vadd.f32 %v3959, %v4142
    %v4144 = vpop.f32.mrb[0].mxu0
    %4145 = vmatprep.mubr.f32.mxu0 0.0
    %4146 = vmatmul.mubr.f32.gmra.mrb[0].mxu0 %v3896
    %v4147 = vpop.f32.mrb[0].mxu0
    %v4148 = vadd.f32 %v3959, %v4147
    %v4149 = vpop.f32.mrb[0].mxu0
    %4150 = vmatprep.mubr.f32.mxu0 0.0
    %4151 = vmatmul.mubr.f32.gmra.mrb[0].mxu0 %v3897
    %v4152 = vpop.f32.mrb[0].mxu0
    %v4153 = vadd.f32 %v3959, %v4152
    %v4154 = vpop.f32.mrb[0].mxu0
    %4155 = vmatprep.mubr.f32.mxu0 0.0
    %4156 = vmatmul.mubr.f32.gmra.mrb[0].mxu0 %v3898
    %v4157 = vpop.f32.mrb[0].mxu0
    %v4158 = vadd.f32 %v3959, %v4157
    %v4159 = vpop.f32.mrb[0].mxu0
    %4160 = vmatprep.mubr.f32.mxu0 0.0
    %4161 = vmatmul.mubr.f32.gmra.mrb[0].mxu0 %v3899
    %v4162 = vpop.f32.mrb[0].mxu0
    %v4163 = vadd.f32 %v3959, %v4162
    %v4164 = vpop.f32.mrb[0].mxu0
    %4165 = vmatprep.mubr.f32.mxu0 0.0
    %4166 = vmatmul.mubr.f32.gmra.mrb[0].mxu0 %v3900
    %v4167 = vpop.f32.mrb[0].mxu0
    %v4168 = vadd.f32 %v3959, %v4167
    %v4169 = vpop.f32.mrb[0].mxu0
    %4170 = vmatprep.mubr.f32.mxu0 0.0
    %4171 = vmatmul.mubr.f32.gmra.mrb[0].mxu0 %v3901
    %v4172 = vpop.f32.mrb[0].mxu0
    %v4173 = vadd.f32 %v3959, %v4172
    %v4174 = vpop.f32.mrb[0].mxu0
    %4175 = vmatprep.mubr.f32.mxu0 0.0
    %4176 = vmatmul.mubr.f32.gmra.mrb[0].mxu0 %v3902
    %v4177 = vpop.f32.mrb[0].mxu0
    %v4178 = vadd.f32 %v3959, %v4177
    %v4179 = vpop.f32.mrb[0].mxu0
    %4180 = vmatprep.mubr.f32.mxu0 0.0
    %4181 = vmatmul.mubr.f32.gmra.mrb[0].mxu0 %v3903
    %v4182 = vpop.f32.mrb[0].mxu0
    %v4183 = vadd.f32 %v3959, %v4182
    %v4184 = vpop.f32.mrb[0].mxu0
    %4185 = vmatprep.mubr.f32.mxu0 0.0
    %4186 = vmatmul.mubr.f32.gmra.mrb[0].mxu0 %v3904
    %v4187 = vpop.f32.mrb[0].mxu0
    %v4188 = vadd.f32 %v3959, %v4187
    %v4189 = vpop.f32.mrb[0].mxu0
    %4190 = vmatprep.mubr.f32.mxu0 0.0
    %4191 = vmatmul.mubr.f32.gmra.mrb[0].mxu0 %v3905
    %v4192 = vpop.f32.mrb[0].mxu0
    %v4193 = vadd.f32 %v3959, %v4192
    %v4194 = vpop.f32.mrb[0].mxu0
    %4195 = vmatprep.mubr.f32.mxu0 0.0
    %4196 = vmatmul.mubr.f32.gmra.mrb[0].mxu0 %v3906
    %v4197 = vpop.f32.mrb[0].mxu0
    %v4198 = vadd.f32 %v3959, %v4197
    %v4199 = vpop.f32.mrb[0].mxu0
    %4200 = vmatprep.mubr.f32.mxu0 0.0
    %4201 = vmatmul.mubr.f32.gmra.mrb[0].mxu0 %v3907
    %v4202 = vpop.f32.mrb[0].mxu0
    %v4203 = vadd.f32 %v3959, %v4202
    %v4204 = vpop.f32.mrb[0].mxu0
    %4205 = vmatprep.mubr.f32.mxu0 0.0
    %4206 = vmatmul.mubr.f32.gmra.mrb[0].mxu0 %v3908
    %v4207 = vpop.f32.mrb[0].mxu0
    %v4208 = vadd.f32 %v3959, %v4207
    %v4209 = vpop.f32.mrb[0].mxu0
    %4210 = vmatprep.mubr.f32.mxu0 0.0
    %4211 = vmatmul.mubr.f32.gmra.mrb[0].mxu0 %v3909
    %v4212 = vpop.f32.mrb[0].mxu0
    %v4213 = vadd.f32 %v3959, %v4212
    %v4214 = vpop.f32.mrb[0].mxu0
    %4215 = vmatprep.mubr.f32.mxu0 0.0
    %4216 = vmatmul.mubr.f32.gmra.mrb[0].mxu0 %v3910
    %v4217 = vpop.f32.mrb[0].mxu0
    %v4218 = vadd.f32 %v3959, %v4217
    %v4219 = vpop.f32.mrb[0].mxu0
    %4220 = vmatprep.mubr.f32.mxu0 0.0
    %4221 = vmatmul.mubr.f32.gmra.mrb[0].mxu0 %v3911
    %v4222 = vpop.f32.mrb[0].mxu0
    %v4223 = vadd.f32 %v3959, %v4222
    %v4224 = vpop.f32.mrb[0].mxu0
    %4225 = vmatprep.mubr.f32.mxu0 0.0
    %4226 = vmatmul.mubr.f32.gmra.mrb[0].mxu0 %v3912
    %v4227 = vpop.f32.mrb[0].mxu0
    %v4228 = vadd.f32 %v3959, %v4227
    %v4229 = vpop.f32.mrb[0].mxu0
    %4230 = vmatprep.mubr.f32.mxu0 0.0
    %4231 = vmatmul.mubr.f32.gmra.mrb[0].mxu0 %v3913
    %v4232 = vpop.f32.mrb[0].mxu0
    %v4233 = vadd.f32 %v3959, %v4232
    %v4234 = vpop.f32.mrb[0].mxu0
    %4235 = vmatprep.mubr.f32.mxu0 0.0
    %4236 = vmatmul.mubr.f32.gmra.mrb[0].mxu0 %v3914
    %v4237 = vpop.f32.mrb[0].mxu0
    %v4238 = vadd.f32 %v3959, %v4237
    %v4239 = vpop.f32.mrb[0].mxu0
    %4240 = vmatprep.mubr.f32.mxu0 0.0
    %4241 = vmatmul.mubr.f32.gmra.mrb[0].mxu0 %v3915
    %v4242 = vpop.f32.mrb[0].mxu0
    %v4243 = vadd.f32 %v3959, %v4242
    %v4244 = vpop.f32.mrb[0].mxu0
    %4245 = vmatprep.mubr.f32.mxu0 0.0
    %4246 = vmatmul.mubr.f32.gmra.mrb[0].mxu0 %v3916
    %v4247 = vpop.f32.mrb[0].mxu0
    %v4248 = vadd.f32 %v3959, %v4247
    %v4249 = vpop.f32.mrb[0].mxu0
    %4250 = vmatprep.mubr.f32.mxu0 0.0
    %4251 = vmatmul.mubr.f32.gmra.mrb[0].mxu0 %v3917
    %v4252 = vpop.f32.mrb[0].mxu0
    %v4253 = vadd.f32 %v3959, %v4252
    %v4254 = vpop.f32.mrb[0].mxu0
    %4255 = vmatprep.mubr.f32.mxu0 0.0
    %4256 = vmatmul.mubr.f32.gmra.mrb[0].mxu0 %v3918
    %v4257 = vpop.f32.mrb[0].mxu0
    %v4258 = vadd.f32 %v3959, %v4257
    %v4259 = vpop.f32.mrb[0].mxu0
    %4260 = vmatprep.mubr.f32.mxu0 0.0
    %4261 = vmatmul.mubr.f32.gmra.mrb[0].mxu0 %v3919
    %v4262 = vpop.f32.mrb[0].mxu0
    %v4263 = vadd.f32 %v3959, %v4262
    %v4264 = vpop.f32.mrb[0].mxu0
    %4265 = vmatprep.mubr.f32.mxu0 0.0
    %4266 = vmatmul.mubr.f32.gmra.mrb[0].mxu0 %v3920
    %v4267 = vpop.f32.mrb[0].mxu0
    %v4268 = vadd.f32 %v3959, %v4267
    %v4269 = vpop.f32.mrb[0].mxu0
    %4270 = vmatprep.mubr.f32.mxu0 0.0
    %4271 = vmatmul.mubr.f32.gmra.mrb[0].mxu0 %v3921
    %v4272 = vpop.f32.mrb[0].mxu0
    %v4273 = vadd.f32 %v3959, %v4272
    %v4274 = vpop.f32.mrb[0].mxu0
    %4275 = vmatprep.mubr.f32.mxu0 0.0
    %4276 = vmatmul.mubr.f32.gmra.mrb[0].mxu0 %v3922
    %v4277 = vpop.f32.mrb[0].mxu0
    %v4278 = vadd.f32 %v3959, %v4277
    %v4279 = vpop.f32.mrb[0].mxu0
    %4280 = vmatprep.mubr.f32.mxu0 0.0
    %4281 = vmatmul.mubr.f32.gmra.mrb[0].mxu0 %v3923
    %v4282 = vpop.f32.mrb[0].mxu0
    %v4283 = vadd.f32 %v3959, %v4282
    %v4284 = vpop.f32.mrb[0].mxu0
    %4285 = vmatprep.mubr.f32.mxu0 0.0
    %4286 = vmatmul.mubr.f32.gmra.mrb[0].mxu0 %v3924
    %v4287 = vpop.f32.mrb[0].mxu0
    %v4288 = vadd.f32 %v3959, %v4287
    %v4289 = vpop.f32.mrb[0].mxu0
    %4290 = vmatprep.mubr.f32.mxu0 0.0
    %4291 = vmatmul.mubr.f32.gmra.mrb[0].mxu0 %v3925
    %v4292 = vpop.f32.mrb[0].mxu0
    %v4293 = vadd.f32 %v3959, %v4292
    %v4294 = vpop.f32.mrb[0].mxu0
    %4295 = vmatprep.mubr.f32.mxu0 0.0
    %4296 = vmatmul.mubr.f32.gmra.mrb[0].mxu0 %v3926
    %v4297 = vpop.f32.mrb[0].mxu0
    %v4298 = vadd.f32 %v3959, %v4297
    %v4299 = vpop.f32.mrb[0].mxu0
    %4300 = vmatprep.mubr.f32.mxu0 0.0
    %4301 = vmatmul.mubr.f32.gmra.mrb[0].mxu0 %v3927
    %v4302 = vpop.f32.mrb[0].mxu0
    %v4303 = vadd.f32 %v3959, %v4302
    %v4304 = vpop.f32.mrb[0].mxu0
    %4305 = vmatprep.mubr.f32.mxu0 0.0
    %4306 = vmatmul.mubr.f32.gmra.mrb[0].mxu0 %v3928
    %v4307 = vpop.f32.mrb[0].mxu0
    %v4308 = vadd.f32 %v3959, %v4307
    %v4309 = vpop.f32.mrb[0].mxu0
    %4310 = vmatprep.mubr.f32.mxu0 0.0
    %4311 = vmatmul.mubr.f32.gmra.mrb[0].mxu0 %v3929
    %v4312 = vpop.f32.mrb[0].mxu0
    %v4313 = vadd.f32 %v3959, %v4312
    %v4314 = vpop.f32.mrb[0].mxu0
    %4315 = vmatprep.mubr.f32.mxu0 0.0
    %4316 = vmatmul.mubr.f32.gmra.mrb[0].mxu0 %v3930
    %v4317 = vpop.f32.mrb[0].mxu0
    %v4318 = vadd.f32 %v3959, %v4317
    %v4319 = vpop.f32.mrb[0].mxu0
    %4320 = vmatprep.mubr.f32.mxu0 0.0
    %4321 = vmatmul.mubr.f32.gmra.mrb[0].mxu0 %v3931
    %v4322 = vpop.f32.mrb[0].mxu0
    %v4323 = vadd.f32 %v3959, %v4322
    %v4324 = vpop.f32.mrb[0].mxu0
    %4325 = vmatprep.mubr.f32.mxu0 0.0
    %4326 = vmatmul.mubr.f32.gmra.mrb[0].mxu0 %v3932
    %v4327 = vpop.f32.mrb[0].mxu0
    %v4328 = vadd.f32 %v3959, %v4327
    %v4329 = vpop.f32.mrb[0].mxu0
    %4330 = vmatprep.mubr.f32.mxu0 0.0
    %4331 = vmatmul.mubr.f32.gmra.mrb[0].mxu0 %v3933
    %v4332 = vpop.f32.mrb[0].mxu0
    %v4333 = vadd.f32 %v3959, %v4332
    %v4334 = vpop.f32.mrb[0].mxu0
    %4335 = vmatprep.mubr.f32.mxu0 0.0
    %4336 = vmatmul.mubr.f32.gmra.mrb[0].mxu0 %v3934
    %v4337 = vpop.f32.mrb[0].mxu0
    %v4338 = vadd.f32 %v3959, %v4337
    %v4339 = vpop.f32.mrb[0].mxu0
    %4340 = vmatprep.mubr.f32.mxu0 0.0
    %4341 = vmatmul.mubr.f32.gmra.mrb[0].mxu0 %v3935
    %v4342 = vpop.f32.mrb[0].mxu0
    %v4343 = vadd.f32 %v3959, %v4342
    %v4344 = vpop.f32.mrb[0].mxu0
    %4345 = vdwg.mxu0
    %v4346 = vmul.f32 %v4028, 0.5
    %v4347 = vmul.f32 %v4033, 0.5
    %v4348 = vmul.f32 %v4038, 0.5
    %v4349 = vmul.f32 %v4043, 0.5
    %v4350 = vmul.f32 %v4048, 0.5
    %v4351 = vmul.f32 %v4053, 0.5
    %v4352 = vmul.f32 %v4058, 0.5
    %v4353 = vmul.f32 %v4063, 0.5
    %v4354 = vmul.f32 %v4068, 0.5
    %v4355 = vmul.f32 %v4073, 0.5
    %v4356 = vmul.f32 %v4078, 0.5
    %v4357 = vmul.f32 %v4083, 0.5
    %v4358 = vmul.f32 %v4088, 0.5
    %v4359 = vmul.f32 %v4093, 0.5
    %v4360 = vmul.f32 %v4098, 0.5
    %v4361 = vmul.f32 %v4103, 0.5
    %v4362 = vmul.f32 %v4108, 0.5
    %v4363 = vmul.f32 %v4113, 0.5
    %v4364 = vmul.f32 %v4118, 0.5
    %v4365 = vmul.f32 %v4123, 0.5
    %v4366 = vmul.f32 %v4128, 0.5
    %v4367 = vmul.f32 %v4133, 0.5
    %v4368 = vmul.f32 %v4138, 0.5
    %v4369 = vmul.f32 %v4143, 0.5
    %v4370 = vmul.f32 %v4148, 0.5
    %v4371 = vmul.f32 %v4153, 0.5
    %v4372 = vmul.f32 %v4158, 0.5
    %v4373 = vmul.f32 %v4163, 0.5
    %v4374 = vmul.f32 %v4168, 0.5
    %v4375 = vmul.f32 %v4173, 0.5
    %v4376 = vmul.f32 %v4178, 0.5
    %v4377 = vmul.f32 %v4183, 0.5
    %v4378 = vmul.f32 %v4188, 0.5
    %v4379 = vmul.f32 %v4193, 0.5
    %v4380 = vmul.f32 %v4198, 0.5
    %v4381 = vmul.f32 %v4203, 0.5
    %v4382 = vmul.f32 %v4208, 0.5
    %v4383 = vmul.f32 %v4213, 0.5
    %v4384 = vmul.f32 %v4218, 0.5
    %v4385 = vmul.f32 %v4223, 0.5
    %v4386 = vmul.f32 %v4228, 0.5
    %v4387 = vmul.f32 %v4233, 0.5
    %v4388 = vmul.f32 %v4238, 0.5
    %v4389 = vmul.f32 %v4243, 0.5
    %v4390 = vmul.f32 %v4248, 0.5
    %v4391 = vmul.f32 %v4253, 0.5
    %v4392 = vmul.f32 %v4258, 0.5
    %v4393 = vmul.f32 %v4263, 0.5
    %v4394 = vmul.f32 %v4268, 0.5
    %v4395 = vmul.f32 %v4273, 0.5
    %v4396 = vmul.f32 %v4278, 0.5
    %v4397 = vmul.f32 %v4283, 0.5
    %v4398 = vmul.f32 %v4288, 0.5
    %v4399 = vmul.f32 %v4293, 0.5
    %v4400 = vmul.f32 %v4298, 0.5
    %v4401 = vmul.f32 %v4303, 0.5
    %v4402 = vmul.f32 %v4308, 0.5
    %v4403 = vmul.f32 %v4313, 0.5
    %v4404 = vmul.f32 %v4318, 0.5
    %v4405 = vmul.f32 %v4323, 0.5
    %v4406 = vmul.f32 %v4328, 0.5
    %v4407 = vmul.f32 %v4333, 0.5
    %v4408 = vmul.f32 %v4338, 0.5
    %v4409 = vmul.f32 %v4343, 0.5
    %v4410 = vtanh.pop %v4346
    %v4411 = vtanh.pop %v4347
    %v4412 = vtanh.pop %v4348
    %v4413 = vtanh.pop %v4349
    %v4414 = vtanh.pop %v4350
    %v4415 = vtanh.pop %v4351
    %v4416 = vtanh.pop %v4352
    %v4417 = vtanh.pop %v4353
    %v4418 = vtanh.pop %v4354
    %v4419 = vtanh.pop %v4355
    %v4420 = vtanh.pop %v4356
    %v4421 = vtanh.pop %v4357
    %v4422 = vtanh.pop %v4358
    %v4423 = vtanh.pop %v4359
    %v4424 = vtanh.pop %v4360
    %v4425 = vtanh.pop %v4361
    %v4426 = vtanh.pop %v4362
    %v4427 = vtanh.pop %v4363
    %v4428 = vtanh.pop %v4364
    %v4429 = vtanh.pop %v4365
    %v4430 = vtanh.pop %v4366
    %v4431 = vtanh.pop %v4367
    %v4432 = vtanh.pop %v4368
    %v4433 = vtanh.pop %v4369
    %v4434 = vtanh.pop %v4370
    %v4435 = vtanh.pop %v4371
    %v4436 = vtanh.pop %v4372
    %v4437 = vtanh.pop %v4373
    %v4438 = vtanh.pop %v4374
    %v4439 = vtanh.pop %v4375
    %v4440 = vtanh.pop %v4376
    %v4441 = vtanh.pop %v4377
    %v4442 = vtanh.pop %v4378
    %v4443 = vtanh.pop %v4379
    %v4444 = vtanh.pop %v4380
    %v4445 = vtanh.pop %v4381
    %v4446 = vtanh.pop %v4382
    %v4447 = vtanh.pop %v4383
    %v4448 = vtanh.pop %v4384
    %v4449 = vtanh.pop %v4385
    %v4450 = vtanh.pop %v4386
    %v4451 = vtanh.pop %v4387
    %v4452 = vtanh.pop %v4388
    %v4453 = vtanh.pop %v4389
    %v4454 = vtanh.pop %v4390
    %v4455 = vtanh.pop %v4391
    %v4456 = vtanh.pop %v4392
    %v4457 = vtanh.pop %v4393
    %v4458 = vtanh.pop %v4394
    %v4459 = vtanh.pop %v4395
    %v4460 = vtanh.pop %v4396
    %v4461 = vtanh.pop %v4397
    %v4462 = vtanh.pop %v4398
    %v4463 = vtanh.pop %v4399
    %v4464 = vtanh.pop %v4400
    %v4465 = vtanh.pop %v4401
    %v4466 = vtanh.pop %v4402
    %v4467 = vtanh.pop %v4403
    %v4468 = vtanh.pop %v4404
    %v4469 = vtanh.pop %v4405
    %v4470 = vtanh.pop %v4406
    %v4471 = vtanh.pop %v4407
    %v4472 = vtanh.pop %v4408
    %v4473 = vtanh.pop %v4409
    %v4474 = vadd.f32 %v4410, 1.0
    %v4475 = vadd.f32 %v4411, 1.0
    %v4476 = vadd.f32 %v4412, 1.0
    %v4477 = vadd.f32 %v4413, 1.0
    %v4478 = vadd.f32 %v4414, 1.0
    %v4479 = vadd.f32 %v4415, 1.0
    %v4480 = vadd.f32 %v4416, 1.0
    %v4481 = vadd.f32 %v4417, 1.0
    %v4482 = vadd.f32 %v4418, 1.0
    %v4483 = vadd.f32 %v4419, 1.0
    %v4484 = vadd.f32 %v4420, 1.0
    %v4485 = vadd.f32 %v4421, 1.0
    %v4486 = vadd.f32 %v4422, 1.0
    %v4487 = vadd.f32 %v4423, 1.0
    %v4488 = vadd.f32 %v4424, 1.0
    %v4489 = vadd.f32 %v4425, 1.0
    %v4490 = vadd.f32 %v4426, 1.0
    %v4491 = vadd.f32 %v4427, 1.0
    %v4492 = vadd.f32 %v4428, 1.0
    %v4493 = vadd.f32 %v4429, 1.0
    %v4494 = vadd.f32 %v4430, 1.0
    %v4495 = vadd.f32 %v4431, 1.0
    %v4496 = vadd.f32 %v4432, 1.0
    %v4497 = vadd.f32 %v4433, 1.0
    %v4498 = vadd.f32 %v4434, 1.0
    %v4499 = vadd.f32 %v4435, 1.0
    %v4500 = vadd.f32 %v4436, 1.0
    %v4501 = vadd.f32 %v4437, 1.0
    %v4502 = vadd.f32 %v4438, 1.0
    %v4503 = vadd.f32 %v4439, 1.0
    %v4504 = vadd.f32 %v4440, 1.0
    %v4505 = vadd.f32 %v4441, 1.0
    %v4506 = vadd.f32 %v4442, 1.0
    %v4507 = vadd.f32 %v4443, 1.0
    %v4508 = vadd.f32 %v4444, 1.0
    %v4509 = vadd.f32 %v4445, 1.0
    %v4510 = vadd.f32 %v4446, 1.0
    %v4511 = vadd.f32 %v4447, 1.0
    %v4512 = vadd.f32 %v4448, 1.0
    %v4513 = vadd.f32 %v4449, 1.0
    %v4514 = vadd.f32 %v4450, 1.0
    %v4515 = vadd.f32 %v4451, 1.0
    %v4516 = vadd.f32 %v4452, 1.0
    %v4517 = vadd.f32 %v4453, 1.0
    %v4518 = vadd.f32 %v4454, 1.0
    %v4519 = vadd.f32 %v4455, 1.0
    %v4520 = vadd.f32 %v4456, 1.0
    %v4521 = vadd.f32 %v4457, 1.0
    %v4522 = vadd.f32 %v4458, 1.0
    %v4523 = vadd.f32 %v4459, 1.0
    %v4524 = vadd.f32 %v4460, 1.0
    %v4525 = vadd.f32 %v4461, 1.0
    %v4526 = vadd.f32 %v4462, 1.0
    %v4527 = vadd.f32 %v4463, 1.0
    %v4528 = vadd.f32 %v4464, 1.0
    %v4529 = vadd.f32 %v4465, 1.0
    %v4530 = vadd.f32 %v4466, 1.0
    %v4531 = vadd.f32 %v4467, 1.0
    %v4532 = vadd.f32 %v4468, 1.0
    %v4533 = vadd.f32 %v4469, 1.0
    %v4534 = vadd.f32 %v4470, 1.0
    %v4535 = vadd.f32 %v4471, 1.0
    %v4536 = vadd.f32 %v4472, 1.0
    %v4537 = vadd.f32 %v4473, 1.0
    %v4538 = vmul.f32 %v4474, 0.5
    %v4539 = vmul.f32 %v4475, 0.5
    %v4540 = vmul.f32 %v4476, 0.5
    %v4541 = vmul.f32 %v4477, 0.5
    %v4542 = vmul.f32 %v4478, 0.5
    %v4543 = vmul.f32 %v4479, 0.5
    %v4544 = vmul.f32 %v4480, 0.5
    %v4545 = vmul.f32 %v4481, 0.5
    %v4546 = vmul.f32 %v4482, 0.5
    %v4547 = vmul.f32 %v4483, 0.5
    %v4548 = vmul.f32 %v4484, 0.5
    %v4549 = vmul.f32 %v4485, 0.5
    %v4550 = vmul.f32 %v4486, 0.5
    %v4551 = vmul.f32 %v4487, 0.5
    %v4552 = vmul.f32 %v4488, 0.5
    %v4553 = vmul.f32 %v4489, 0.5
    %v4554 = vmul.f32 %v4490, 0.5
    %v4555 = vmul.f32 %v4491, 0.5
    %v4556 = vmul.f32 %v4492, 0.5
    %v4557 = vmul.f32 %v4493, 0.5
    %v4558 = vmul.f32 %v4494, 0.5
    %v4559 = vmul.f32 %v4495, 0.5
    %v4560 = vmul.f32 %v4496, 0.5
    %v4561 = vmul.f32 %v4497, 0.5
    %v4562 = vmul.f32 %v4498, 0.5
    %v4563 = vmul.f32 %v4499, 0.5
    %v4564 = vmul.f32 %v4500, 0.5
    %v4565 = vmul.f32 %v4501, 0.5
    %v4566 = vmul.f32 %v4502, 0.5
    %v4567 = vmul.f32 %v4503, 0.5
    %v4568 = vmul.f32 %v4504, 0.5
    %v4569 = vmul.f32 %v4505, 0.5
    %v4570 = vmul.f32 %v4506, 0.5
    %v4571 = vmul.f32 %v4507, 0.5
    %v4572 = vmul.f32 %v4508, 0.5
    %v4573 = vmul.f32 %v4509, 0.5
    %v4574 = vmul.f32 %v4510, 0.5
    %v4575 = vmul.f32 %v4511, 0.5
    %v4576 = vmul.f32 %v4512, 0.5
    %v4577 = vmul.f32 %v4513, 0.5
    %v4578 = vmul.f32 %v4514, 0.5
    %v4579 = vmul.f32 %v4515, 0.5
    %v4580 = vmul.f32 %v4516, 0.5
    %v4581 = vmul.f32 %v4517, 0.5
    %v4582 = vmul.f32 %v4518, 0.5
    %v4583 = vmul.f32 %v4519, 0.5
    %v4584 = vmul.f32 %v4520, 0.5
    %v4585 = vmul.f32 %v4521, 0.5
    %v4586 = vmul.f32 %v4522, 0.5
    %v4587 = vmul.f32 %v4523, 0.5
    %v4588 = vmul.f32 %v4524, 0.5
    %v4589 = vmul.f32 %v4525, 0.5
    %v4590 = vmul.f32 %v4526, 0.5
    %v4591 = vmul.f32 %v4527, 0.5
    %v4592 = vmul.f32 %v4528, 0.5
    %v4593 = vmul.f32 %v4529, 0.5
    %v4594 = vmul.f32 %v4530, 0.5
    %v4595 = vmul.f32 %v4531, 0.5
    %v4596 = vmul.f32 %v4532, 0.5
    %v4597 = vmul.f32 %v4533, 0.5
    %v4598 = vmul.f32 %v4534, 0.5
    %v4599 = vmul.f32 %v4535, 0.5
    %v4600 = vmul.f32 %v4536, 0.5
    %v4601 = vmul.f32 %v4537, 0.5
    %v4602 = vmul.f32 %v4028, %v4538
    %v4603 = vmul.f32 %v4033, %v4539
    %v4604 = vmul.f32 %v4038, %v4540
    %v4605 = vmul.f32 %v4043, %v4541
    %v4606 = vmul.f32 %v4048, %v4542
    %v4607 = vmul.f32 %v4053, %v4543
    %v4608 = vmul.f32 %v4058, %v4544
    %v4609 = vmul.f32 %v4063, %v4545
    %v4610 = vmul.f32 %v4068, %v4546
    %v4611 = vmul.f32 %v4073, %v4547
    %v4612 = vmul.f32 %v4078, %v4548
    %v4613 = vmul.f32 %v4083, %v4549
    %v4614 = vmul.f32 %v4088, %v4550
    %v4615 = vmul.f32 %v4093, %v4551
    %v4616 = vmul.f32 %v4098, %v4552
    %v4617 = vmul.f32 %v4103, %v4553
    %v4618 = vmul.f32 %v4108, %v4554
    %v4619 = vmul.f32 %v4113, %v4555
    %v4620 = vmul.f32 %v4118, %v4556
    %v4621 = vmul.f32 %v4123, %v4557
    %v4622 = vmul.f32 %v4128, %v4558
    %v4623 = vmul.f32 %v4133, %v4559
    %v4624 = vmul.f32 %v4138, %v4560
    %v4625 = vmul.f32 %v4143, %v4561
    %v4626 = vmul.f32 %v4148, %v4562
    %v4627 = vmul.f32 %v4153, %v4563
    %v4628 = vmul.f32 %v4158, %v4564
    %v4629 = vmul.f32 %v4163, %v4565
    %v4630 = vmul.f32 %v4168, %v4566
    %v4631 = vmul.f32 %v4173, %v4567
    %v4632 = vmul.f32 %v4178, %v4568
    %v4633 = vmul.f32 %v4183, %v4569
    %v4634 = vmul.f32 %v4188, %v4570
    %v4635 = vmul.f32 %v4193, %v4571
    %v4636 = vmul.f32 %v4198, %v4572
    %v4637 = vmul.f32 %v4203, %v4573
    %v4638 = vmul.f32 %v4208, %v4574
    %v4639 = vmul.f32 %v4213, %v4575
    %v4640 = vmul.f32 %v4218, %v4576
    %v4641 = vmul.f32 %v4223, %v4577
    %v4642 = vmul.f32 %v4228, %v4578
    %v4643 = vmul.f32 %v4233, %v4579
    %v4644 = vmul.f32 %v4238, %v4580
    %v4645 = vmul.f32 %v4243, %v4581
    %v4646 = vmul.f32 %v4248, %v4582
    %v4647 = vmul.f32 %v4253, %v4583
    %v4648 = vmul.f32 %v4258, %v4584
    %v4649 = vmul.f32 %v4263, %v4585
    %v4650 = vmul.f32 %v4268, %v4586
    %v4651 = vmul.f32 %v4273, %v4587
    %v4652 = vmul.f32 %v4278, %v4588
    %v4653 = vmul.f32 %v4283, %v4589
    %v4654 = vmul.f32 %v4288, %v4590
    %v4655 = vmul.f32 %v4293, %v4591
    %v4656 = vmul.f32 %v4298, %v4592
    %v4657 = vmul.f32 %v4303, %v4593
    %v4658 = vmul.f32 %v4308, %v4594
    %v4659 = vmul.f32 %v4313, %v4595
    %v4660 = vmul.f32 %v4318, %v4596
    %v4661 = vmul.f32 %v4323, %v4597
    %v4662 = vmul.f32 %v4328, %v4598
    %v4663 = vmul.f32 %v4333, %v4599
    %v4664 = vmul.f32 %v4338, %v4600
    %v4665 = vmul.f32 %v4343, %v4601
    %s4666 = scalar_lea.vmem [#allocation3], 640
    %v4667 = vld [vmem:[%s4666] sm:$0xff]
    %v4668 = vld [vmem:[%s4666 + $0x8] sm:$0xff]
    %v4669 = vld [vmem:[%s4666 + $0x10] sm:$0xff]
    %v4670 = vld [vmem:[%s4666 + $0x18] sm:$0xff]
    %v4671 = vld [vmem:[%s4666 + $0x20] sm:$0xff]
    %v4672 = vld [vmem:[%s4666 + $0x28] sm:$0xff]
    %v4673 = vld [vmem:[%s4666 + $0x30] sm:$0xff]
    %v4674 = vld [vmem:[%s4666 + $0x38] sm:$0xff]
    %v4675 = vld [vmem:[%s4666 + $0x40] sm:$0xff]
    %v4676 = vld [vmem:[%s4666 + $0x48] sm:$0xff]
    %v4677 = vld [vmem:[%s4666 + $0x50] sm:$0xff]
    %v4678 = vld [vmem:[%s4666 + $0x58] sm:$0xff]
    %v4679 = vld [vmem:[%s4666 + $0x60] sm:$0xff]
    %v4680 = vld [vmem:[%s4666 + $0x68] sm:$0xff]
    %v4681 = vld [vmem:[%s4666 + $0x70] sm:$0xff]
    %v4682 = vld [vmem:[%s4666 + $0x78] sm:$0xff]
    %s4683 = scalar_lea.vmem %s5, 5
    %v4684 = vld [vmem:[%s4683] sm:$0x1]
    %v4686 = vlaneseq
    %v4687 = vshrl.u32 %v4686, 7
    %v4688 = vsub.s32 0, %v4687
    %v4689 = vrot.slane %v4684, %v4688
    %4691 = vmatprep.subr.mxu0 0.0
    %4692 = vmatpush1.msra.mxu0 %v4667
    %4693 = vmatprep.subr.mxu0 0.0
    %4694 = vmatpush1.msra.mxu0 %v4668
    %4695 = vmatprep.subr.mxu0 0.0
    %4696 = vmatpush1.msra.mxu0 %v4669
    %4697 = vmatprep.subr.mxu0 0.0
    %4698 = vmatpush1.msra.mxu0 %v4670
    %4699 = vmatprep.subr.mxu0 0.0
    %4700 = vmatpush1.msra.mxu0 %v4671
    %4701 = vmatprep.subr.mxu0 0.0
    %4702 = vmatpush1.msra.mxu0 %v4672
    %4703 = vmatprep.subr.mxu0 0.0
    %4704 = vmatpush1.msra.mxu0 %v4673
    %4705 = vmatprep.subr.mxu0 0.0
    %4706 = vmatpush1.msra.mxu0 %v4674
    %4707 = vmatprep.subr.mxu0 0.0
    %4708 = vmatpush1.msra.mxu0 %v4675
    %4709 = vmatprep.subr.mxu0 0.0
    %4710 = vmatpush1.msra.mxu0 %v4676
    %4711 = vmatprep.subr.mxu0 0.0
    %4712 = vmatpush1.msra.mxu0 %v4677
    %4713 = vmatprep.subr.mxu0 0.0
    %4714 = vmatpush1.msra.mxu0 %v4678
    %4715 = vmatprep.subr.mxu0 0.0
    %4716 = vmatpush1.msra.mxu0 %v4679
    %4717 = vmatprep.subr.mxu0 0.0
    %4718 = vmatpush1.msra.mxu0 %v4680
    %4719 = vmatprep.subr.mxu0 0.0
    %4720 = vmatpush1.msra.mxu0 %v4681
    %4721 = vmatprep.subr.mxu0 0.0
    %4722 = vmatpush1.msra.mxu0 %v4682
    %4723 = vmatprep.subr.mxu0 0.0
    %4724 = vmatpush1.msra.mxu0 0.0
    %4725 = vmatprep.subr.mxu0 0.0
    %4726 = vmatpush1.msra.mxu0 0.0
    %4727 = vmatprep.subr.mxu0 0.0
    %4728 = vmatpush1.msra.mxu0 0.0
    %4729 = vmatprep.subr.mxu0 0.0
    %4730 = vmatpush1.msra.mxu0 0.0
    %4731 = vmatprep.subr.mxu0 0.0
    %4732 = vmatpush1.msra.mxu0 0.0
    %4733 = vmatprep.subr.mxu0 0.0
    %4734 = vmatpush1.msra.mxu0 0.0
    %4735 = vmatprep.subr.mxu0 0.0
    %4736 = vmatpush1.msra.mxu0 0.0
    %4737 = vmatprep.subr.mxu0 0.0
    %4738 = vmatpush1.msra.mxu0 0.0
    %4739 = vmatprep.subr.mxu0 0.0
    %4740 = vmatpush1.msra.mxu0 0.0
    %4741 = vmatprep.subr.mxu0 0.0
    %4742 = vmatpush1.msra.mxu0 0.0
    %4743 = vmatprep.subr.mxu0 0.0
    %4744 = vmatpush1.msra.mxu0 0.0
    %4745 = vmatprep.subr.mxu0 0.0
    %4746 = vmatpush1.msra.mxu0 0.0
    %4747 = vmatprep.subr.mxu0 0.0
    %4748 = vmatpush1.msra.mxu0 0.0
    %4749 = vmatprep.subr.mxu0 0.0
    %4750 = vmatpush1.msra.mxu0 0.0
    %4751 = vmatprep.subr.mxu0 0.0
    %4752 = vmatpush1.msra.mxu0 0.0
    %4753 = vmatprep.subr.mxu0 0.0
    %4754 = vmatpush1.msra.mxu0 0.0
    %4755 = vmatprep.mubr.f32.mxu0 0.0
    %4756 = vmatmul.mubr.f32.gmra.mrb[0].mxu0 %v4602
    %v4757 = vpop.f32.mrb[0].mxu0
    %v4758 = vadd.f32 %v4689, %v4757
    %v4759 = vpop.f32.mrb[0].mxu0
    %4760 = vmatprep.mubr.f32.mxu0 0.0
    %4761 = vmatmul.mubr.f32.gmra.mrb[0].mxu0 %v4603
    %v4762 = vpop.f32.mrb[0].mxu0
    %v4763 = vadd.f32 %v4689, %v4762
    %v4764 = vpop.f32.mrb[0].mxu0
    %4765 = vmatprep.mubr.f32.mxu0 0.0
    %4766 = vmatmul.mubr.f32.gmra.mrb[0].mxu0 %v4604
    %v4767 = vpop.f32.mrb[0].mxu0
    %v4768 = vadd.f32 %v4689, %v4767
    %v4769 = vpop.f32.mrb[0].mxu0
    %4770 = vmatprep.mubr.f32.mxu0 0.0
    %4771 = vmatmul.mubr.f32.gmra.mrb[0].mxu0 %v4605
    %v4772 = vpop.f32.mrb[0].mxu0
    %v4773 = vadd.f32 %v4689, %v4772
    %v4774 = vpop.f32.mrb[0].mxu0
    %4775 = vmatprep.mubr.f32.mxu0 0.0
    %4776 = vmatmul.mubr.f32.gmra.mrb[0].mxu0 %v4606
    %v4777 = vpop.f32.mrb[0].mxu0
    %v4778 = vadd.f32 %v4689, %v4777
    %v4779 = vpop.f32.mrb[0].mxu0
    %4780 = vmatprep.mubr.f32.mxu0 0.0
    %4781 = vmatmul.mubr.f32.gmra.mrb[0].mxu0 %v4607
    %v4782 = vpop.f32.mrb[0].mxu0
    %v4783 = vadd.f32 %v4689, %v4782
    %v4784 = vpop.f32.mrb[0].mxu0
    %4785 = vmatprep.mubr.f32.mxu0 0.0
    %4786 = vmatmul.mubr.f32.gmra.mrb[0].mxu0 %v4608
    %v4787 = vpop.f32.mrb[0].mxu0
    %v4788 = vadd.f32 %v4689, %v4787
    %v4789 = vpop.f32.mrb[0].mxu0
    %4790 = vmatprep.mubr.f32.mxu0 0.0
    %4791 = vmatmul.mubr.f32.gmra.mrb[0].mxu0 %v4609
    %v4792 = vpop.f32.mrb[0].mxu0
    %v4793 = vadd.f32 %v4689, %v4792
    %v4794 = vpop.f32.mrb[0].mxu0
    %4795 = vmatprep.mubr.f32.mxu0 0.0
    %4796 = vmatmul.mubr.f32.gmra.mrb[0].mxu0 %v4610
    %v4797 = vpop.f32.mrb[0].mxu0
    %v4798 = vadd.f32 %v4689, %v4797
    %v4799 = vpop.f32.mrb[0].mxu0
    %4800 = vmatprep.mubr.f32.mxu0 0.0
    %4801 = vmatmul.mubr.f32.gmra.mrb[0].mxu0 %v4611
    %v4802 = vpop.f32.mrb[0].mxu0
    %v4803 = vadd.f32 %v4689, %v4802
    %v4804 = vpop.f32.mrb[0].mxu0
    %4805 = vmatprep.mubr.f32.mxu0 0.0
    %4806 = vmatmul.mubr.f32.gmra.mrb[0].mxu0 %v4612
    %v4807 = vpop.f32.mrb[0].mxu0
    %v4808 = vadd.f32 %v4689, %v4807
    %v4809 = vpop.f32.mrb[0].mxu0
    %4810 = vmatprep.mubr.f32.mxu0 0.0
    %4811 = vmatmul.mubr.f32.gmra.mrb[0].mxu0 %v4613
    %v4812 = vpop.f32.mrb[0].mxu0
    %v4813 = vadd.f32 %v4689, %v4812
    %v4814 = vpop.f32.mrb[0].mxu0
    %4815 = vmatprep.mubr.f32.mxu0 0.0
    %4816 = vmatmul.mubr.f32.gmra.mrb[0].mxu0 %v4614
    %v4817 = vpop.f32.mrb[0].mxu0
    %v4818 = vadd.f32 %v4689, %v4817
    %v4819 = vpop.f32.mrb[0].mxu0
    %4820 = vmatprep.mubr.f32.mxu0 0.0
    %4821 = vmatmul.mubr.f32.gmra.mrb[0].mxu0 %v4615
    %v4822 = vpop.f32.mrb[0].mxu0
    %v4823 = vadd.f32 %v4689, %v4822
    %v4824 = vpop.f32.mrb[0].mxu0
    %4825 = vmatprep.mubr.f32.mxu0 0.0
    %4826 = vmatmul.mubr.f32.gmra.mrb[0].mxu0 %v4616
    %v4827 = vpop.f32.mrb[0].mxu0
    %v4828 = vadd.f32 %v4689, %v4827
    %v4829 = vpop.f32.mrb[0].mxu0
    %4830 = vmatprep.mubr.f32.mxu0 0.0
    %4831 = vmatmul.mubr.f32.gmra.mrb[0].mxu0 %v4617
    %v4832 = vpop.f32.mrb[0].mxu0
    %v4833 = vadd.f32 %v4689, %v4832
    %v4834 = vpop.f32.mrb[0].mxu0
    %4835 = vmatprep.mubr.f32.mxu0 0.0
    %4836 = vmatmul.mubr.f32.gmra.mrb[0].mxu0 %v4618
    %v4837 = vpop.f32.mrb[0].mxu0
    %v4838 = vadd.f32 %v4689, %v4837
    %v4839 = vpop.f32.mrb[0].mxu0
    %4840 = vmatprep.mubr.f32.mxu0 0.0
    %4841 = vmatmul.mubr.f32.gmra.mrb[0].mxu0 %v4619
    %v4842 = vpop.f32.mrb[0].mxu0
    %v4843 = vadd.f32 %v4689, %v4842
    %v4844 = vpop.f32.mrb[0].mxu0
    %4845 = vmatprep.mubr.f32.mxu0 0.0
    %4846 = vmatmul.mubr.f32.gmra.mrb[0].mxu0 %v4620
    %v4847 = vpop.f32.mrb[0].mxu0
    %v4848 = vadd.f32 %v4689, %v4847
    %v4849 = vpop.f32.mrb[0].mxu0
    %4850 = vmatprep.mubr.f32.mxu0 0.0
    %4851 = vmatmul.mubr.f32.gmra.mrb[0].mxu0 %v4621
    %v4852 = vpop.f32.mrb[0].mxu0
    %v4853 = vadd.f32 %v4689, %v4852
    %v4854 = vpop.f32.mrb[0].mxu0
    %4855 = vmatprep.mubr.f32.mxu0 0.0
    %4856 = vmatmul.mubr.f32.gmra.mrb[0].mxu0 %v4622
    %v4857 = vpop.f32.mrb[0].mxu0
    %v4858 = vadd.f32 %v4689, %v4857
    %v4859 = vpop.f32.mrb[0].mxu0
    %4860 = vmatprep.mubr.f32.mxu0 0.0
    %4861 = vmatmul.mubr.f32.gmra.mrb[0].mxu0 %v4623
    %v4862 = vpop.f32.mrb[0].mxu0
    %v4863 = vadd.f32 %v4689, %v4862
    %v4864 = vpop.f32.mrb[0].mxu0
    %4865 = vmatprep.mubr.f32.mxu0 0.0
    %4866 = vmatmul.mubr.f32.gmra.mrb[0].mxu0 %v4624
    %v4867 = vpop.f32.mrb[0].mxu0
    %v4868 = vadd.f32 %v4689, %v4867
    %v4869 = vpop.f32.mrb[0].mxu0
    %4870 = vmatprep.mubr.f32.mxu0 0.0
    %4871 = vmatmul.mubr.f32.gmra.mrb[0].mxu0 %v4625
    %v4872 = vpop.f32.mrb[0].mxu0
    %v4873 = vadd.f32 %v4689, %v4872
    %v4874 = vpop.f32.mrb[0].mxu0
    %4875 = vmatprep.mubr.f32.mxu0 0.0
    %4876 = vmatmul.mubr.f32.gmra.mrb[0].mxu0 %v4626
    %v4877 = vpop.f32.mrb[0].mxu0
    %v4878 = vadd.f32 %v4689, %v4877
    %v4879 = vpop.f32.mrb[0].mxu0
    %4880 = vmatprep.mubr.f32.mxu0 0.0
    %4881 = vmatmul.mubr.f32.gmra.mrb[0].mxu0 %v4627
    %v4882 = vpop.f32.mrb[0].mxu0
    %v4883 = vadd.f32 %v4689, %v4882
    %v4884 = vpop.f32.mrb[0].mxu0
    %4885 = vmatprep.mubr.f32.mxu0 0.0
    %4886 = vmatmul.mubr.f32.gmra.mrb[0].mxu0 %v4628
    %v4887 = vpop.f32.mrb[0].mxu0
    %v4888 = vadd.f32 %v4689, %v4887
    %v4889 = vpop.f32.mrb[0].mxu0
    %4890 = vmatprep.mubr.f32.mxu0 0.0
    %4891 = vmatmul.mubr.f32.gmra.mrb[0].mxu0 %v4629
    %v4892 = vpop.f32.mrb[0].mxu0
    %v4893 = vadd.f32 %v4689, %v4892
    %v4894 = vpop.f32.mrb[0].mxu0
    %4895 = vmatprep.mubr.f32.mxu0 0.0
    %4896 = vmatmul.mubr.f32.gmra.mrb[0].mxu0 %v4630
    %v4897 = vpop.f32.mrb[0].mxu0
    %v4898 = vadd.f32 %v4689, %v4897
    %v4899 = vpop.f32.mrb[0].mxu0
    %4900 = vmatprep.mubr.f32.mxu0 0.0
    %4901 = vmatmul.mubr.f32.gmra.mrb[0].mxu0 %v4631
    %v4902 = vpop.f32.mrb[0].mxu0
    %v4903 = vadd.f32 %v4689, %v4902
    %v4904 = vpop.f32.mrb[0].mxu0
    %4905 = vmatprep.mubr.f32.mxu0 0.0
    %4906 = vmatmul.mubr.f32.gmra.mrb[0].mxu0 %v4632
    %v4907 = vpop.f32.mrb[0].mxu0
    %v4908 = vadd.f32 %v4689, %v4907
    %v4909 = vpop.f32.mrb[0].mxu0
    %4910 = vmatprep.mubr.f32.mxu0 0.0
    %4911 = vmatmul.mubr.f32.gmra.mrb[0].mxu0 %v4633
    %v4912 = vpop.f32.mrb[0].mxu0
    %v4913 = vadd.f32 %v4689, %v4912
    %v4914 = vpop.f32.mrb[0].mxu0
    %4915 = vmatprep.mubr.f32.mxu0 0.0
    %4916 = vmatmul.mubr.f32.gmra.mrb[0].mxu0 %v4634
    %v4917 = vpop.f32.mrb[0].mxu0
    %v4918 = vadd.f32 %v4689, %v4917
    %v4919 = vpop.f32.mrb[0].mxu0
    %4920 = vmatprep.mubr.f32.mxu0 0.0
    %4921 = vmatmul.mubr.f32.gmra.mrb[0].mxu0 %v4635
    %v4922 = vpop.f32.mrb[0].mxu0
    %v4923 = vadd.f32 %v4689, %v4922
    %v4924 = vpop.f32.mrb[0].mxu0
    %4925 = vmatprep.mubr.f32.mxu0 0.0
    %4926 = vmatmul.mubr.f32.gmra.mrb[0].mxu0 %v4636
    %v4927 = vpop.f32.mrb[0].mxu0
    %v4928 = vadd.f32 %v4689, %v4927
    %v4929 = vpop.f32.mrb[0].mxu0
    %4930 = vmatprep.mubr.f32.mxu0 0.0
    %4931 = vmatmul.mubr.f32.gmra.mrb[0].mxu0 %v4637
    %v4932 = vpop.f32.mrb[0].mxu0
    %v4933 = vadd.f32 %v4689, %v4932
    %v4934 = vpop.f32.mrb[0].mxu0
    %4935 = vmatprep.mubr.f32.mxu0 0.0
    %4936 = vmatmul.mubr.f32.gmra.mrb[0].mxu0 %v4638
    %v4937 = vpop.f32.mrb[0].mxu0
    %v4938 = vadd.f32 %v4689, %v4937
    %v4939 = vpop.f32.mrb[0].mxu0
    %4940 = vmatprep.mubr.f32.mxu0 0.0
    %4941 = vmatmul.mubr.f32.gmra.mrb[0].mxu0 %v4639
    %v4942 = vpop.f32.mrb[0].mxu0
    %v4943 = vadd.f32 %v4689, %v4942
    %v4944 = vpop.f32.mrb[0].mxu0
    %4945 = vmatprep.mubr.f32.mxu0 0.0
    %4946 = vmatmul.mubr.f32.gmra.mrb[0].mxu0 %v4640
    %v4947 = vpop.f32.mrb[0].mxu0
    %v4948 = vadd.f32 %v4689, %v4947
    %v4949 = vpop.f32.mrb[0].mxu0
    %4950 = vmatprep.mubr.f32.mxu0 0.0
    %4951 = vmatmul.mubr.f32.gmra.mrb[0].mxu0 %v4641
    %v4952 = vpop.f32.mrb[0].mxu0
    %v4953 = vadd.f32 %v4689, %v4952
    %v4954 = vpop.f32.mrb[0].mxu0
    %4955 = vmatprep.mubr.f32.mxu0 0.0
    %4956 = vmatmul.mubr.f32.gmra.mrb[0].mxu0 %v4642
    %v4957 = vpop.f32.mrb[0].mxu0
    %v4958 = vadd.f32 %v4689, %v4957
    %v4959 = vpop.f32.mrb[0].mxu0
    %4960 = vmatprep.mubr.f32.mxu0 0.0
    %4961 = vmatmul.mubr.f32.gmra.mrb[0].mxu0 %v4643
    %v4962 = vpop.f32.mrb[0].mxu0
    %v4963 = vadd.f32 %v4689, %v4962
    %v4964 = vpop.f32.mrb[0].mxu0
    %4965 = vmatprep.mubr.f32.mxu0 0.0
    %4966 = vmatmul.mubr.f32.gmra.mrb[0].mxu0 %v4644
    %v4967 = vpop.f32.mrb[0].mxu0
    %v4968 = vadd.f32 %v4689, %v4967
    %v4969 = vpop.f32.mrb[0].mxu0
    %4970 = vmatprep.mubr.f32.mxu0 0.0
    %4971 = vmatmul.mubr.f32.gmra.mrb[0].mxu0 %v4645
    %v4972 = vpop.f32.mrb[0].mxu0
    %v4973 = vadd.f32 %v4689, %v4972
    %v4974 = vpop.f32.mrb[0].mxu0
    %4975 = vmatprep.mubr.f32.mxu0 0.0
    %4976 = vmatmul.mubr.f32.gmra.mrb[0].mxu0 %v4646
    %v4977 = vpop.f32.mrb[0].mxu0
    %v4978 = vadd.f32 %v4689, %v4977
    %v4979 = vpop.f32.mrb[0].mxu0
    %4980 = vmatprep.mubr.f32.mxu0 0.0
    %4981 = vmatmul.mubr.f32.gmra.mrb[0].mxu0 %v4647
    %v4982 = vpop.f32.mrb[0].mxu0
    %v4983 = vadd.f32 %v4689, %v4982
    %v4984 = vpop.f32.mrb[0].mxu0
    %4985 = vmatprep.mubr.f32.mxu0 0.0
    %4986 = vmatmul.mubr.f32.gmra.mrb[0].mxu0 %v4648
    %v4987 = vpop.f32.mrb[0].mxu0
    %v4988 = vadd.f32 %v4689, %v4987
    %v4989 = vpop.f32.mrb[0].mxu0
    %4990 = vmatprep.mubr.f32.mxu0 0.0
    %4991 = vmatmul.mubr.f32.gmra.mrb[0].mxu0 %v4649
    %v4992 = vpop.f32.mrb[0].mxu0
    %v4993 = vadd.f32 %v4689, %v4992
    %v4994 = vpop.f32.mrb[0].mxu0
    %4995 = vmatprep.mubr.f32.mxu0 0.0
    %4996 = vmatmul.mubr.f32.gmra.mrb[0].mxu0 %v4650
    %v4997 = vpop.f32.mrb[0].mxu0
    %v4998 = vadd.f32 %v4689, %v4997
    %v4999 = vpop.f32.mrb[0].mxu0
    %5000 = vmatprep.mubr.f32.mxu0 0.0
    %5001 = vmatmul.mubr.f32.gmra.mrb[0].mxu0 %v4651
    %v5002 = vpop.f32.mrb[0].mxu0
    %v5003 = vadd.f32 %v4689, %v5002
    %v5004 = vpop.f32.mrb[0].mxu0
    %5005 = vmatprep.mubr.f32.mxu0 0.0
    %5006 = vmatmul.mubr.f32.gmra.mrb[0].mxu0 %v4652
    %v5007 = vpop.f32.mrb[0].mxu0
    %v5008 = vadd.f32 %v4689, %v5007
    %v5009 = vpop.f32.mrb[0].mxu0
    %5010 = vmatprep.mubr.f32.mxu0 0.0
    %5011 = vmatmul.mubr.f32.gmra.mrb[0].mxu0 %v4653
    %v5012 = vpop.f32.mrb[0].mxu0
    %v5013 = vadd.f32 %v4689, %v5012
    %v5014 = vpop.f32.mrb[0].mxu0
    %5015 = vmatprep.mubr.f32.mxu0 0.0
    %5016 = vmatmul.mubr.f32.gmra.mrb[0].mxu0 %v4654
    %v5017 = vpop.f32.mrb[0].mxu0
    %v5018 = vadd.f32 %v4689, %v5017
    %v5019 = vpop.f32.mrb[0].mxu0
    %5020 = vmatprep.mubr.f32.mxu0 0.0
    %5021 = vmatmul.mubr.f32.gmra.mrb[0].mxu0 %v4655
    %v5022 = vpop.f32.mrb[0].mxu0
    %v5023 = vadd.f32 %v4689, %v5022
    %v5024 = vpop.f32.mrb[0].mxu0
    %5025 = vmatprep.mubr.f32.mxu0 0.0
    %5026 = vmatmul.mubr.f32.gmra.mrb[0].mxu0 %v4656
    %v5027 = vpop.f32.mrb[0].mxu0
    %v5028 = vadd.f32 %v4689, %v5027
    %v5029 = vpop.f32.mrb[0].mxu0
    %5030 = vmatprep.mubr.f32.mxu0 0.0
    %5031 = vmatmul.mubr.f32.gmra.mrb[0].mxu0 %v4657
    %v5032 = vpop.f32.mrb[0].mxu0
    %v5033 = vadd.f32 %v4689, %v5032
    %v5034 = vpop.f32.mrb[0].mxu0
    %5035 = vmatprep.mubr.f32.mxu0 0.0
    %5036 = vmatmul.mubr.f32.gmra.mrb[0].mxu0 %v4658
    %v5037 = vpop.f32.mrb[0].mxu0
    %v5038 = vadd.f32 %v4689, %v5037
    %v5039 = vpop.f32.mrb[0].mxu0
    %5040 = vmatprep.mubr.f32.mxu0 0.0
    %5041 = vmatmul.mubr.f32.gmra.mrb[0].mxu0 %v4659
    %v5042 = vpop.f32.mrb[0].mxu0
    %v5043 = vadd.f32 %v4689, %v5042
    %v5044 = vpop.f32.mrb[0].mxu0
    %5045 = vmatprep.mubr.f32.mxu0 0.0
    %5046 = vmatmul.mubr.f32.gmra.mrb[0].mxu0 %v4660
    %v5047 = vpop.f32.mrb[0].mxu0
    %v5048 = vadd.f32 %v4689, %v5047
    %v5049 = vpop.f32.mrb[0].mxu0
    %5050 = vmatprep.mubr.f32.mxu0 0.0
    %5051 = vmatmul.mubr.f32.gmra.mrb[0].mxu0 %v4661
    %v5052 = vpop.f32.mrb[0].mxu0
    %v5053 = vadd.f32 %v4689, %v5052
    %v5054 = vpop.f32.mrb[0].mxu0
    %5055 = vmatprep.mubr.f32.mxu0 0.0
    %5056 = vmatmul.mubr.f32.gmra.mrb[0].mxu0 %v4662
    %v5057 = vpop.f32.mrb[0].mxu0
    %v5058 = vadd.f32 %v4689, %v5057
    %v5059 = vpop.f32.mrb[0].mxu0
    %5060 = vmatprep.mubr.f32.mxu0 0.0
    %5061 = vmatmul.mubr.f32.gmra.mrb[0].mxu0 %v4663
    %v5062 = vpop.f32.mrb[0].mxu0
    %v5063 = vadd.f32 %v4689, %v5062
    %v5064 = vpop.f32.mrb[0].mxu0
    %5065 = vmatprep.mubr.f32.mxu0 0.0
    %5066 = vmatmul.mubr.f32.gmra.mrb[0].mxu0 %v4664
    %v5067 = vpop.f32.mrb[0].mxu0
    %v5068 = vadd.f32 %v4689, %v5067
    %v5069 = vpop.f32.mrb[0].mxu0
    %5070 = vmatprep.mubr.f32.mxu0 0.0
    %5071 = vmatmul.mubr.f32.gmra.mrb[0].mxu0 %v4665
    %v5072 = vpop.f32.mrb[0].mxu0
    %v5073 = vadd.f32 %v4689, %v5072
    %v5074 = vpop.f32.mrb[0].mxu0
    %5075 = vdwg.mxu0
    %v5076 = vmul.f32 %v4758, 0.5
    %v5077 = vmul.f32 %v4763, 0.5
    %v5078 = vmul.f32 %v4768, 0.5
    %v5079 = vmul.f32 %v4773, 0.5
    %v5080 = vmul.f32 %v4778, 0.5
    %v5081 = vmul.f32 %v4783, 0.5
    %v5082 = vmul.f32 %v4788, 0.5
    %v5083 = vmul.f32 %v4793, 0.5
    %v5084 = vmul.f32 %v4798, 0.5
    %v5085 = vmul.f32 %v4803, 0.5
    %v5086 = vmul.f32 %v4808, 0.5
    %v5087 = vmul.f32 %v4813, 0.5
    %v5088 = vmul.f32 %v4818, 0.5
    %v5089 = vmul.f32 %v4823, 0.5
    %v5090 = vmul.f32 %v4828, 0.5
    %v5091 = vmul.f32 %v4833, 0.5
    %v5092 = vmul.f32 %v4838, 0.5
    %v5093 = vmul.f32 %v4843, 0.5
    %v5094 = vmul.f32 %v4848, 0.5
    %v5095 = vmul.f32 %v4853, 0.5
    %v5096 = vmul.f32 %v4858, 0.5
    %v5097 = vmul.f32 %v4863, 0.5
    %v5098 = vmul.f32 %v4868, 0.5
    %v5099 = vmul.f32 %v4873, 0.5
    %v5100 = vmul.f32 %v4878, 0.5
    %v5101 = vmul.f32 %v4883, 0.5
    %v5102 = vmul.f32 %v4888, 0.5
    %v5103 = vmul.f32 %v4893, 0.5
    %v5104 = vmul.f32 %v4898, 0.5
    %v5105 = vmul.f32 %v4903, 0.5
    %v5106 = vmul.f32 %v4908, 0.5
    %v5107 = vmul.f32 %v4913, 0.5
    %v5108 = vmul.f32 %v4918, 0.5
    %v5109 = vmul.f32 %v4923, 0.5
    %v5110 = vmul.f32 %v4928, 0.5
    %v5111 = vmul.f32 %v4933, 0.5
    %v5112 = vmul.f32 %v4938, 0.5
    %v5113 = vmul.f32 %v4943, 0.5
    %v5114 = vmul.f32 %v4948, 0.5
    %v5115 = vmul.f32 %v4953, 0.5
    %v5116 = vmul.f32 %v4958, 0.5
    %v5117 = vmul.f32 %v4963, 0.5
    %v5118 = vmul.f32 %v4968, 0.5
    %v5119 = vmul.f32 %v4973, 0.5
    %v5120 = vmul.f32 %v4978, 0.5
    %v5121 = vmul.f32 %v4983, 0.5
    %v5122 = vmul.f32 %v4988, 0.5
    %v5123 = vmul.f32 %v4993, 0.5
    %v5124 = vmul.f32 %v4998, 0.5
    %v5125 = vmul.f32 %v5003, 0.5
    %v5126 = vmul.f32 %v5008, 0.5
    %v5127 = vmul.f32 %v5013, 0.5
    %v5128 = vmul.f32 %v5018, 0.5
    %v5129 = vmul.f32 %v5023, 0.5
    %v5130 = vmul.f32 %v5028, 0.5
    %v5131 = vmul.f32 %v5033, 0.5
    %v5132 = vmul.f32 %v5038, 0.5
    %v5133 = vmul.f32 %v5043, 0.5
    %v5134 = vmul.f32 %v5048, 0.5
    %v5135 = vmul.f32 %v5053, 0.5
    %v5136 = vmul.f32 %v5058, 0.5
    %v5137 = vmul.f32 %v5063, 0.5
    %v5138 = vmul.f32 %v5068, 0.5
    %v5139 = vmul.f32 %v5073, 0.5
    %v5140 = vtanh.pop %v5076
    %v5141 = vtanh.pop %v5077
    %v5142 = vtanh.pop %v5078
    %v5143 = vtanh.pop %v5079
    %v5144 = vtanh.pop %v5080
    %v5145 = vtanh.pop %v5081
    %v5146 = vtanh.pop %v5082
    %v5147 = vtanh.pop %v5083
    %v5148 = vtanh.pop %v5084
    %v5149 = vtanh.pop %v5085
    %v5150 = vtanh.pop %v5086
    %v5151 = vtanh.pop %v5087
    %v5152 = vtanh.pop %v5088
    %v5153 = vtanh.pop %v5089
    %v5154 = vtanh.pop %v5090
    %v5155 = vtanh.pop %v5091
    %v5156 = vtanh.pop %v5092
    %v5157 = vtanh.pop %v5093
    %v5158 = vtanh.pop %v5094
    %v5159 = vtanh.pop %v5095
    %v5160 = vtanh.pop %v5096
    %v5161 = vtanh.pop %v5097
    %v5162 = vtanh.pop %v5098
    %v5163 = vtanh.pop %v5099
    %v5164 = vtanh.pop %v5100
    %v5165 = vtanh.pop %v5101
    %v5166 = vtanh.pop %v5102
    %v5167 = vtanh.pop %v5103
    %v5168 = vtanh.pop %v5104
    %v5169 = vtanh.pop %v5105
    %v5170 = vtanh.pop %v5106
    %v5171 = vtanh.pop %v5107
    %v5172 = vtanh.pop %v5108
    %v5173 = vtanh.pop %v5109
    %v5174 = vtanh.pop %v5110
    %v5175 = vtanh.pop %v5111
    %v5176 = vtanh.pop %v5112
    %v5177 = vtanh.pop %v5113
    %v5178 = vtanh.pop %v5114
    %v5179 = vtanh.pop %v5115
    %v5180 = vtanh.pop %v5116
    %v5181 = vtanh.pop %v5117
    %v5182 = vtanh.pop %v5118
    %v5183 = vtanh.pop %v5119
    %v5184 = vtanh.pop %v5120
    %v5185 = vtanh.pop %v5121
    %v5186 = vtanh.pop %v5122
    %v5187 = vtanh.pop %v5123
    %v5188 = vtanh.pop %v5124
    %v5189 = vtanh.pop %v5125
    %v5190 = vtanh.pop %v5126
    %v5191 = vtanh.pop %v5127
    %v5192 = vtanh.pop %v5128
    %v5193 = vtanh.pop %v5129
    %v5194 = vtanh.pop %v5130
    %v5195 = vtanh.pop %v5131
    %v5196 = vtanh.pop %v5132
    %v5197 = vtanh.pop %v5133
    %v5198 = vtanh.pop %v5134
    %v5199 = vtanh.pop %v5135
    %v5200 = vtanh.pop %v5136
    %v5201 = vtanh.pop %v5137
    %v5202 = vtanh.pop %v5138
    %v5203 = vtanh.pop %v5139
    %v5204 = vadd.f32 %v5140, 1.0
    %v5205 = vadd.f32 %v5141, 1.0
    %v5206 = vadd.f32 %v5142, 1.0
    %v5207 = vadd.f32 %v5143, 1.0
    %v5208 = vadd.f32 %v5144, 1.0
    %v5209 = vadd.f32 %v5145, 1.0
    %v5210 = vadd.f32 %v5146, 1.0
    %v5211 = vadd.f32 %v5147, 1.0
    %v5212 = vadd.f32 %v5148, 1.0
    %v5213 = vadd.f32 %v5149, 1.0
    %v5214 = vadd.f32 %v5150, 1.0
    %v5215 = vadd.f32 %v5151, 1.0
    %v5216 = vadd.f32 %v5152, 1.0
    %v5217 = vadd.f32 %v5153, 1.0
    %v5218 = vadd.f32 %v5154, 1.0
    %v5219 = vadd.f32 %v5155, 1.0
    %v5220 = vadd.f32 %v5156, 1.0
    %v5221 = vadd.f32 %v5157, 1.0
    %v5222 = vadd.f32 %v5158, 1.0
    %v5223 = vadd.f32 %v5159, 1.0
    %v5224 = vadd.f32 %v5160, 1.0
    %v5225 = vadd.f32 %v5161, 1.0
    %v5226 = vadd.f32 %v5162, 1.0
    %v5227 = vadd.f32 %v5163, 1.0
    %v5228 = vadd.f32 %v5164, 1.0
    %v5229 = vadd.f32 %v5165, 1.0
    %v5230 = vadd.f32 %v5166, 1.0
    %v5231 = vadd.f32 %v5167, 1.0
    %v5232 = vadd.f32 %v5168, 1.0
    %v5233 = vadd.f32 %v5169, 1.0
    %v5234 = vadd.f32 %v5170, 1.0
    %v5235 = vadd.f32 %v5171, 1.0
    %v5236 = vadd.f32 %v5172, 1.0
    %v5237 = vadd.f32 %v5173, 1.0
    %v5238 = vadd.f32 %v5174, 1.0
    %v5239 = vadd.f32 %v5175, 1.0
    %v5240 = vadd.f32 %v5176, 1.0
    %v5241 = vadd.f32 %v5177, 1.0
    %v5242 = vadd.f32 %v5178, 1.0
    %v5243 = vadd.f32 %v5179, 1.0
    %v5244 = vadd.f32 %v5180, 1.0
    %v5245 = vadd.f32 %v5181, 1.0
    %v5246 = vadd.f32 %v5182, 1.0
    %v5247 = vadd.f32 %v5183, 1.0
    %v5248 = vadd.f32 %v5184, 1.0
    %v5249 = vadd.f32 %v5185, 1.0
    %v5250 = vadd.f32 %v5186, 1.0
    %v5251 = vadd.f32 %v5187, 1.0
    %v5252 = vadd.f32 %v5188, 1.0
    %v5253 = vadd.f32 %v5189, 1.0
    %v5254 = vadd.f32 %v5190, 1.0
    %v5255 = vadd.f32 %v5191, 1.0
    %v5256 = vadd.f32 %v5192, 1.0
    %v5257 = vadd.f32 %v5193, 1.0
    %v5258 = vadd.f32 %v5194, 1.0
    %v5259 = vadd.f32 %v5195, 1.0
    %v5260 = vadd.f32 %v5196, 1.0
    %v5261 = vadd.f32 %v5197, 1.0
    %v5262 = vadd.f32 %v5198, 1.0
    %v5263 = vadd.f32 %v5199, 1.0
    %v5264 = vadd.f32 %v5200, 1.0
    %v5265 = vadd.f32 %v5201, 1.0
    %v5266 = vadd.f32 %v5202, 1.0
    %v5267 = vadd.f32 %v5203, 1.0
    %v5268 = vmul.f32 %v5204, 0.5
    %v5269 = vmul.f32 %v5205, 0.5
    %v5270 = vmul.f32 %v5206, 0.5
    %v5271 = vmul.f32 %v5207, 0.5
    %v5272 = vmul.f32 %v5208, 0.5
    %v5273 = vmul.f32 %v5209, 0.5
    %v5274 = vmul.f32 %v5210, 0.5
    %v5275 = vmul.f32 %v5211, 0.5
    %v5276 = vmul.f32 %v5212, 0.5
    %v5277 = vmul.f32 %v5213, 0.5
    %v5278 = vmul.f32 %v5214, 0.5
    %v5279 = vmul.f32 %v5215, 0.5
    %v5280 = vmul.f32 %v5216, 0.5
    %v5281 = vmul.f32 %v5217, 0.5
    %v5282 = vmul.f32 %v5218, 0.5
    %v5283 = vmul.f32 %v5219, 0.5
    %v5284 = vmul.f32 %v5220, 0.5
    %v5285 = vmul.f32 %v5221, 0.5
    %v5286 = vmul.f32 %v5222, 0.5
    %v5287 = vmul.f32 %v5223, 0.5
    %v5288 = vmul.f32 %v5224, 0.5
    %v5289 = vmul.f32 %v5225, 0.5
    %v5290 = vmul.f32 %v5226, 0.5
    %v5291 = vmul.f32 %v5227, 0.5
    %v5292 = vmul.f32 %v5228, 0.5
    %v5293 = vmul.f32 %v5229, 0.5
    %v5294 = vmul.f32 %v5230, 0.5
    %v5295 = vmul.f32 %v5231, 0.5
    %v5296 = vmul.f32 %v5232, 0.5
    %v5297 = vmul.f32 %v5233, 0.5
    %v5298 = vmul.f32 %v5234, 0.5
    %v5299 = vmul.f32 %v5235, 0.5
    %v5300 = vmul.f32 %v5236, 0.5
    %v5301 = vmul.f32 %v5237, 0.5
    %v5302 = vmul.f32 %v5238, 0.5
    %v5303 = vmul.f32 %v5239, 0.5
    %v5304 = vmul.f32 %v5240, 0.5
    %v5305 = vmul.f32 %v5241, 0.5
    %v5306 = vmul.f32 %v5242, 0.5
    %v5307 = vmul.f32 %v5243, 0.5
    %v5308 = vmul.f32 %v5244, 0.5
    %v5309 = vmul.f32 %v5245, 0.5
    %v5310 = vmul.f32 %v5246, 0.5
    %v5311 = vmul.f32 %v5247, 0.5
    %v5312 = vmul.f32 %v5248, 0.5
    %v5313 = vmul.f32 %v5249, 0.5
    %v5314 = vmul.f32 %v5250, 0.5
    %v5315 = vmul.f32 %v5251, 0.5
    %v5316 = vmul.f32 %v5252, 0.5
    %v5317 = vmul.f32 %v5253, 0.5
    %v5318 = vmul.f32 %v5254, 0.5
    %v5319 = vmul.f32 %v5255, 0.5
    %v5320 = vmul.f32 %v5256, 0.5
    %v5321 = vmul.f32 %v5257, 0.5
    %v5322 = vmul.f32 %v5258, 0.5
    %v5323 = vmul.f32 %v5259, 0.5
    %v5324 = vmul.f32 %v5260, 0.5
    %v5325 = vmul.f32 %v5261, 0.5
    %v5326 = vmul.f32 %v5262, 0.5
    %v5327 = vmul.f32 %v5263, 0.5
    %v5328 = vmul.f32 %v5264, 0.5
    %v5329 = vmul.f32 %v5265, 0.5
    %v5330 = vmul.f32 %v5266, 0.5
    %v5331 = vmul.f32 %v5267, 0.5
    %v5332 = vmul.f32 %v4758, %v5268
    %v5333 = vmul.f32 %v4763, %v5269
    %v5334 = vmul.f32 %v4768, %v5270
    %v5335 = vmul.f32 %v4773, %v5271
    %v5336 = vmul.f32 %v4778, %v5272
    %v5337 = vmul.f32 %v4783, %v5273
    %v5338 = vmul.f32 %v4788, %v5274
    %v5339 = vmul.f32 %v4793, %v5275
    %v5340 = vmul.f32 %v4798, %v5276
    %v5341 = vmul.f32 %v4803, %v5277
    %v5342 = vmul.f32 %v4808, %v5278
    %v5343 = vmul.f32 %v4813, %v5279
    %v5344 = vmul.f32 %v4818, %v5280
    %v5345 = vmul.f32 %v4823, %v5281
    %v5346 = vmul.f32 %v4828, %v5282
    %v5347 = vmul.f32 %v4833, %v5283
    %v5348 = vmul.f32 %v4838, %v5284
    %v5349 = vmul.f32 %v4843, %v5285
    %v5350 = vmul.f32 %v4848, %v5286
    %v5351 = vmul.f32 %v4853, %v5287
    %v5352 = vmul.f32 %v4858, %v5288
    %v5353 = vmul.f32 %v4863, %v5289
    %v5354 = vmul.f32 %v4868, %v5290
    %v5355 = vmul.f32 %v4873, %v5291
    %v5356 = vmul.f32 %v4878, %v5292
    %v5357 = vmul.f32 %v4883, %v5293
    %v5358 = vmul.f32 %v4888, %v5294
    %v5359 = vmul.f32 %v4893, %v5295
    %v5360 = vmul.f32 %v4898, %v5296
    %v5361 = vmul.f32 %v4903, %v5297
    %v5362 = vmul.f32 %v4908, %v5298
    %v5363 = vmul.f32 %v4913, %v5299
    %v5364 = vmul.f32 %v4918, %v5300
    %v5365 = vmul.f32 %v4923, %v5301
    %v5366 = vmul.f32 %v4928, %v5302
    %v5367 = vmul.f32 %v4933, %v5303
    %v5368 = vmul.f32 %v4938, %v5304
    %v5369 = vmul.f32 %v4943, %v5305
    %v5370 = vmul.f32 %v4948, %v5306
    %v5371 = vmul.f32 %v4953, %v5307
    %v5372 = vmul.f32 %v4958, %v5308
    %v5373 = vmul.f32 %v4963, %v5309
    %v5374 = vmul.f32 %v4968, %v5310
    %v5375 = vmul.f32 %v4973, %v5311
    %v5376 = vmul.f32 %v4978, %v5312
    %v5377 = vmul.f32 %v4983, %v5313
    %v5378 = vmul.f32 %v4988, %v5314
    %v5379 = vmul.f32 %v4993, %v5315
    %v5380 = vmul.f32 %v4998, %v5316
    %v5381 = vmul.f32 %v5003, %v5317
    %v5382 = vmul.f32 %v5008, %v5318
    %v5383 = vmul.f32 %v5013, %v5319
    %v5384 = vmul.f32 %v5018, %v5320
    %v5385 = vmul.f32 %v5023, %v5321
    %v5386 = vmul.f32 %v5028, %v5322
    %v5387 = vmul.f32 %v5033, %v5323
    %v5388 = vmul.f32 %v5038, %v5324
    %v5389 = vmul.f32 %v5043, %v5325
    %v5390 = vmul.f32 %v5048, %v5326
    %v5391 = vmul.f32 %v5053, %v5327
    %v5392 = vmul.f32 %v5058, %v5328
    %v5393 = vmul.f32 %v5063, %v5329
    %v5394 = vmul.f32 %v5068, %v5330
    %v5395 = vmul.f32 %v5073, %v5331
    %v5396 = vld [vmem:[%s6] sm:$0x1]
    %v5397 = vld [vmem:[#allocation2] sm:$0x1]
    %5399 = vset.pattern.permute.xlu0 0
    %5400 = vperm.xlu0 %5399, %v5397
    %v5401 = vpop.permute.xlu0 %5400
    %v5403 = vlaneseq
    %v5404 = vshrl.u32 %v5403, 7
    %v5405 = vsub.s32 0, %v5404
    %v5406 = vrot.slane %v5401, %v5405
    %5407 = vmatprep.subr.mxu0 0.0
    %5408 = vmatpush1.xpose.msra.mxu0 %v5332
    %5409 = vmatprep.subr.mxu0 0.0
    %5410 = vmatpush1.xpose.msra.mxu0 %v5333
    %5411 = vmatprep.subr.mxu0 0.0
    %5412 = vmatpush1.xpose.msra.mxu0 %v5334
    %5413 = vmatprep.subr.mxu0 0.0
    %5414 = vmatpush1.xpose.msra.mxu0 %v5335
    %5415 = vmatprep.subr.mxu0 0.0
    %5416 = vmatpush1.xpose.msra.mxu0 %v5336
    %5417 = vmatprep.subr.mxu0 0.0
    %5418 = vmatpush1.xpose.msra.mxu0 %v5337
    %5419 = vmatprep.subr.mxu0 0.0
    %5420 = vmatpush1.xpose.msra.mxu0 %v5338
    %5421 = vmatprep.subr.mxu0 0.0
    %5422 = vmatpush1.xpose.msra.mxu0 %v5339
    %5423 = vmatprep.subr.mxu0 0.0
    %5424 = vmatpush1.xpose.msra.mxu0 %v5340
    %5425 = vmatprep.subr.mxu0 0.0
    %5426 = vmatpush1.xpose.msra.mxu0 %v5341
    %5427 = vmatprep.subr.mxu0 0.0
    %5428 = vmatpush1.xpose.msra.mxu0 %v5342
    %5429 = vmatprep.subr.mxu0 0.0
    %5430 = vmatpush1.xpose.msra.mxu0 %v5343
    %5431 = vmatprep.subr.mxu0 0.0
    %5432 = vmatpush1.xpose.msra.mxu0 %v5344
    %5433 = vmatprep.subr.mxu0 0.0
    %5434 = vmatpush1.xpose.msra.mxu0 %v5345
    %5435 = vmatprep.subr.mxu0 0.0
    %5436 = vmatpush1.xpose.msra.mxu0 %v5346
    %5437 = vmatprep.subr.mxu0 0.0
    %5438 = vmatpush1.xpose.msra.mxu0 %v5347
    %5439 = vmatprep.subr.mxu0 0.0
    %5440 = vmatpush1.xpose.msra.mxu0 %v5348
    %5441 = vmatprep.subr.mxu0 0.0
    %5442 = vmatpush1.xpose.msra.mxu0 %v5349
    %5443 = vmatprep.subr.mxu0 0.0
    %5444 = vmatpush1.xpose.msra.mxu0 %v5350
    %5445 = vmatprep.subr.mxu0 0.0
    %5446 = vmatpush1.xpose.msra.mxu0 %v5351
    %5447 = vmatprep.subr.mxu0 0.0
    %5448 = vmatpush1.xpose.msra.mxu0 %v5352
    %5449 = vmatprep.subr.mxu0 0.0
    %5450 = vmatpush1.xpose.msra.mxu0 %v5353
    %5451 = vmatprep.subr.mxu0 0.0
    %5452 = vmatpush1.xpose.msra.mxu0 %v5354
    %5453 = vmatprep.subr.mxu0 0.0
    %5454 = vmatpush1.xpose.msra.mxu0 %v5355
    %5455 = vmatprep.subr.mxu0 0.0
    %5456 = vmatpush1.xpose.msra.mxu0 %v5356
    %5457 = vmatprep.subr.mxu0 0.0
    %5458 = vmatpush1.xpose.msra.mxu0 %v5357
    %5459 = vmatprep.subr.mxu0 0.0
    %5460 = vmatpush1.xpose.msra.mxu0 %v5358
    %5461 = vmatprep.subr.mxu0 0.0
    %5462 = vmatpush1.xpose.msra.mxu0 %v5359
    %5463 = vmatprep.subr.mxu0 0.0
    %5464 = vmatpush1.xpose.msra.mxu0 %v5360
    %5465 = vmatprep.subr.mxu0 0.0
    %5466 = vmatpush1.xpose.msra.mxu0 %v5361
    %5467 = vmatprep.subr.mxu0 0.0
    %5468 = vmatpush1.xpose.msra.mxu0 %v5362
    %5469 = vmatprep.subr.mxu0 0.0
    %5470 = vmatpush1.xpose.msra.mxu0 %v5363
    %5471 = vmatprep.mubr.f32.mxu0 0.0
    %5472 = vmatmul.mubr.f32.gmra.mrb[0].mxu0 %v5396
    %v5473 = vpop.f32.mrb[0].mxu0
    %v5474 = vadd.f32 %v5406, %v5473
    %v5475 = vpop.f32.mrb[0].mxu0
    %v5476 = vadd.f32 %v5406, %v5475
    %5477 = vdwg.mxu0
    %5478 = vmatprep.subr.mxu0 0.0
    %5479 = vmatpush1.xpose.msra.mxu0 %v5364
    %5480 = vmatprep.subr.mxu0 0.0
    %5481 = vmatpush1.xpose.msra.mxu0 %v5365
    %5482 = vmatprep.subr.mxu0 0.0
    %5483 = vmatpush1.xpose.msra.mxu0 %v5366
    %5484 = vmatprep.subr.mxu0 0.0
    %5485 = vmatpush1.xpose.msra.mxu0 %v5367
    %5486 = vmatprep.subr.mxu0 0.0
    %5487 = vmatpush1.xpose.msra.mxu0 %v5368
    %5488 = vmatprep.subr.mxu0 0.0
    %5489 = vmatpush1.xpose.msra.mxu0 %v5369
    %5490 = vmatprep.subr.mxu0 0.0
    %5491 = vmatpush1.xpose.msra.mxu0 %v5370
    %5492 = vmatprep.subr.mxu0 0.0
    %5493 = vmatpush1.xpose.msra.mxu0 %v5371
    %5494 = vmatprep.subr.mxu0 0.0
    %5495 = vmatpush1.xpose.msra.mxu0 %v5372
    %5496 = vmatprep.subr.mxu0 0.0
    %5497 = vmatpush1.xpose.msra.mxu0 %v5373
    %5498 = vmatprep.subr.mxu0 0.0
    %5499 = vmatpush1.xpose.msra.mxu0 %v5374
    %5500 = vmatprep.subr.mxu0 0.0
    %5501 = vmatpush1.xpose.msra.mxu0 %v5375
    %5502 = vmatprep.subr.mxu0 0.0
    %5503 = vmatpush1.xpose.msra.mxu0 %v5376
    %5504 = vmatprep.subr.mxu0 0.0
    %5505 = vmatpush1.xpose.msra.mxu0 %v5377
    %5506 = vmatprep.subr.mxu0 0.0
    %5507 = vmatpush1.xpose.msra.mxu0 %v5378
    %5508 = vmatprep.subr.mxu0 0.0
    %5509 = vmatpush1.xpose.msra.mxu0 %v5379
    %5510 = vmatprep.subr.mxu0 0.0
    %5511 = vmatpush1.xpose.msra.mxu0 %v5380
    %5512 = vmatprep.subr.mxu0 0.0
    %5513 = vmatpush1.xpose.msra.mxu0 %v5381
    %5514 = vmatprep.subr.mxu0 0.0
    %5515 = vmatpush1.xpose.msra.mxu0 %v5382
    %5516 = vmatprep.subr.mxu0 0.0
    %5517 = vmatpush1.xpose.msra.mxu0 %v5383
    %5518 = vmatprep.subr.mxu0 0.0
    %5519 = vmatpush1.xpose.msra.mxu0 %v5384
    %5520 = vmatprep.subr.mxu0 0.0
    %5521 = vmatpush1.xpose.msra.mxu0 %v5385
    %5522 = vmatprep.subr.mxu0 0.0
    %5523 = vmatpush1.xpose.msra.mxu0 %v5386
    %5524 = vmatprep.subr.mxu0 0.0
    %5525 = vmatpush1.xpose.msra.mxu0 %v5387
    %5526 = vmatprep.subr.mxu0 0.0
    %5527 = vmatpush1.xpose.msra.mxu0 %v5388
    %5528 = vmatprep.subr.mxu0 0.0
    %5529 = vmatpush1.xpose.msra.mxu0 %v5389
    %5530 = vmatprep.subr.mxu0 0.0
    %5531 = vmatpush1.xpose.msra.mxu0 %v5390
    %5532 = vmatprep.subr.mxu0 0.0
    %5533 = vmatpush1.xpose.msra.mxu0 %v5391
    %5534 = vmatprep.subr.mxu0 0.0
    %5535 = vmatpush1.xpose.msra.mxu0 %v5392
    %5536 = vmatprep.subr.mxu0 0.0
    %5537 = vmatpush1.xpose.msra.mxu0 %v5393
    %5538 = vmatprep.subr.mxu0 0.0
    %5539 = vmatpush1.xpose.msra.mxu0 %v5394
    %5540 = vmatprep.subr.mxu0 0.0
    %5541 = vmatpush1.xpose.msra.mxu0 %v5395
    %5542 = vmatprep.mubr.f32.mxu0 0.0
    %5543 = vmatmul.mubr.f32.gmra.mrb[0].mxu0 %v5396
    %v5544 = vpop.f32.mrb[0].mxu0
    %v5545 = vadd.f32 %v5406, %v5544
    %v5546 = vpop.f32.mrb[0].mxu0
    %v5547 = vadd.f32 %v5406, %v5546
    %5548 = vdwg.mxu0
    %v5549 = vld [vmem:[%s1] sm:$0xf]
    %v5550 = vsub.f32 10.2, %v5549
    %v5551 = vmul.f32 %v5550, 0.1
    %v5552 = vsub.f32 %v5549, 0.2
    %v5553 = vsub.f32 %v5549, 10.2
    %v5554 = vmul.f32 %v5552, %v5553
    %v5559 = vcombine.low %v5474, %v5476
    %v5560 = vcombine.low %v5545, %v5547
    %v5562 = vunpack.c.l.s4 1966171168
    %v5563 = vunpack.c.0.s8 %v5562
    %v5564 = vlaneseq
    %v5565 = vshrl.u32 %v5564, 7
    %v5566 = vsub.s32 %v5563, %v5565
    %v5567 = vrot.slane %v5559, %v5566
    %v5569 = vunpack.c.l.s4 1966171168
    %v5570 = vunpack.c.0.s8 %v5569
    %v5571 = vlaneseq
    %v5572 = vshrl.u32 %v5571, 7
    %v5573 = vsub.s32 %v5570, %v5572
    %v5574 = vrot.slane %v5560, %v5573
    %v5575 = vcombine.low %v5567, %v5574
    %v5577 = vunpack.c.l.s4 1966171168
    %v5578 = vunpack.c.0.s8 %v5577
    %v5579 = vlaneseq
    %v5580 = vshrl.u32 %v5579, 7
    %v5581 = vsub.s32 %v5578, %v5580
    %v5582 = vrot.slane %v5575, %v5581
    %v5584 = vmul.f32 %v5554, %v5582
    %v5585 = vadd.f32 %v5551, %v5584
    %v5586 = vlaneseq
    %vm5587 = vcmp.ge.s32.totalorder %v5586, 0
    %vm5588 = vcmp.lt.s32.totalorder %v5586, 512
    %vm5589 = vmand %vm5587, %vm5588
    %5590 = vst.msk [vmem:[#allocation6] sm:$0xf] %vm5589, %v5585
    // Predicated region
    $region38: #{_lambda_.1} parent=1 // pred_check
      _
    $region39: #{_lambda_.1} parent=1 // pred_check_branch
      %5592 = sbr.rel (0) target = $region41
    $region40: #{_lambda_.1} parent=1 // pred_region
      %s5594 = ssub.s32 64, 64
      %5595 = vsyncadd [#allocation5], %s5594
      %s5597 = sshll.u32 [#allocation6], 4
      %s5598 = int_to_ptr.vmem [resolvable:$true] %s5597
      %5600 = dma.vmem_to_hbm [thread:$0]  %s5598, 64, %s8, [#allocation5]
    $region41: #{_lambda_.1} parent=1 // pred_fallthru
      _
    // Predicated region
    $region42: #{_lambda_.1} parent=1 // pred_check
      _
    $region43: #{_lambda_.1} parent=1 // pred_check_branch
      %5602 = sbr.rel (0) target = $region45
    $region44: #{_lambda_.1} parent=1 // pred_region
      %5603 = dma.done [#allocation5], 64
    $region45: #{_lambda_.1} parent=1 // pred_fallthru
      _
    %5604 = vsyncpa [#allocation4], 1
    %5605 = vsyncpa [#allocation5], 1

</llo_original>
